<compile_context>
chip_gen: v6e
topology: v6e:2x2x1
jax: 0.10.0
libtpu: 0.0.40
codegen_flags: <defaults>
</compile_context>

<pallas_src>
import math
import jax
import jax.numpy as jnp
from jax import lax
from jax.experimental import pallas as pl
from jax.experimental.pallas import tpu as pltpu

NUM_HEADS = 4
LN_EPS = 1e-5


def _attention_kernel(k_ref, v_ref, q_ref, wqkv_ref, wf1_ref, wf2_ref, vec_ref,
                      out_ref, attn_ref):
    B, Sk, H = k_ref.shape
    Sq = q_ref.shape[1]
    _, h, _, d = wqkv_ref.shape
    scale = 1.0 / math.sqrt(d)

    # Leading-dim flattens only (sublane/lane dims untouched) -> layout-free.
    kflat = k_ref[...].reshape(B * Sk, H).astype(jnp.float32)
    vflat = v_ref[...].reshape(B * Sk, H).astype(jnp.float32)
    qflat = q_ref[...].reshape(B * Sq, H).astype(jnp.float32)
    residual = qflat

    # Per-head projections: the head split is baked into the weight layout
    # (wqkv_ref[w_idx, hd] is a [H, d] slab).  No activation lane slices; the
    # leading-axis concatenate builds head-major [h*B, S, d] batches
    # (batch index g = head * B + b, matching the PyTorch permute/view).
    def project(x, w_idx, S):
        heads = [
            jnp.dot(x, wqkv_ref[w_idx, hd],
                    preferred_element_type=jnp.float32).reshape(B, S, d)
            for hd in range(h)
        ]
        return jnp.concatenate(heads, axis=0)            # [h*B, S, d]

    Kh = project(kflat, 0, Sk)
    Vh = project(vflat, 1, Sk)
    Qh = project(qflat, 2, Sq)

    # Batched attention over g = head*B + batch (single leading batch dim).
    scores = jnp.einsum('gqd,gkd->gqk', Qh, Kh,
                        preferred_element_type=jnp.float32) * scale
    scores = scores - jnp.max(scores, axis=-1, keepdims=True)
    e = jnp.exp(scores)
    attn = e * pl.reciprocal(jnp.sum(e, axis=-1, keepdims=True))
    # TODO(synk): attn_dropout(p=0.1) is treated as eval-mode identity.
    attn_ref[...] = attn.astype(attn_ref.dtype)          # [h*B, Sq, Sk]

    ctx = jnp.einsum('gqk,gkd->gqd', attn, Vh,
                     preferred_element_type=jnp.float32)  # [h*B, Sq, d]

    # final_linear without any activation concatenate:
    #   cat([residual, multihead]) @ wf.T == residual @ wf1 + sum_h ctx_h @ wf2_h
    # wf2_ref is pre-repeated per batch on the host, so this is one batched
    # matmul over g followed by a free leading-dim head reduction.
    mh = jnp.einsum('gqd,gdo->gqo', ctx, wf2_ref[...],
                    preferred_element_type=jnp.float32)   # [h*B, Sq, H]
    mh = mh.reshape(h, B, Sq, H).sum(axis=0)              # [B, Sq, H]

    final = jnp.dot(residual, wf1_ref[...],
                    preferred_element_type=jnp.float32).reshape(B, Sq, H)
    final = final + mh + vec_ref[0:1, :]                  # + final_linear bias
    # TODO(synk): residual_dropout(p=0.1) is treated as eval-mode identity.
    final = final + residual.reshape(B, Sq, H)

    # LayerNorm over the hidden dim (rsqrt goes to the EUP slot).
    mean = jnp.mean(final, axis=-1, keepdims=True)
    var = jnp.mean(jnp.square(final - mean), axis=-1, keepdims=True)
    norm = (final - mean) * lax.rsqrt(var + LN_EPS)
    out = norm * vec_ref[1:2, :] + vec_ref[2:3, :]
    out_ref[...] = out.astype(out_ref.dtype)


def attention_forward(key, value, query, params):
    B, Sk, H = key.shape
    Sq = query.shape[1]
    h = NUM_HEADS
    d = H // h

    # ---- host-side layout plumbing (free): transpose / split / pack weights.
    def head_split(w):                       # torch Linear weight [out, in]
        # -> [h, in, d] so that x @ head_split(w)[hd] == (x @ w.T)[:, hd*d:(hd+1)*d]
        return jnp.transpose(w.T.reshape(H, h, d), (1, 0, 2))

    w_qkv = jnp.stack([head_split(params["wk"]),
                       head_split(params["wv"]),
                       head_split(params["wq"])], axis=0)          # [3, h, H, d]
    wf1_t = params["wf"][:, :H].T                                   # [H, H]
    wf2_h = params["wf"][:, H:].T.reshape(h, d, H)                  # [h, d, H]
    wf2_g = jnp.repeat(wf2_h, B, axis=0)                            # [h*B, d, H]
    vec = jnp.stack([params["bf"], params["gamma"], params["beta"]], axis=0)

    out, attns = pl.pallas_call(
        _attention_kernel,
        out_shape=[
            jax.ShapeDtypeStruct((B, Sq, H), query.dtype),
            jax.ShapeDtypeStruct((h * B, Sq, Sk), jnp.float32),
        ],
        in_specs=[pl.BlockSpec(memory_space=pltpu.MemorySpace.VMEM)] * 7,
        out_specs=[pl.BlockSpec(memory_space=pltpu.MemorySpace.VMEM)] * 2,
    )(key, value, query, w_qkv, wf1_t, wf2_g, vec)

    # attns already has the PyTorch layout [h*B, Sq, Sk] (index = head*B + b).
    return out, attns


def init_params(rng, H):
    k1, k2, k3, k4, k5 = jax.random.split(rng, 5)

    def xavier(key_, out_dim, in_dim):
        bound = math.sqrt(6.0 / (in_dim + out_dim))   # gain('linear') = 1
        return jax.random.uniform(key_, (out_dim, in_dim), jnp.float32, -bound, bound)

    wk = xavier(k1, H, H)
    wv = xavier(k2, H, H)
    wq = xavier(k3, H, H)
    wf = xavier(k4, H, 2 * H)
    bb = 1.0 / math.sqrt(2 * H)                       # default nn.Linear bias init
    bf = jax.random.uniform(k5, (H,), jnp.float32, -bb, bb)
    gamma = jnp.ones((H,), jnp.float32)               # LayerNorm default weight
    beta = jnp.zeros((H,), jnp.float32)               # LayerNorm default bias
    return dict(wk=wk, wv=wv, wq=wq, wf=wf, bf=bf, gamma=gamma, beta=beta)


def _reference(key, value, query, params):
    """Pure-JAX reference (dropout as identity) for correctness check."""
    B, Sk, H = key.shape
    Sq = query.shape[1]
    h = NUM_HEADS
    d = H // h
    K = key @ params["wk"].T
    V = value @ params["wv"].T
    Q = query @ params["wq"].T
    K = K.reshape(B, Sk, h, d).transpose(2, 0, 1, 3).reshape(h * B, Sk, d)
    V = V.reshape(B, Sk, h, d).transpose(2, 0, 1, 3).reshape(h * B, Sk, d)
    Q = Q.reshape(B, Sq, h, d).transpose(2, 0, 1, 3).reshape(h * B, Sq, d)
    attn = jnp.einsum("bqd,bkd->bqk", Q, K) / math.sqrt(d)
    attn = jax.nn.softmax(attn, axis=-1)
    res = jnp.einsum("bqk,bkd->bqd", attn, V)
    res = res.reshape(h, B, Sq, d).transpose(1, 2, 0, 3).reshape(B, Sq, H)
    cat = jnp.concatenate([query, res], axis=-1)
    final = cat @ params["wf"].T + params["bf"]
    final = final + query
    mean = final.mean(-1, keepdims=True)
    var = ((final - mean) ** 2).mean(-1, keepdims=True)
    out = (final - mean) / jnp.sqrt(var + LN_EPS) * params["gamma"] + params["beta"]
    return out, attn


if __name__ == "__main__":
    B, S, H = 2, 8, 32
    rng = jax.random.PRNGKey(0)
    rk, rv, rq, rp = jax.random.split(rng, 4)
    key_in = jax.random.normal(rk, (B, S, H), jnp.float32)
    value_in = jax.random.normal(rv, (B, S, H), jnp.float32)
    query_in = jax.random.normal(rq, (B, S, H), jnp.float32)
    params = init_params(rp, H)

    out, attns = attention_forward(key_in, value_in, query_in, params)
    jax.block_until_ready((out, attns))

    ref_out, ref_attn = _reference(key_in, value_in, query_in, params)
    assert jnp.allclose(out, ref_out, atol=1e-4, rtol=1e-4), "output mismatch"
    assert jnp.allclose(attns, ref_attn, atol=1e-5, rtol=1e-5), "attn mismatch"
    print("KERNEL_OK")
</pallas_src>

<mosaic_0001>
module attributes {stable_mosaic.version = 11 : i64} {
  func.func @_attention_kernel(%arg0: memref<2x8x32xf32, #tpu.memory_space<vmem>>, %arg1: memref<2x8x32xf32, #tpu.memory_space<vmem>>, %arg2: memref<2x8x32xf32, #tpu.memory_space<vmem>>, %arg3: memref<3x4x32x8xf32, #tpu.memory_space<vmem>>, %arg4: memref<32x32xf32, #tpu.memory_space<vmem>>, %arg5: memref<8x8x32xf32, #tpu.memory_space<vmem>>, %arg6: memref<3x32xf32, #tpu.memory_space<vmem>>, %arg7: memref<2x8x32xf32, #tpu.memory_space<vmem>>, %arg8: memref<8x8x8xf32, #tpu.memory_space<vmem>>) attributes {dimension_semantics = [], scalar_prefetch = 0 : i64, scratch_operands = 0 : i64, tpu.core_type = #tpu.core_type<tc>} {
    %c0 = arith.constant 0 : index
    %c0_0 = arith.constant 0 : index
    %c0_1 = arith.constant 0 : index
    %0 = vector.load %arg0[%c0, %c0_0, %c0_1] : memref<2x8x32xf32, #tpu.memory_space<vmem>>, vector<2x8x32xf32>
    %1 = vector.shape_cast %0 : vector<2x8x32xf32> to vector<16x32xf32>
    %c0_2 = arith.constant 0 : index
    %c0_3 = arith.constant 0 : index
    %c0_4 = arith.constant 0 : index
    %2 = vector.load %arg1[%c0_2, %c0_3, %c0_4] : memref<2x8x32xf32, #tpu.memory_space<vmem>>, vector<2x8x32xf32>
    %3 = vector.shape_cast %2 : vector<2x8x32xf32> to vector<16x32xf32>
    %c0_5 = arith.constant 0 : index
    %c0_6 = arith.constant 0 : index
    %c0_7 = arith.constant 0 : index
    %4 = vector.load %arg2[%c0_5, %c0_6, %c0_7] : memref<2x8x32xf32, #tpu.memory_space<vmem>>, vector<2x8x32xf32>
    %5 = vector.shape_cast %4 : vector<2x8x32xf32> to vector<16x32xf32>
    %c0_8 = arith.constant 0 : index
    %c0_9 = arith.constant 0 : index
    %c0_10 = arith.constant 0 : index
    %c0_11 = arith.constant 0 : index
    %6 = vector.load %arg3[%c0_8, %c0_9, %c0_10, %c0_11] : memref<3x4x32x8xf32, #tpu.memory_space<vmem>>, vector<1x1x32x8xf32>
    %7 = vector.shape_cast %6 : vector<1x1x32x8xf32> to vector<32x8xf32>
    %cst = arith.constant dense<0.000000e+00> : vector<16x8xf32>
    %8 = tpu.matmul %1, %7, %cst {dimension_numbers = #tpu.dot_dimension_numbers<[1], [0], [0], [1], [0, 0, 1, 1], [], []>} : vector<16x32xf32>, vector<32x8xf32>, vector<16x8xf32> -> vector<16x8xf32>
    %9 = vector.shape_cast %8 : vector<16x8xf32> to vector<2x8x8xf32>
    %c0_12 = arith.constant 0 : index
    %c1 = arith.constant 1 : index
    %c0_13 = arith.constant 0 : index
    %c0_14 = arith.constant 0 : index
    %10 = vector.load %arg3[%c0_12, %c1, %c0_13, %c0_14] : memref<3x4x32x8xf32, #tpu.memory_space<vmem>>, vector<1x1x32x8xf32>
    %11 = vector.shape_cast %10 : vector<1x1x32x8xf32> to vector<32x8xf32>
    %cst_15 = arith.constant dense<0.000000e+00> : vector<16x8xf32>
    %12 = tpu.matmul %1, %11, %cst_15 {dimension_numbers = #tpu.dot_dimension_numbers<[1], [0], [0], [1], [0, 0, 1, 1], [], []>} : vector<16x32xf32>, vector<32x8xf32>, vector<16x8xf32> -> vector<16x8xf32>
    %13 = vector.shape_cast %12 : vector<16x8xf32> to vector<2x8x8xf32>
    %c0_16 = arith.constant 0 : index
    %c2 = arith.constant 2 : index
    %c0_17 = arith.constant 0 : index
    %c0_18 = arith.constant 0 : index
    %14 = vector.load %arg3[%c0_16, %c2, %c0_17, %c0_18] : memref<3x4x32x8xf32, #tpu.memory_space<vmem>>, vector<1x1x32x8xf32>
    %15 = vector.shape_cast %14 : vector<1x1x32x8xf32> to vector<32x8xf32>
    %cst_19 = arith.constant dense<0.000000e+00> : vector<16x8xf32>
    %16 = tpu.matmul %1, %15, %cst_19 {dimension_numbers = #tpu.dot_dimension_numbers<[1], [0], [0], [1], [0, 0, 1, 1], [], []>} : vector<16x32xf32>, vector<32x8xf32>, vector<16x8xf32> -> vector<16x8xf32>
    %17 = vector.shape_cast %16 : vector<16x8xf32> to vector<2x8x8xf32>
    %c0_20 = arith.constant 0 : index
    %c3 = arith.constant 3 : index
    %c0_21 = arith.constant 0 : index
    %c0_22 = arith.constant 0 : index
    %18 = vector.load %arg3[%c0_20, %c3, %c0_21, %c0_22] : memref<3x4x32x8xf32, #tpu.memory_space<vmem>>, vector<1x1x32x8xf32>
    %19 = vector.shape_cast %18 : vector<1x1x32x8xf32> to vector<32x8xf32>
    %cst_23 = arith.constant dense<0.000000e+00> : vector<16x8xf32>
    %20 = tpu.matmul %1, %19, %cst_23 {dimension_numbers = #tpu.dot_dimension_numbers<[1], [0], [0], [1], [0, 0, 1, 1], [], []>} : vector<16x32xf32>, vector<32x8xf32>, vector<16x8xf32> -> vector<16x8xf32>
    %21 = vector.shape_cast %20 : vector<16x8xf32> to vector<2x8x8xf32>
    %22 = tpu.concatenate %9, %13, %17, %21 in 0 : vector<2x8x8xf32>, vector<2x8x8xf32>, vector<2x8x8xf32>, vector<2x8x8xf32> -> vector<8x8x8xf32>
    %c1_24 = arith.constant 1 : index
    %c0_25 = arith.constant 0 : index
    %c0_26 = arith.constant 0 : index
    %c0_27 = arith.constant 0 : index
    %23 = vector.load %arg3[%c1_24, %c0_25, %c0_26, %c0_27] : memref<3x4x32x8xf32, #tpu.memory_space<vmem>>, vector<1x1x32x8xf32>
    %24 = vector.shape_cast %23 : vector<1x1x32x8xf32> to vector<32x8xf32>
    %cst_28 = arith.constant dense<0.000000e+00> : vector<16x8xf32>
    %25 = tpu.matmul %3, %24, %cst_28 {dimension_numbers = #tpu.dot_dimension_numbers<[1], [0], [0], [1], [0, 0, 1, 1], [], []>} : vector<16x32xf32>, vector<32x8xf32>, vector<16x8xf32> -> vector<16x8xf32>
    %26 = vector.shape_cast %25 : vector<16x8xf32> to vector<2x8x8xf32>
    %c1_29 = arith.constant 1 : index
    %c1_30 = arith.constant 1 : index
    %c0_31 = arith.constant 0 : index
    %c0_32 = arith.constant 0 : index
    %27 = vector.load %arg3[%c1_29, %c1_30, %c0_31, %c0_32] : memref<3x4x32x8xf32, #tpu.memory_space<vmem>>, vector<1x1x32x8xf32>
    %28 = vector.shape_cast %27 : vector<1x1x32x8xf32> to vector<32x8xf32>
    %cst_33 = arith.constant dense<0.000000e+00> : vector<16x8xf32>
    %29 = tpu.matmul %3, %28, %cst_33 {dimension_numbers = #tpu.dot_dimension_numbers<[1], [0], [0], [1], [0, 0, 1, 1], [], []>} : vector<16x32xf32>, vector<32x8xf32>, vector<16x8xf32> -> vector<16x8xf32>
    %30 = vector.shape_cast %29 : vector<16x8xf32> to vector<2x8x8xf32>
    %c1_34 = arith.constant 1 : index
    %c2_35 = arith.constant 2 : index
    %c0_36 = arith.constant 0 : index
    %c0_37 = arith.constant 0 : index
    %31 = vector.load %arg3[%c1_34, %c2_35, %c0_36, %c0_37] : memref<3x4x32x8xf32, #tpu.memory_space<vmem>>, vector<1x1x32x8xf32>
    %32 = vector.shape_cast %31 : vector<1x1x32x8xf32> to vector<32x8xf32>
    %cst_38 = arith.constant dense<0.000000e+00> : vector<16x8xf32>
    %33 = tpu.matmul %3, %32, %cst_38 {dimension_numbers = #tpu.dot_dimension_numbers<[1], [0], [0], [1], [0, 0, 1, 1], [], []>} : vector<16x32xf32>, vector<32x8xf32>, vector<16x8xf32> -> vector<16x8xf32>
    %34 = vector.shape_cast %33 : vector<16x8xf32> to vector<2x8x8xf32>
    %c1_39 = arith.constant 1 : index
    %c3_40 = arith.constant 3 : index
    %c0_41 = arith.constant 0 : index
    %c0_42 = arith.constant 0 : index
    %35 = vector.load %arg3[%c1_39, %c3_40, %c0_41, %c0_42] : memref<3x4x32x8xf32, #tpu.memory_space<vmem>>, vector<1x1x32x8xf32>
    %36 = vector.shape_cast %35 : vector<1x1x32x8xf32> to vector<32x8xf32>
    %cst_43 = arith.constant dense<0.000000e+00> : vector<16x8xf32>
    %37 = tpu.matmul %3, %36, %cst_43 {dimension_numbers = #tpu.dot_dimension_numbers<[1], [0], [0], [1], [0, 0, 1, 1], [], []>} : vector<16x32xf32>, vector<32x8xf32>, vector<16x8xf32> -> vector<16x8xf32>
    %38 = vector.shape_cast %37 : vector<16x8xf32> to vector<2x8x8xf32>
    %39 = tpu.concatenate %26, %30, %34, %38 in 0 : vector<2x8x8xf32>, vector<2x8x8xf32>, vector<2x8x8xf32>, vector<2x8x8xf32> -> vector<8x8x8xf32>
    %c2_44 = arith.constant 2 : index
    %c0_45 = arith.constant 0 : index
    %c0_46 = arith.constant 0 : index
    %c0_47 = arith.constant 0 : index
    %40 = vector.load %arg3[%c2_44, %c0_45, %c0_46, %c0_47] : memref<3x4x32x8xf32, #tpu.memory_space<vmem>>, vector<1x1x32x8xf32>
    %41 = vector.shape_cast %40 : vector<1x1x32x8xf32> to vector<32x8xf32>
    %cst_48 = arith.constant dense<0.000000e+00> : vector<16x8xf32>
    %42 = tpu.matmul %5, %41, %cst_48 {dimension_numbers = #tpu.dot_dimension_numbers<[1], [0], [0], [1], [0, 0, 1, 1], [], []>} : vector<16x32xf32>, vector<32x8xf32>, vector<16x8xf32> -> vector<16x8xf32>
    %43 = vector.shape_cast %42 : vector<16x8xf32> to vector<2x8x8xf32>
    %c2_49 = arith.constant 2 : index
    %c1_50 = arith.constant 1 : index
    %c0_51 = arith.constant 0 : index
    %c0_52 = arith.constant 0 : index
    %44 = vector.load %arg3[%c2_49, %c1_50, %c0_51, %c0_52] : memref<3x4x32x8xf32, #tpu.memory_space<vmem>>, vector<1x1x32x8xf32>
    %45 = vector.shape_cast %44 : vector<1x1x32x8xf32> to vector<32x8xf32>
    %cst_53 = arith.constant dense<0.000000e+00> : vector<16x8xf32>
    %46 = tpu.matmul %5, %45, %cst_53 {dimension_numbers = #tpu.dot_dimension_numbers<[1], [0], [0], [1], [0, 0, 1, 1], [], []>} : vector<16x32xf32>, vector<32x8xf32>, vector<16x8xf32> -> vector<16x8xf32>
    %47 = vector.shape_cast %46 : vector<16x8xf32> to vector<2x8x8xf32>
    %c2_54 = arith.constant 2 : index
    %c2_55 = arith.constant 2 : index
    %c0_56 = arith.constant 0 : index
    %c0_57 = arith.constant 0 : index
    %48 = vector.load %arg3[%c2_54, %c2_55, %c0_56, %c0_57] : memref<3x4x32x8xf32, #tpu.memory_space<vmem>>, vector<1x1x32x8xf32>
    %49 = vector.shape_cast %48 : vector<1x1x32x8xf32> to vector<32x8xf32>
    %cst_58 = arith.constant dense<0.000000e+00> : vector<16x8xf32>
    %50 = tpu.matmul %5, %49, %cst_58 {dimension_numbers = #tpu.dot_dimension_numbers<[1], [0], [0], [1], [0, 0, 1, 1], [], []>} : vector<16x32xf32>, vector<32x8xf32>, vector<16x8xf32> -> vector<16x8xf32>
    %51 = vector.shape_cast %50 : vector<16x8xf32> to vector<2x8x8xf32>
    %c2_59 = arith.constant 2 : index
    %c3_60 = arith.constant 3 : index
    %c0_61 = arith.constant 0 : index
    %c0_62 = arith.constant 0 : index
    %52 = vector.load %arg3[%c2_59, %c3_60, %c0_61, %c0_62] : memref<3x4x32x8xf32, #tpu.memory_space<vmem>>, vector<1x1x32x8xf32>
    %53 = vector.shape_cast %52 : vector<1x1x32x8xf32> to vector<32x8xf32>
    %cst_63 = arith.constant dense<0.000000e+00> : vector<16x8xf32>
    %54 = tpu.matmul %5, %53, %cst_63 {dimension_numbers = #tpu.dot_dimension_numbers<[1], [0], [0], [1], [0, 0, 1, 1], [], []>} : vector<16x32xf32>, vector<32x8xf32>, vector<16x8xf32> -> vector<16x8xf32>
    %55 = vector.shape_cast %54 : vector<16x8xf32> to vector<2x8x8xf32>
    %56 = tpu.concatenate %43, %47, %51, %55 in 0 : vector<2x8x8xf32>, vector<2x8x8xf32>, vector<2x8x8xf32>, vector<2x8x8xf32> -> vector<8x8x8xf32>
    "tpu.trace_start"() <{level = 10 : i32, message = "gqd,gkd->gqk"}> : () -> ()
    %cst_64 = arith.constant dense<0.000000e+00> : vector<8x8x8xf32>
    %57 = tpu.matmul %56, %22, %cst_64 {dimension_numbers = #tpu.dot_dimension_numbers<[2], [2], [1], [1], [0, 0, 0, 1, 1, 1], [0], [0]>} : vector<8x8x8xf32>, vector<8x8x8xf32>, vector<8x8x8xf32> -> vector<8x8x8xf32>
    "tpu.trace_stop"() : () -> ()
    %cst_65 = arith.constant 0.353553385 : f32
    %58 = vector.broadcast %cst_65 : f32 to vector<8x8x8xf32>
    %59 = arith.mulf %57, %58 : vector<8x8x8xf32>
    %cst_66 = arith.constant dense<0xFF800000> : vector<8x8xf32>
    %60 = vector.multi_reduction <maximumf>, %59, %cst_66 [2] : vector<8x8x8xf32> to vector<8x8xf32>
    %61 = vector.shape_cast %60 : vector<8x8xf32> to vector<8x8x1xf32>
    %62 = vector.broadcast %61 : vector<8x8x1xf32> to vector<8x8x8xf32>
    %63 = arith.subf %59, %62 : vector<8x8x8xf32>
    %64 = math.exp %63 : vector<8x8x8xf32>
    %cst_67 = arith.constant dense<0.000000e+00> : vector<8x8xf32>
    %65 = vector.multi_reduction <add>, %64, %cst_67 [2] : vector<8x8x8xf32> to vector<8x8xf32>
    %66 = vector.shape_cast %65 : vector<8x8xf32> to vector<8x8x1xf32>
    %67 = tpu.reciprocal %66 : vector<8x8x1xf32> -> vector<8x8x1xf32>
    %68 = vector.broadcast %67 : vector<8x8x1xf32> to vector<8x8x8xf32>
    %69 = arith.mulf %64, %68 : vector<8x8x8xf32>
    %c0_68 = arith.constant 0 : index
    %c0_69 = arith.constant 0 : index
    %c0_70 = arith.constant 0 : index
    %70 = vector.load %arg8[%c0_68, %c0_69, %c0_70] : memref<8x8x8xf32, #tpu.memory_space<vmem>>, vector<8x8x8xf32>
    tpu.vector_store %arg8[%c0_68, %c0_69, %c0_70], %69 {strides = array<i32>} : memref<8x8x8xf32, #tpu.memory_space<vmem>>, vector<8x8x8xf32>,
    "tpu.trace_start"() <{level = 10 : i32, message = "gqk,gkd->gqd"}> : () -> ()
    %cst_71 = arith.constant dense<0.000000e+00> : vector<8x8x8xf32>
    %71 = tpu.matmul %69, %39, %cst_71 {dimension_numbers = #tpu.dot_dimension_numbers<[2], [1], [1], [2], [0, 0, 0, 1, 1, 2], [0], [0]>} : vector<8x8x8xf32>, vector<8x8x8xf32>, vector<8x8x8xf32> -> vector<8x8x8xf32>
    "tpu.trace_stop"() : () -> ()
    %c0_72 = arith.constant 0 : index
    %c0_73 = arith.constant 0 : index
    %c0_74 = arith.constant 0 : index
    %72 = vector.load %arg5[%c0_72, %c0_73, %c0_74] : memref<8x8x32xf32, #tpu.memory_space<vmem>>, vector<8x8x32xf32>
    "tpu.trace_start"() <{level = 10 : i32, message = "gqd,gdo->gqo"}> : () -> ()
    %cst_75 = arith.constant dense<0.000000e+00> : vector<8x8x32xf32>
    %73 = tpu.matmul %71, %72, %cst_75 {dimension_numbers = #tpu.dot_dimension_numbers<[2], [1], [1], [2], [0, 0, 0, 1, 1, 2], [0], [0]>} : vector<8x8x8xf32>, vector<8x8x32xf32>, vector<8x8x32xf32> -> vector<8x8x32xf32>
    "tpu.trace_stop"() : () -> ()
    %74 = vector.shape_cast %73 : vector<8x8x32xf32> to vector<4x2x8x32xf32>
    %cst_76 = arith.constant dense<0.000000e+00> : vector<2x8x32xf32>
    %75 = vector.multi_reduction <add>, %74, %cst_76 [0] : vector<4x2x8x32xf32> to vector<2x8x32xf32>
    %c0_77 = arith.constant 0 : index
    %c0_78 = arith.constant 0 : index
    %76 = vector.load %arg4[%c0_77, %c0_78] : memref<32x32xf32, #tpu.memory_space<vmem>>, vector<32x32xf32>
    %cst_79 = arith.constant dense<0.000000e+00> : vector<16x32xf32>
    %77 = tpu.matmul %5, %76, %cst_79 {dimension_numbers = #tpu.dot_dimension_numbers<[1], [0], [0], [1], [0, 0, 1, 1], [], []>} : vector<16x32xf32>, vector<32x32xf32>, vector<16x32xf32> -> vector<16x32xf32>
    %78 = vector.shape_cast %77 : vector<16x32xf32> to vector<2x8x32xf32>
    %79 = arith.addf %78, %75 : vector<2x8x32xf32>
    %c0_80 = arith.constant 0 : index
    %c0_81 = arith.constant 0 : index
    %80 = vector.load %arg6[%c0_80, %c0_81] : memref<3x32xf32, #tpu.memory_space<vmem>>, vector<1x32xf32>
    %81 = vector.shape_cast %80 : vector<1x32xf32> to vector<1x1x32xf32>
    %82 = vector.broadcast %81 : vector<1x1x32xf32> to vector<2x8x32xf32>
    %83 = arith.addf %79, %82 : vector<2x8x32xf32>
    %84 = vector.shape_cast %5 : vector<16x32xf32> to vector<2x8x32xf32>
    %85 = arith.addf %83, %84 : vector<2x8x32xf32>
    %cst_82 = arith.constant dense<0.000000e+00> : vector<2x8xf32>
    %86 = vector.multi_reduction <add>, %85, %cst_82 [2] : vector<2x8x32xf32> to vector<2x8xf32>
    %87 = vector.shape_cast %86 : vector<2x8xf32> to vector<2x8x1xf32>
    %cst_83 = arith.constant 3.200000e+01 : f32
    %88 = vector.broadcast %cst_83 : f32 to vector<2x8x1xf32>
    %89 = arith.divf %87, %88 : vector<2x8x1xf32>
    %90 = vector.broadcast %89 : vector<2x8x1xf32> to vector<2x8x32xf32>
    %91 = arith.subf %85, %90 : vector<2x8x32xf32>
    %92 = arith.mulf %91, %91 : vector<2x8x32xf32>
    %cst_84 = arith.constant dense<0.000000e+00> : vector<2x8xf32>
    %93 = vector.multi_reduction <add>, %92, %cst_84 [2] : vector<2x8x32xf32> to vector<2x8xf32>
    %94 = vector.shape_cast %93 : vector<2x8xf32> to vector<2x8x1xf32>
    %cst_85 = arith.constant 3.200000e+01 : f32
    %95 = vector.broadcast %cst_85 : f32 to vector<2x8x1xf32>
    %96 = arith.divf %94, %95 : vector<2x8x1xf32>
    %97 = vector.broadcast %89 : vector<2x8x1xf32> to vector<2x8x32xf32>
    %98 = arith.subf %85, %97 : vector<2x8x32xf32>
    %cst_86 = arith.constant 9.99999974E-6 : f32
    %99 = vector.broadcast %cst_86 : f32 to vector<2x8x1xf32>
    %100 = arith.addf %96, %99 : vector<2x8x1xf32>
    %101 = math.rsqrt %100 : vector<2x8x1xf32>
    %102 = vector.broadcast %101 : vector<2x8x1xf32> to vector<2x8x32xf32>
    %103 = arith.mulf %98, %102 : vector<2x8x32xf32>
    %c1_87 = arith.constant 1 : index
    %c0_88 = arith.constant 0 : index
    %104 = vector.load %arg6[%c1_87, %c0_88] : memref<3x32xf32, #tpu.memory_space<vmem>>, vector<1x32xf32>
    %105 = vector.shape_cast %104 : vector<1x32xf32> to vector<1x1x32xf32>
    %106 = vector.broadcast %105 : vector<1x1x32xf32> to vector<2x8x32xf32>
    %107 = arith.mulf %103, %106 : vector<2x8x32xf32>
    %c2_89 = arith.constant 2 : index
    %c0_90 = arith.constant 0 : index
    %108 = vector.load %arg6[%c2_89, %c0_90] : memref<3x32xf32, #tpu.memory_space<vmem>>, vector<1x32xf32>
    %109 = vector.shape_cast %108 : vector<1x32xf32> to vector<1x1x32xf32>
    %110 = vector.broadcast %109 : vector<1x1x32xf32> to vector<2x8x32xf32>
    %111 = arith.addf %107, %110 : vector<2x8x32xf32>
    %c0_91 = arith.constant 0 : index
    %c0_92 = arith.constant 0 : index
    %c0_93 = arith.constant 0 : index
    %112 = vector.load %arg7[%c0_91, %c0_92, %c0_93] : memref<2x8x32xf32, #tpu.memory_space<vmem>>, vector<2x8x32xf32>
    tpu.vector_store %arg7[%c0_91, %c0_92, %c0_93], %111 {strides = array<i32>} : memref<2x8x32xf32, #tpu.memory_space<vmem>>, vector<2x8x32xf32>,
    return
  }
}

</mosaic_0001>

<llo_original>
// kernel: tpu_custom_call.1
$region0: #{tpu_custom_call.1}
  #allocation0 [shape = 'u32[]', space=smem, size = 0x4, offset = 0x4, fixed_abs, tag = 'smem constant byte address 0x4 - core index']
  #allocation1 [shape = 'u32[144,128]{1,0:T(1,128)}', space=vmem, size = 0x12000, scoped, tag = 'internal scratch']
  %s0 = inlined_call_operand.vmem [shape: f32[2,8,32], index: 0, kind: input, shape index: {}]
  %s1 = inlined_call_operand.vmem [shape: f32[2,8,32], index: 1, kind: input, shape index: {}]
  %s2 = inlined_call_operand.vmem [shape: f32[2,8,32], index: 2, kind: input, shape index: {}]
  %s3 = inlined_call_operand.vmem [shape: f32[3,4,32,8], index: 3, kind: input, shape index: {}]
  %s4 = inlined_call_operand.vmem [shape: f32[32,32], index: 4, kind: input, shape index: {}]
  %s5 = inlined_call_operand.vmem [shape: f32[8,8,32], index: 5, kind: input, shape index: {}]
  %s6 = inlined_call_operand.vmem [shape: f32[3,32], index: 6, kind: input, shape index: {}]
  %s7 = inlined_call_operand.hbm [shape: f32[2,8,32], index: 7, kind: output, shape index: {0}]
  %s8 = inlined_call_operand.hbm [shape: f32[8,8,8], index: 8, kind: output, shape index: {1}]
  %9 = xla_tuple %s7, %s8
  %s10 = sld [smem:[#allocation0]]
  $region46: #{tpu_custom_call.1} parent=0
    _
  %s12 = ssub.s32 1, %s10
  %s13 = scalar_select 0, %s12, %s10
  $region1: #{tpu_custom_call.1} parent=0
    #allocation2 [shape = 'u8[8192]{0}', space=vmem, size = 0x2000, scoped, tag = 'output window, operand 0, single buffered']
    #allocation3 [shape = 's32[1]{0}', space=sflag, size = 0x4, scoped, tag = 'scoped memory for tpu_custom_call.1']
    #allocation4 [shape = 'u8[32768]{0}', space=vmem, size = 0x8000, scoped, tag = 'output window, operand 1, single buffered']
    #allocation5 [shape = 's32[1]{0}', space=sflag, size = 0x4, scoped, tag = 'scoped memory for tpu_custom_call.1']
    %14 = vsyncpa [#allocation3], 0
    %15 = vsyncpa [#allocation5], 0
    // Predicated region
    $region2: #{tpu_custom_call.1} parent=1 // pred_check
      _
    $region3: #{tpu_custom_call.1} parent=1 // pred_check_branch
      %17 = sbr.rel (0) target = $region5
    $region4: #{tpu_custom_call.1} parent=1 // pred_region
      _
    $region5: #{tpu_custom_call.1} parent=1 // pred_fallthru
      _
    // Predicated region
    $region6: #{tpu_custom_call.1} parent=1 // pred_check
      _
    $region7: #{tpu_custom_call.1} parent=1 // pred_check_branch
      %19 = sbr.rel (0) target = $region9
    $region8: #{tpu_custom_call.1} parent=1 // pred_region
      _
    $region9: #{tpu_custom_call.1} parent=1 // pred_fallthru
      _
    // Predicated region
    $region10: #{tpu_custom_call.1} parent=1 // pred_check
      _
    $region11: #{tpu_custom_call.1} parent=1 // pred_check_branch
      %21 = sbr.rel (0) target = $region13
    $region12: #{tpu_custom_call.1} parent=1 // pred_region
      _
    $region13: #{tpu_custom_call.1} parent=1 // pred_fallthru
      _
    // Predicated region
    $region14: #{tpu_custom_call.1} parent=1 // pred_check
      _
    $region15: #{tpu_custom_call.1} parent=1 // pred_check_branch
      %23 = sbr.rel (0) target = $region17
    $region16: #{tpu_custom_call.1} parent=1 // pred_region
      _
    $region17: #{tpu_custom_call.1} parent=1 // pred_fallthru
      _
    // Predicated region
    $region18: #{tpu_custom_call.1} parent=1 // pred_check
      _
    $region19: #{tpu_custom_call.1} parent=1 // pred_check_branch
      %25 = sbr.rel (0) target = $region21
    $region20: #{tpu_custom_call.1} parent=1 // pred_region
      _
    $region21: #{tpu_custom_call.1} parent=1 // pred_fallthru
      _
    // Predicated region
    $region22: #{tpu_custom_call.1} parent=1 // pred_check
      _
    $region23: #{tpu_custom_call.1} parent=1 // pred_check_branch
      %27 = sbr.rel (0) target = $region25
    $region24: #{tpu_custom_call.1} parent=1 // pred_region
      _
    $region25: #{tpu_custom_call.1} parent=1 // pred_fallthru
      _
    // Predicated region
    $region26: #{tpu_custom_call.1} parent=1 // pred_check
      _
    $region27: #{tpu_custom_call.1} parent=1 // pred_check_branch
      %29 = sbr.rel (0) target = $region29
    $region28: #{tpu_custom_call.1} parent=1 // pred_region
      _
    $region29: #{tpu_custom_call.1} parent=1 // pred_fallthru
      _
    %v30 = vld [vmem:[%s0] sm:$0xff]
    %v31 = vld [vmem:[%s0 + $0x8] sm:$0xff]
    %v32 = vld [vmem:[%s1] sm:$0xff]
    %v33 = vld [vmem:[%s1 + $0x8] sm:$0xff]
    %v34 = vld [vmem:[%s2] sm:$0xff]
    %v35 = vld [vmem:[%s2 + $0x8] sm:$0xff]
    %v36 = vld [vmem:[%s3] sm:$0xff]
    %v37 = vld [vmem:[%s3 + $0x8] sm:$0xff]
    %v38 = vld [vmem:[%s3 + $0x10] sm:$0xff]
    %v39 = vld [vmem:[%s3 + $0x18] sm:$0xff]
    %vm40 = vcmask 261120
    %v42 = vsel %vm40, %v30, 0
    %v45 = vsel %vm40, %v31, 0
    %47 = vmatprep.subr.mxu0 0.0
    %48 = vmatpush1.msra.mxu0 0.0
    %49 = vmatprep.subr.mxu0 0.0
    %50 = vmatpush1.msra.mxu0 0.0
    %51 = vmatprep.subr.mxu0 0.0
    %52 = vmatpush1.msra.mxu0 0.0
    %53 = vmatprep.subr.mxu0 0.0
    %54 = vmatpush1.msra.mxu0 0.0
    %55 = vmatprep.subr.mxu0 0.0
    %56 = vmatpush1.msra.mxu0 0.0
    %57 = vmatprep.subr.mxu0 0.0
    %58 = vmatpush1.msra.mxu0 0.0
    %59 = vmatprep.subr.mxu0 0.0
    %60 = vmatpush1.msra.mxu0 0.0
    %61 = vmatprep.subr.mxu0 0.0
    %62 = vmatpush1.msra.mxu0 0.0
    %63 = vmatprep.subr.mxu0 0.0
    %64 = vmatpush1.msra.mxu0 0.0
    %65 = vmatprep.subr.mxu0 0.0
    %66 = vmatpush1.msra.mxu0 0.0
    %67 = vmatprep.subr.mxu0 0.0
    %68 = vmatpush1.msra.mxu0 0.0
    %69 = vmatprep.subr.mxu0 0.0
    %70 = vmatpush1.msra.mxu0 0.0
    %71 = vmatprep.subr.mxu0 0.0
    %72 = vmatpush1.msra.mxu0 %v39
    %73 = vmatprep.subr.mxu0 0.0
    %74 = vmatpush1.msra.mxu0 %v38
    %75 = vmatprep.subr.mxu0 0.0
    %76 = vmatpush1.msra.mxu0 %v37
    %77 = vmatprep.subr.mxu0 0.0
    %78 = vmatpush1.msra.mxu0 %v36
    %79 = vmatprep.subr.mxu0 0.0
    %80 = vmatpush2.msra.mxu0 0.0
    %81 = vmatprep.subr.mxu0 0.0
    %82 = vmatpush2.msra.mxu0 0.0
    %83 = vmatprep.subr.mxu0 0.0
    %84 = vmatpush2.msra.mxu0 0.0
    %85 = vmatprep.subr.mxu0 0.0
    %86 = vmatpush2.msra.mxu0 0.0
    %87 = vmatprep.subr.mxu0 0.0
    %88 = vmatpush2.msra.mxu0 0.0
    %89 = vmatprep.subr.mxu0 0.0
    %90 = vmatpush2.msra.mxu0 0.0
    %91 = vmatprep.subr.mxu0 0.0
    %92 = vmatpush2.msra.mxu0 0.0
    %93 = vmatprep.subr.mxu0 0.0
    %94 = vmatpush2.msra.mxu0 0.0
    %95 = vmatprep.subr.mxu0 0.0
    %96 = vmatpush2.msra.mxu0 0.0
    %97 = vmatprep.subr.mxu0 0.0
    %98 = vmatpush2.msra.mxu0 0.0
    %99 = vmatprep.subr.mxu0 0.0
    %100 = vmatpush2.msra.mxu0 0.0
    %101 = vmatprep.subr.mxu0 0.0
    %102 = vmatpush2.msra.mxu0 0.0
    %103 = vmatprep.subr.mxu0 0.0
    %104 = vmatpush2.msra.mxu0 0.0
    %105 = vmatprep.subr.mxu0 0.0
    %106 = vmatpush2.msra.mxu0 0.0
    %107 = vmatprep.subr.mxu0 0.0
    %108 = vmatpush2.msra.mxu0 0.0
    %109 = vmatprep.subr.mxu0 0.0
    %110 = vmatpush2.msra.mxu0 0.0
    %111 = vmatprep.mubr.f32.mxu0 0.0
    %112 = vmatmul.mubr.f32.gmra.mxu0 %v42
    %v113 = vpop.f32.mrf.mxu0
    %v114 = vadd.f32 0.0, %v113
    %v115 = vpop.f32.mrf.mxu0
    %116 = vmatprep.mubr.f32.mxu0 0.0
    %117 = vmatmul.mubr.f32.gmra.mxu0 %v45
    %v118 = vpop.f32.mrf.mxu0
    %v119 = vadd.f32 0.0, %v118
    %v120 = vpop.f32.mrf.mxu0
    %121 = vdwg.mxu0
    %s122 = scalar_lea.vmem %s3, 32
    %v123 = vld [vmem:[%s122] sm:$0xff]
    %v124 = vld [vmem:[%s122 + $0x8] sm:$0xff]
    %v125 = vld [vmem:[%s122 + $0x10] sm:$0xff]
    %v126 = vld [vmem:[%s122 + $0x18] sm:$0xff]
    %127 = vmatprep.subr.mxu0 0.0
    %128 = vmatpush1.msra.mxu0 0.0
    %129 = vmatprep.subr.mxu0 0.0
    %130 = vmatpush1.msra.mxu0 0.0
    %131 = vmatprep.subr.mxu0 0.0
    %132 = vmatpush1.msra.mxu0 0.0
    %133 = vmatprep.subr.mxu0 0.0
    %134 = vmatpush1.msra.mxu0 0.0
    %135 = vmatprep.subr.mxu0 0.0
    %136 = vmatpush1.msra.mxu0 0.0
    %137 = vmatprep.subr.mxu0 0.0
    %138 = vmatpush1.msra.mxu0 0.0
    %139 = vmatprep.subr.mxu0 0.0
    %140 = vmatpush1.msra.mxu0 0.0
    %141 = vmatprep.subr.mxu0 0.0
    %142 = vmatpush1.msra.mxu0 0.0
    %143 = vmatprep.subr.mxu0 0.0
    %144 = vmatpush1.msra.mxu0 0.0
    %145 = vmatprep.subr.mxu0 0.0
    %146 = vmatpush1.msra.mxu0 0.0
    %147 = vmatprep.subr.mxu0 0.0
    %148 = vmatpush1.msra.mxu0 0.0
    %149 = vmatprep.subr.mxu0 0.0
    %150 = vmatpush1.msra.mxu0 0.0
    %151 = vmatprep.subr.mxu0 0.0
    %152 = vmatpush1.msra.mxu0 %v126
    %153 = vmatprep.subr.mxu0 0.0
    %154 = vmatpush1.msra.mxu0 %v125
    %155 = vmatprep.subr.mxu0 0.0
    %156 = vmatpush1.msra.mxu0 %v124
    %157 = vmatprep.subr.mxu0 0.0
    %158 = vmatpush1.msra.mxu0 %v123
    %159 = vmatprep.subr.mxu0 0.0
    %160 = vmatpush2.msra.mxu0 0.0
    %161 = vmatprep.subr.mxu0 0.0
    %162 = vmatpush2.msra.mxu0 0.0
    %163 = vmatprep.subr.mxu0 0.0
    %164 = vmatpush2.msra.mxu0 0.0
    %165 = vmatprep.subr.mxu0 0.0
    %166 = vmatpush2.msra.mxu0 0.0
    %167 = vmatprep.subr.mxu0 0.0
    %168 = vmatpush2.msra.mxu0 0.0
    %169 = vmatprep.subr.mxu0 0.0
    %170 = vmatpush2.msra.mxu0 0.0
    %171 = vmatprep.subr.mxu0 0.0
    %172 = vmatpush2.msra.mxu0 0.0
    %173 = vmatprep.subr.mxu0 0.0
    %174 = vmatpush2.msra.mxu0 0.0
    %175 = vmatprep.subr.mxu0 0.0
    %176 = vmatpush2.msra.mxu0 0.0
    %177 = vmatprep.subr.mxu0 0.0
    %178 = vmatpush2.msra.mxu0 0.0
    %179 = vmatprep.subr.mxu0 0.0
    %180 = vmatpush2.msra.mxu0 0.0
    %181 = vmatprep.subr.mxu0 0.0
    %182 = vmatpush2.msra.mxu0 0.0
    %183 = vmatprep.subr.mxu0 0.0
    %184 = vmatpush2.msra.mxu0 0.0
    %185 = vmatprep.subr.mxu0 0.0
    %186 = vmatpush2.msra.mxu0 0.0
    %187 = vmatprep.subr.mxu0 0.0
    %188 = vmatpush2.msra.mxu0 0.0
    %189 = vmatprep.subr.mxu0 0.0
    %190 = vmatpush2.msra.mxu0 0.0
    %191 = vmatprep.mubr.f32.mxu0 0.0
    %192 = vmatmul.mubr.f32.gmra.mxu0 %v42
    %v193 = vpop.f32.mrf.mxu0
    %v194 = vadd.f32 0.0, %v193
    %v195 = vpop.f32.mrf.mxu0
    %196 = vmatprep.mubr.f32.mxu0 0.0
    %197 = vmatmul.mubr.f32.gmra.mxu0 %v45
    %v198 = vpop.f32.mrf.mxu0
    %v199 = vadd.f32 0.0, %v198
    %v200 = vpop.f32.mrf.mxu0
    %201 = vdwg.mxu0
    %s202 = scalar_lea.vmem %s3, 64
    %v203 = vld [vmem:[%s202] sm:$0xff]
    %v204 = vld [vmem:[%s202 + $0x8] sm:$0xff]
    %v205 = vld [vmem:[%s202 + $0x10] sm:$0xff]
    %v206 = vld [vmem:[%s202 + $0x18] sm:$0xff]
    %207 = vmatprep.subr.mxu0 0.0
    %208 = vmatpush1.msra.mxu0 0.0
    %209 = vmatprep.subr.mxu0 0.0
    %210 = vmatpush1.msra.mxu0 0.0
    %211 = vmatprep.subr.mxu0 0.0
    %212 = vmatpush1.msra.mxu0 0.0
    %213 = vmatprep.subr.mxu0 0.0
    %214 = vmatpush1.msra.mxu0 0.0
    %215 = vmatprep.subr.mxu0 0.0
    %216 = vmatpush1.msra.mxu0 0.0
    %217 = vmatprep.subr.mxu0 0.0
    %218 = vmatpush1.msra.mxu0 0.0
    %219 = vmatprep.subr.mxu0 0.0
    %220 = vmatpush1.msra.mxu0 0.0
    %221 = vmatprep.subr.mxu0 0.0
    %222 = vmatpush1.msra.mxu0 0.0
    %223 = vmatprep.subr.mxu0 0.0
    %224 = vmatpush1.msra.mxu0 0.0
    %225 = vmatprep.subr.mxu0 0.0
    %226 = vmatpush1.msra.mxu0 0.0
    %227 = vmatprep.subr.mxu0 0.0
    %228 = vmatpush1.msra.mxu0 0.0
    %229 = vmatprep.subr.mxu0 0.0
    %230 = vmatpush1.msra.mxu0 0.0
    %231 = vmatprep.subr.mxu0 0.0
    %232 = vmatpush1.msra.mxu0 %v206
    %233 = vmatprep.subr.mxu0 0.0
    %234 = vmatpush1.msra.mxu0 %v205
    %235 = vmatprep.subr.mxu0 0.0
    %236 = vmatpush1.msra.mxu0 %v204
    %237 = vmatprep.subr.mxu0 0.0
    %238 = vmatpush1.msra.mxu0 %v203
    %239 = vmatprep.subr.mxu0 0.0
    %240 = vmatpush2.msra.mxu0 0.0
    %241 = vmatprep.subr.mxu0 0.0
    %242 = vmatpush2.msra.mxu0 0.0
    %243 = vmatprep.subr.mxu0 0.0
    %244 = vmatpush2.msra.mxu0 0.0
    %245 = vmatprep.subr.mxu0 0.0
    %246 = vmatpush2.msra.mxu0 0.0
    %247 = vmatprep.subr.mxu0 0.0
    %248 = vmatpush2.msra.mxu0 0.0
    %249 = vmatprep.subr.mxu0 0.0
    %250 = vmatpush2.msra.mxu0 0.0
    %251 = vmatprep.subr.mxu0 0.0
    %252 = vmatpush2.msra.mxu0 0.0
    %253 = vmatprep.subr.mxu0 0.0
    %254 = vmatpush2.msra.mxu0 0.0
    %255 = vmatprep.subr.mxu0 0.0
    %256 = vmatpush2.msra.mxu0 0.0
    %257 = vmatprep.subr.mxu0 0.0
    %258 = vmatpush2.msra.mxu0 0.0
    %259 = vmatprep.subr.mxu0 0.0
    %260 = vmatpush2.msra.mxu0 0.0
    %261 = vmatprep.subr.mxu0 0.0
    %262 = vmatpush2.msra.mxu0 0.0
    %263 = vmatprep.subr.mxu0 0.0
    %264 = vmatpush2.msra.mxu0 0.0
    %265 = vmatprep.subr.mxu0 0.0
    %266 = vmatpush2.msra.mxu0 0.0
    %267 = vmatprep.subr.mxu0 0.0
    %268 = vmatpush2.msra.mxu0 0.0
    %269 = vmatprep.subr.mxu0 0.0
    %270 = vmatpush2.msra.mxu0 0.0
    %271 = vmatprep.mubr.f32.mxu0 0.0
    %272 = vmatmul.mubr.f32.gmra.mxu0 %v42
    %v273 = vpop.f32.mrf.mxu0
    %v274 = vadd.f32 0.0, %v273
    %v275 = vpop.f32.mrf.mxu0
    %276 = vmatprep.mubr.f32.mxu0 0.0
    %277 = vmatmul.mubr.f32.gmra.mxu0 %v45
    %v278 = vpop.f32.mrf.mxu0
    %v279 = vadd.f32 0.0, %v278
    %v280 = vpop.f32.mrf.mxu0
    %281 = vdwg.mxu0
    %s282 = scalar_lea.vmem %s3, 96
    %v283 = vld [vmem:[%s282] sm:$0xff]
    %v284 = vld [vmem:[%s282 + $0x8] sm:$0xff]
    %v285 = vld [vmem:[%s282 + $0x10] sm:$0xff]
    %v286 = vld [vmem:[%s282 + $0x18] sm:$0xff]
    %287 = vmatprep.subr.mxu0 0.0
    %288 = vmatpush1.msra.mxu0 0.0
    %289 = vmatprep.subr.mxu0 0.0
    %290 = vmatpush1.msra.mxu0 0.0
    %291 = vmatprep.subr.mxu0 0.0
    %292 = vmatpush1.msra.mxu0 0.0
    %293 = vmatprep.subr.mxu0 0.0
    %294 = vmatpush1.msra.mxu0 0.0
    %295 = vmatprep.subr.mxu0 0.0
    %296 = vmatpush1.msra.mxu0 0.0
    %297 = vmatprep.subr.mxu0 0.0
    %298 = vmatpush1.msra.mxu0 0.0
    %299 = vmatprep.subr.mxu0 0.0
    %300 = vmatpush1.msra.mxu0 0.0
    %301 = vmatprep.subr.mxu0 0.0
    %302 = vmatpush1.msra.mxu0 0.0
    %303 = vmatprep.subr.mxu0 0.0
    %304 = vmatpush1.msra.mxu0 0.0
    %305 = vmatprep.subr.mxu0 0.0
    %306 = vmatpush1.msra.mxu0 0.0
    %307 = vmatprep.subr.mxu0 0.0
    %308 = vmatpush1.msra.mxu0 0.0
    %309 = vmatprep.subr.mxu0 0.0
    %310 = vmatpush1.msra.mxu0 0.0
    %311 = vmatprep.subr.mxu0 0.0
    %312 = vmatpush1.msra.mxu0 %v286
    %313 = vmatprep.subr.mxu0 0.0
    %314 = vmatpush1.msra.mxu0 %v285
    %315 = vmatprep.subr.mxu0 0.0
    %316 = vmatpush1.msra.mxu0 %v284
    %317 = vmatprep.subr.mxu0 0.0
    %318 = vmatpush1.msra.mxu0 %v283
    %319 = vmatprep.subr.mxu0 0.0
    %320 = vmatpush2.msra.mxu0 0.0
    %321 = vmatprep.subr.mxu0 0.0
    %322 = vmatpush2.msra.mxu0 0.0
    %323 = vmatprep.subr.mxu0 0.0
    %324 = vmatpush2.msra.mxu0 0.0
    %325 = vmatprep.subr.mxu0 0.0
    %326 = vmatpush2.msra.mxu0 0.0
    %327 = vmatprep.subr.mxu0 0.0
    %328 = vmatpush2.msra.mxu0 0.0
    %329 = vmatprep.subr.mxu0 0.0
    %330 = vmatpush2.msra.mxu0 0.0
    %331 = vmatprep.subr.mxu0 0.0
    %332 = vmatpush2.msra.mxu0 0.0
    %333 = vmatprep.subr.mxu0 0.0
    %334 = vmatpush2.msra.mxu0 0.0
    %335 = vmatprep.subr.mxu0 0.0
    %336 = vmatpush2.msra.mxu0 0.0
    %337 = vmatprep.subr.mxu0 0.0
    %338 = vmatpush2.msra.mxu0 0.0
    %339 = vmatprep.subr.mxu0 0.0
    %340 = vmatpush2.msra.mxu0 0.0
    %341 = vmatprep.subr.mxu0 0.0
    %342 = vmatpush2.msra.mxu0 0.0
    %343 = vmatprep.subr.mxu0 0.0
    %344 = vmatpush2.msra.mxu0 0.0
    %345 = vmatprep.subr.mxu0 0.0
    %346 = vmatpush2.msra.mxu0 0.0
    %347 = vmatprep.subr.mxu0 0.0
    %348 = vmatpush2.msra.mxu0 0.0
    %349 = vmatprep.subr.mxu0 0.0
    %350 = vmatpush2.msra.mxu0 0.0
    %351 = vmatprep.mubr.f32.mxu0 0.0
    %352 = vmatmul.mubr.f32.gmra.mxu0 %v42
    %v353 = vpop.f32.mrf.mxu0
    %v354 = vadd.f32 0.0, %v353
    %v355 = vpop.f32.mrf.mxu0
    %356 = vmatprep.mubr.f32.mxu0 0.0
    %357 = vmatmul.mubr.f32.gmra.mxu0 %v45
    %v358 = vpop.f32.mrf.mxu0
    %v359 = vadd.f32 0.0, %v358
    %v360 = vpop.f32.mrf.mxu0
    %361 = vdwg.mxu0
    %s362 = scalar_lea.vmem %s3, 128
    %v363 = vld [vmem:[%s362] sm:$0xff]
    %v364 = vld [vmem:[%s362 + $0x8] sm:$0xff]
    %v365 = vld [vmem:[%s362 + $0x10] sm:$0xff]
    %v366 = vld [vmem:[%s362 + $0x18] sm:$0xff]
    %v368 = vsel %vm40, %v32, 0
    %v371 = vsel %vm40, %v33, 0
    %373 = vmatprep.subr.mxu0 0.0
    %374 = vmatpush1.msra.mxu0 0.0
    %375 = vmatprep.subr.mxu0 0.0
    %376 = vmatpush1.msra.mxu0 0.0
    %377 = vmatprep.subr.mxu0 0.0
    %378 = vmatpush1.msra.mxu0 0.0
    %379 = vmatprep.subr.mxu0 0.0
    %380 = vmatpush1.msra.mxu0 0.0
    %381 = vmatprep.subr.mxu0 0.0
    %382 = vmatpush1.msra.mxu0 0.0
    %383 = vmatprep.subr.mxu0 0.0
    %384 = vmatpush1.msra.mxu0 0.0
    %385 = vmatprep.subr.mxu0 0.0
    %386 = vmatpush1.msra.mxu0 0.0
    %387 = vmatprep.subr.mxu0 0.0
    %388 = vmatpush1.msra.mxu0 0.0
    %389 = vmatprep.subr.mxu0 0.0
    %390 = vmatpush1.msra.mxu0 0.0
    %391 = vmatprep.subr.mxu0 0.0
    %392 = vmatpush1.msra.mxu0 0.0
    %393 = vmatprep.subr.mxu0 0.0
    %394 = vmatpush1.msra.mxu0 0.0
    %395 = vmatprep.subr.mxu0 0.0
    %396 = vmatpush1.msra.mxu0 0.0
    %397 = vmatprep.subr.mxu0 0.0
    %398 = vmatpush1.msra.mxu0 %v366
    %399 = vmatprep.subr.mxu0 0.0
    %400 = vmatpush1.msra.mxu0 %v365
    %401 = vmatprep.subr.mxu0 0.0
    %402 = vmatpush1.msra.mxu0 %v364
    %403 = vmatprep.subr.mxu0 0.0
    %404 = vmatpush1.msra.mxu0 %v363
    %405 = vmatprep.subr.mxu0 0.0
    %406 = vmatpush2.msra.mxu0 0.0
    %407 = vmatprep.subr.mxu0 0.0
    %408 = vmatpush2.msra.mxu0 0.0
    %409 = vmatprep.subr.mxu0 0.0
    %410 = vmatpush2.msra.mxu0 0.0
    %411 = vmatprep.subr.mxu0 0.0
    %412 = vmatpush2.msra.mxu0 0.0
    %413 = vmatprep.subr.mxu0 0.0
    %414 = vmatpush2.msra.mxu0 0.0
    %415 = vmatprep.subr.mxu0 0.0
    %416 = vmatpush2.msra.mxu0 0.0
    %417 = vmatprep.subr.mxu0 0.0
    %418 = vmatpush2.msra.mxu0 0.0
    %419 = vmatprep.subr.mxu0 0.0
    %420 = vmatpush2.msra.mxu0 0.0
    %421 = vmatprep.subr.mxu0 0.0
    %422 = vmatpush2.msra.mxu0 0.0
    %423 = vmatprep.subr.mxu0 0.0
    %424 = vmatpush2.msra.mxu0 0.0
    %425 = vmatprep.subr.mxu0 0.0
    %426 = vmatpush2.msra.mxu0 0.0
    %427 = vmatprep.subr.mxu0 0.0
    %428 = vmatpush2.msra.mxu0 0.0
    %429 = vmatprep.subr.mxu0 0.0
    %430 = vmatpush2.msra.mxu0 0.0
    %431 = vmatprep.subr.mxu0 0.0
    %432 = vmatpush2.msra.mxu0 0.0
    %433 = vmatprep.subr.mxu0 0.0
    %434 = vmatpush2.msra.mxu0 0.0
    %435 = vmatprep.subr.mxu0 0.0
    %436 = vmatpush2.msra.mxu0 0.0
    %437 = vmatprep.mubr.f32.mxu0 0.0
    %438 = vmatmul.mubr.f32.gmra.mxu0 %v368
    %v439 = vpop.f32.mrf.mxu0
    %v440 = vadd.f32 0.0, %v439
    %v441 = vpop.f32.mrf.mxu0
    %442 = vmatprep.mubr.f32.mxu0 0.0
    %443 = vmatmul.mubr.f32.gmra.mxu0 %v371
    %v444 = vpop.f32.mrf.mxu0
    %v445 = vadd.f32 0.0, %v444
    %v446 = vpop.f32.mrf.mxu0
    %447 = vdwg.mxu0
    %s448 = scalar_lea.vmem %s3, 160
    %v449 = vld [vmem:[%s448] sm:$0xff]
    %v450 = vld [vmem:[%s448 + $0x8] sm:$0xff]
    %v451 = vld [vmem:[%s448 + $0x10] sm:$0xff]
    %v452 = vld [vmem:[%s448 + $0x18] sm:$0xff]
    %453 = vmatprep.subr.mxu0 0.0
    %454 = vmatpush1.msra.mxu0 0.0
    %455 = vmatprep.subr.mxu0 0.0
    %456 = vmatpush1.msra.mxu0 0.0
    %457 = vmatprep.subr.mxu0 0.0
    %458 = vmatpush1.msra.mxu0 0.0
    %459 = vmatprep.subr.mxu0 0.0
    %460 = vmatpush1.msra.mxu0 0.0
    %461 = vmatprep.subr.mxu0 0.0
    %462 = vmatpush1.msra.mxu0 0.0
    %463 = vmatprep.subr.mxu0 0.0
    %464 = vmatpush1.msra.mxu0 0.0
    %465 = vmatprep.subr.mxu0 0.0
    %466 = vmatpush1.msra.mxu0 0.0
    %467 = vmatprep.subr.mxu0 0.0
    %468 = vmatpush1.msra.mxu0 0.0
    %469 = vmatprep.subr.mxu0 0.0
    %470 = vmatpush1.msra.mxu0 0.0
    %471 = vmatprep.subr.mxu0 0.0
    %472 = vmatpush1.msra.mxu0 0.0
    %473 = vmatprep.subr.mxu0 0.0
    %474 = vmatpush1.msra.mxu0 0.0
    %475 = vmatprep.subr.mxu0 0.0
    %476 = vmatpush1.msra.mxu0 0.0
    %477 = vmatprep.subr.mxu0 0.0
    %478 = vmatpush1.msra.mxu0 %v452
    %479 = vmatprep.subr.mxu0 0.0
    %480 = vmatpush1.msra.mxu0 %v451
    %481 = vmatprep.subr.mxu0 0.0
    %482 = vmatpush1.msra.mxu0 %v450
    %483 = vmatprep.subr.mxu0 0.0
    %484 = vmatpush1.msra.mxu0 %v449
    %485 = vmatprep.subr.mxu0 0.0
    %486 = vmatpush2.msra.mxu0 0.0
    %487 = vmatprep.subr.mxu0 0.0
    %488 = vmatpush2.msra.mxu0 0.0
    %489 = vmatprep.subr.mxu0 0.0
    %490 = vmatpush2.msra.mxu0 0.0
    %491 = vmatprep.subr.mxu0 0.0
    %492 = vmatpush2.msra.mxu0 0.0
    %493 = vmatprep.subr.mxu0 0.0
    %494 = vmatpush2.msra.mxu0 0.0
    %495 = vmatprep.subr.mxu0 0.0
    %496 = vmatpush2.msra.mxu0 0.0
    %497 = vmatprep.subr.mxu0 0.0
    %498 = vmatpush2.msra.mxu0 0.0
    %499 = vmatprep.subr.mxu0 0.0
    %500 = vmatpush2.msra.mxu0 0.0
    %501 = vmatprep.subr.mxu0 0.0
    %502 = vmatpush2.msra.mxu0 0.0
    %503 = vmatprep.subr.mxu0 0.0
    %504 = vmatpush2.msra.mxu0 0.0
    %505 = vmatprep.subr.mxu0 0.0
    %506 = vmatpush2.msra.mxu0 0.0
    %507 = vmatprep.subr.mxu0 0.0
    %508 = vmatpush2.msra.mxu0 0.0
    %509 = vmatprep.subr.mxu0 0.0
    %510 = vmatpush2.msra.mxu0 0.0
    %511 = vmatprep.subr.mxu0 0.0
    %512 = vmatpush2.msra.mxu0 0.0
    %513 = vmatprep.subr.mxu0 0.0
    %514 = vmatpush2.msra.mxu0 0.0
    %515 = vmatprep.subr.mxu0 0.0
    %516 = vmatpush2.msra.mxu0 0.0
    %517 = vmatprep.mubr.f32.mxu0 0.0
    %518 = vmatmul.mubr.f32.gmra.mxu0 %v368
    %v519 = vpop.f32.mrf.mxu0
    %v520 = vadd.f32 0.0, %v519
    %v521 = vpop.f32.mrf.mxu0
    %522 = vmatprep.mubr.f32.mxu0 0.0
    %523 = vmatmul.mubr.f32.gmra.mxu0 %v371
    %v524 = vpop.f32.mrf.mxu0
    %v525 = vadd.f32 0.0, %v524
    %v526 = vpop.f32.mrf.mxu0
    %527 = vdwg.mxu0
    %s528 = scalar_lea.vmem %s3, 192
    %v529 = vld [vmem:[%s528] sm:$0xff]
    %v530 = vld [vmem:[%s528 + $0x8] sm:$0xff]
    %v531 = vld [vmem:[%s528 + $0x10] sm:$0xff]
    %v532 = vld [vmem:[%s528 + $0x18] sm:$0xff]
    %533 = vmatprep.subr.mxu0 0.0
    %534 = vmatpush1.msra.mxu0 0.0
    %535 = vmatprep.subr.mxu0 0.0
    %536 = vmatpush1.msra.mxu0 0.0
    %537 = vmatprep.subr.mxu0 0.0
    %538 = vmatpush1.msra.mxu0 0.0
    %539 = vmatprep.subr.mxu0 0.0
    %540 = vmatpush1.msra.mxu0 0.0
    %541 = vmatprep.subr.mxu0 0.0
    %542 = vmatpush1.msra.mxu0 0.0
    %543 = vmatprep.subr.mxu0 0.0
    %544 = vmatpush1.msra.mxu0 0.0
    %545 = vmatprep.subr.mxu0 0.0
    %546 = vmatpush1.msra.mxu0 0.0
    %547 = vmatprep.subr.mxu0 0.0
    %548 = vmatpush1.msra.mxu0 0.0
    %549 = vmatprep.subr.mxu0 0.0
    %550 = vmatpush1.msra.mxu0 0.0
    %551 = vmatprep.subr.mxu0 0.0
    %552 = vmatpush1.msra.mxu0 0.0
    %553 = vmatprep.subr.mxu0 0.0
    %554 = vmatpush1.msra.mxu0 0.0
    %555 = vmatprep.subr.mxu0 0.0
    %556 = vmatpush1.msra.mxu0 0.0
    %557 = vmatprep.subr.mxu0 0.0
    %558 = vmatpush1.msra.mxu0 %v532
    %559 = vmatprep.subr.mxu0 0.0
    %560 = vmatpush1.msra.mxu0 %v531
    %561 = vmatprep.subr.mxu0 0.0
    %562 = vmatpush1.msra.mxu0 %v530
    %563 = vmatprep.subr.mxu0 0.0
    %564 = vmatpush1.msra.mxu0 %v529
    %565 = vmatprep.subr.mxu0 0.0
    %566 = vmatpush2.msra.mxu0 0.0
    %567 = vmatprep.subr.mxu0 0.0
    %568 = vmatpush2.msra.mxu0 0.0
    %569 = vmatprep.subr.mxu0 0.0
    %570 = vmatpush2.msra.mxu0 0.0
    %571 = vmatprep.subr.mxu0 0.0
    %572 = vmatpush2.msra.mxu0 0.0
    %573 = vmatprep.subr.mxu0 0.0
    %574 = vmatpush2.msra.mxu0 0.0
    %575 = vmatprep.subr.mxu0 0.0
    %576 = vmatpush2.msra.mxu0 0.0
    %577 = vmatprep.subr.mxu0 0.0
    %578 = vmatpush2.msra.mxu0 0.0
    %579 = vmatprep.subr.mxu0 0.0
    %580 = vmatpush2.msra.mxu0 0.0
    %581 = vmatprep.subr.mxu0 0.0
    %582 = vmatpush2.msra.mxu0 0.0
    %583 = vmatprep.subr.mxu0 0.0
    %584 = vmatpush2.msra.mxu0 0.0
    %585 = vmatprep.subr.mxu0 0.0
    %586 = vmatpush2.msra.mxu0 0.0
    %587 = vmatprep.subr.mxu0 0.0
    %588 = vmatpush2.msra.mxu0 0.0
    %589 = vmatprep.subr.mxu0 0.0
    %590 = vmatpush2.msra.mxu0 0.0
    %591 = vmatprep.subr.mxu0 0.0
    %592 = vmatpush2.msra.mxu0 0.0
    %593 = vmatprep.subr.mxu0 0.0
    %594 = vmatpush2.msra.mxu0 0.0
    %595 = vmatprep.subr.mxu0 0.0
    %596 = vmatpush2.msra.mxu0 0.0
    %597 = vmatprep.mubr.f32.mxu0 0.0
    %598 = vmatmul.mubr.f32.gmra.mxu0 %v368
    %v599 = vpop.f32.mrf.mxu0
    %v600 = vadd.f32 0.0, %v599
    %v601 = vpop.f32.mrf.mxu0
    %602 = vmatprep.mubr.f32.mxu0 0.0
    %603 = vmatmul.mubr.f32.gmra.mxu0 %v371
    %v604 = vpop.f32.mrf.mxu0
    %v605 = vadd.f32 0.0, %v604
    %v606 = vpop.f32.mrf.mxu0
    %607 = vdwg.mxu0
    %s608 = scalar_lea.vmem %s3, 224
    %v609 = vld [vmem:[%s608] sm:$0xff]
    %v610 = vld [vmem:[%s608 + $0x8] sm:$0xff]
    %v611 = vld [vmem:[%s608 + $0x10] sm:$0xff]
    %v612 = vld [vmem:[%s608 + $0x18] sm:$0xff]
    %613 = vmatprep.subr.mxu0 0.0
    %614 = vmatpush1.msra.mxu0 0.0
    %615 = vmatprep.subr.mxu0 0.0
    %616 = vmatpush1.msra.mxu0 0.0
    %617 = vmatprep.subr.mxu0 0.0
    %618 = vmatpush1.msra.mxu0 0.0
    %619 = vmatprep.subr.mxu0 0.0
    %620 = vmatpush1.msra.mxu0 0.0
    %621 = vmatprep.subr.mxu0 0.0
    %622 = vmatpush1.msra.mxu0 0.0
    %623 = vmatprep.subr.mxu0 0.0
    %624 = vmatpush1.msra.mxu0 0.0
    %625 = vmatprep.subr.mxu0 0.0
    %626 = vmatpush1.msra.mxu0 0.0
    %627 = vmatprep.subr.mxu0 0.0
    %628 = vmatpush1.msra.mxu0 0.0
    %629 = vmatprep.subr.mxu0 0.0
    %630 = vmatpush1.msra.mxu0 0.0
    %631 = vmatprep.subr.mxu0 0.0
    %632 = vmatpush1.msra.mxu0 0.0
    %633 = vmatprep.subr.mxu0 0.0
    %634 = vmatpush1.msra.mxu0 0.0
    %635 = vmatprep.subr.mxu0 0.0
    %636 = vmatpush1.msra.mxu0 0.0
    %637 = vmatprep.subr.mxu0 0.0
    %638 = vmatpush1.msra.mxu0 %v612
    %639 = vmatprep.subr.mxu0 0.0
    %640 = vmatpush1.msra.mxu0 %v611
    %641 = vmatprep.subr.mxu0 0.0
    %642 = vmatpush1.msra.mxu0 %v610
    %643 = vmatprep.subr.mxu0 0.0
    %644 = vmatpush1.msra.mxu0 %v609
    %645 = vmatprep.subr.mxu0 0.0
    %646 = vmatpush2.msra.mxu0 0.0
    %647 = vmatprep.subr.mxu0 0.0
    %648 = vmatpush2.msra.mxu0 0.0
    %649 = vmatprep.subr.mxu0 0.0
    %650 = vmatpush2.msra.mxu0 0.0
    %651 = vmatprep.subr.mxu0 0.0
    %652 = vmatpush2.msra.mxu0 0.0
    %653 = vmatprep.subr.mxu0 0.0
    %654 = vmatpush2.msra.mxu0 0.0
    %655 = vmatprep.subr.mxu0 0.0
    %656 = vmatpush2.msra.mxu0 0.0
    %657 = vmatprep.subr.mxu0 0.0
    %658 = vmatpush2.msra.mxu0 0.0
    %659 = vmatprep.subr.mxu0 0.0
    %660 = vmatpush2.msra.mxu0 0.0
    %661 = vmatprep.subr.mxu0 0.0
    %662 = vmatpush2.msra.mxu0 0.0
    %663 = vmatprep.subr.mxu0 0.0
    %664 = vmatpush2.msra.mxu0 0.0
    %665 = vmatprep.subr.mxu0 0.0
    %666 = vmatpush2.msra.mxu0 0.0
    %667 = vmatprep.subr.mxu0 0.0
    %668 = vmatpush2.msra.mxu0 0.0
    %669 = vmatprep.subr.mxu0 0.0
    %670 = vmatpush2.msra.mxu0 0.0
    %671 = vmatprep.subr.mxu0 0.0
    %672 = vmatpush2.msra.mxu0 0.0
    %673 = vmatprep.subr.mxu0 0.0
    %674 = vmatpush2.msra.mxu0 0.0
    %675 = vmatprep.subr.mxu0 0.0
    %676 = vmatpush2.msra.mxu0 0.0
    %677 = vmatprep.mubr.f32.mxu0 0.0
    %678 = vmatmul.mubr.f32.gmra.mxu0 %v368
    %v679 = vpop.f32.mrf.mxu0
    %v680 = vadd.f32 0.0, %v679
    %v681 = vpop.f32.mrf.mxu0
    %682 = vmatprep.mubr.f32.mxu0 0.0
    %683 = vmatmul.mubr.f32.gmra.mxu0 %v371
    %v684 = vpop.f32.mrf.mxu0
    %v685 = vadd.f32 0.0, %v684
    %v686 = vpop.f32.mrf.mxu0
    %687 = vdwg.mxu0
    %s688 = scalar_lea.vmem %s3, 256
    %v689 = vld [vmem:[%s688] sm:$0xff]
    %v690 = vld [vmem:[%s688 + $0x8] sm:$0xff]
    %v691 = vld [vmem:[%s688 + $0x10] sm:$0xff]
    %v692 = vld [vmem:[%s688 + $0x18] sm:$0xff]
    %v694 = vsel %vm40, %v34, 0
    %v697 = vsel %vm40, %v35, 0
    %699 = vmatprep.subr.mxu0 0.0
    %700 = vmatpush1.msra.mxu0 0.0
    %701 = vmatprep.subr.mxu0 0.0
    %702 = vmatpush1.msra.mxu0 0.0
    %703 = vmatprep.subr.mxu0 0.0
    %704 = vmatpush1.msra.mxu0 0.0
    %705 = vmatprep.subr.mxu0 0.0
    %706 = vmatpush1.msra.mxu0 0.0
    %707 = vmatprep.subr.mxu0 0.0
    %708 = vmatpush1.msra.mxu0 0.0
    %709 = vmatprep.subr.mxu0 0.0
    %710 = vmatpush1.msra.mxu0 0.0
    %711 = vmatprep.subr.mxu0 0.0
    %712 = vmatpush1.msra.mxu0 0.0
    %713 = vmatprep.subr.mxu0 0.0
    %714 = vmatpush1.msra.mxu0 0.0
    %715 = vmatprep.subr.mxu0 0.0
    %716 = vmatpush1.msra.mxu0 0.0
    %717 = vmatprep.subr.mxu0 0.0
    %718 = vmatpush1.msra.mxu0 0.0
    %719 = vmatprep.subr.mxu0 0.0
    %720 = vmatpush1.msra.mxu0 0.0
    %721 = vmatprep.subr.mxu0 0.0
    %722 = vmatpush1.msra.mxu0 0.0
    %723 = vmatprep.subr.mxu0 0.0
    %724 = vmatpush1.msra.mxu0 %v692
    %725 = vmatprep.subr.mxu0 0.0
    %726 = vmatpush1.msra.mxu0 %v691
    %727 = vmatprep.subr.mxu0 0.0
    %728 = vmatpush1.msra.mxu0 %v690
    %729 = vmatprep.subr.mxu0 0.0
    %730 = vmatpush1.msra.mxu0 %v689
    %731 = vmatprep.subr.mxu0 0.0
    %732 = vmatpush2.msra.mxu0 0.0
    %733 = vmatprep.subr.mxu0 0.0
    %734 = vmatpush2.msra.mxu0 0.0
    %735 = vmatprep.subr.mxu0 0.0
    %736 = vmatpush2.msra.mxu0 0.0
    %737 = vmatprep.subr.mxu0 0.0
    %738 = vmatpush2.msra.mxu0 0.0
    %739 = vmatprep.subr.mxu0 0.0
    %740 = vmatpush2.msra.mxu0 0.0
    %741 = vmatprep.subr.mxu0 0.0
    %742 = vmatpush2.msra.mxu0 0.0
    %743 = vmatprep.subr.mxu0 0.0
    %744 = vmatpush2.msra.mxu0 0.0
    %745 = vmatprep.subr.mxu0 0.0
    %746 = vmatpush2.msra.mxu0 0.0
    %747 = vmatprep.subr.mxu0 0.0
    %748 = vmatpush2.msra.mxu0 0.0
    %749 = vmatprep.subr.mxu0 0.0
    %750 = vmatpush2.msra.mxu0 0.0
    %751 = vmatprep.subr.mxu0 0.0
    %752 = vmatpush2.msra.mxu0 0.0
    %753 = vmatprep.subr.mxu0 0.0
    %754 = vmatpush2.msra.mxu0 0.0
    %755 = vmatprep.subr.mxu0 0.0
    %756 = vmatpush2.msra.mxu0 0.0
    %757 = vmatprep.subr.mxu0 0.0
    %758 = vmatpush2.msra.mxu0 0.0
    %759 = vmatprep.subr.mxu0 0.0
    %760 = vmatpush2.msra.mxu0 0.0
    %761 = vmatprep.subr.mxu0 0.0
    %762 = vmatpush2.msra.mxu0 0.0
    %763 = vmatprep.mubr.f32.mxu0 0.0
    %764 = vmatmul.mubr.f32.gmra.mxu0 %v694
    %v765 = vpop.f32.mrf.mxu0
    %v766 = vadd.f32 0.0, %v765
    %v767 = vpop.f32.mrf.mxu0
    %768 = vmatprep.mubr.f32.mxu0 0.0
    %769 = vmatmul.mubr.f32.gmra.mxu0 %v697
    %v770 = vpop.f32.mrf.mxu0
    %v771 = vadd.f32 0.0, %v770
    %v772 = vpop.f32.mrf.mxu0
    %773 = vdwg.mxu0
    %s774 = scalar_lea.vmem %s3, 288
    %v775 = vld [vmem:[%s774] sm:$0xff]
    %v776 = vld [vmem:[%s774 + $0x8] sm:$0xff]
    %v777 = vld [vmem:[%s774 + $0x10] sm:$0xff]
    %v778 = vld [vmem:[%s774 + $0x18] sm:$0xff]
    %779 = vmatprep.subr.mxu0 0.0
    %780 = vmatpush1.msra.mxu0 0.0
    %781 = vmatprep.subr.mxu0 0.0
    %782 = vmatpush1.msra.mxu0 0.0
    %783 = vmatprep.subr.mxu0 0.0
    %784 = vmatpush1.msra.mxu0 0.0
    %785 = vmatprep.subr.mxu0 0.0
    %786 = vmatpush1.msra.mxu0 0.0
    %787 = vmatprep.subr.mxu0 0.0
    %788 = vmatpush1.msra.mxu0 0.0
    %789 = vmatprep.subr.mxu0 0.0
    %790 = vmatpush1.msra.mxu0 0.0
    %791 = vmatprep.subr.mxu0 0.0
    %792 = vmatpush1.msra.mxu0 0.0
    %793 = vmatprep.subr.mxu0 0.0
    %794 = vmatpush1.msra.mxu0 0.0
    %795 = vmatprep.subr.mxu0 0.0
    %796 = vmatpush1.msra.mxu0 0.0
    %797 = vmatprep.subr.mxu0 0.0
    %798 = vmatpush1.msra.mxu0 0.0
    %799 = vmatprep.subr.mxu0 0.0
    %800 = vmatpush1.msra.mxu0 0.0
    %801 = vmatprep.subr.mxu0 0.0
    %802 = vmatpush1.msra.mxu0 0.0
    %803 = vmatprep.subr.mxu0 0.0
    %804 = vmatpush1.msra.mxu0 %v778
    %805 = vmatprep.subr.mxu0 0.0
    %806 = vmatpush1.msra.mxu0 %v777
    %807 = vmatprep.subr.mxu0 0.0
    %808 = vmatpush1.msra.mxu0 %v776
    %809 = vmatprep.subr.mxu0 0.0
    %810 = vmatpush1.msra.mxu0 %v775
    %811 = vmatprep.subr.mxu0 0.0
    %812 = vmatpush2.msra.mxu0 0.0
    %813 = vmatprep.subr.mxu0 0.0
    %814 = vmatpush2.msra.mxu0 0.0
    %815 = vmatprep.subr.mxu0 0.0
    %816 = vmatpush2.msra.mxu0 0.0
    %817 = vmatprep.subr.mxu0 0.0
    %818 = vmatpush2.msra.mxu0 0.0
    %819 = vmatprep.subr.mxu0 0.0
    %820 = vmatpush2.msra.mxu0 0.0
    %821 = vmatprep.subr.mxu0 0.0
    %822 = vmatpush2.msra.mxu0 0.0
    %823 = vmatprep.subr.mxu0 0.0
    %824 = vmatpush2.msra.mxu0 0.0
    %825 = vmatprep.subr.mxu0 0.0
    %826 = vmatpush2.msra.mxu0 0.0
    %827 = vmatprep.subr.mxu0 0.0
    %828 = vmatpush2.msra.mxu0 0.0
    %829 = vmatprep.subr.mxu0 0.0
    %830 = vmatpush2.msra.mxu0 0.0
    %831 = vmatprep.subr.mxu0 0.0
    %832 = vmatpush2.msra.mxu0 0.0
    %833 = vmatprep.subr.mxu0 0.0
    %834 = vmatpush2.msra.mxu0 0.0
    %835 = vmatprep.subr.mxu0 0.0
    %836 = vmatpush2.msra.mxu0 0.0
    %837 = vmatprep.subr.mxu0 0.0
    %838 = vmatpush2.msra.mxu0 0.0
    %839 = vmatprep.subr.mxu0 0.0
    %840 = vmatpush2.msra.mxu0 0.0
    %841 = vmatprep.subr.mxu0 0.0
    %842 = vmatpush2.msra.mxu0 0.0
    %843 = vmatprep.mubr.f32.mxu0 0.0
    %844 = vmatmul.mubr.f32.gmra.mxu0 %v694
    %v845 = vpop.f32.mrf.mxu0
    %v846 = vadd.f32 0.0, %v845
    %v847 = vpop.f32.mrf.mxu0
    %848 = vmatprep.mubr.f32.mxu0 0.0
    %849 = vmatmul.mubr.f32.gmra.mxu0 %v697
    %v850 = vpop.f32.mrf.mxu0
    %v851 = vadd.f32 0.0, %v850
    %v852 = vpop.f32.mrf.mxu0
    %853 = vdwg.mxu0
    %s854 = scalar_lea.vmem %s3, 320
    %v855 = vld [vmem:[%s854] sm:$0xff]
    %v856 = vld [vmem:[%s854 + $0x8] sm:$0xff]
    %v857 = vld [vmem:[%s854 + $0x10] sm:$0xff]
    %v858 = vld [vmem:[%s854 + $0x18] sm:$0xff]
    %859 = vmatprep.subr.mxu0 0.0
    %860 = vmatpush1.msra.mxu0 0.0
    %861 = vmatprep.subr.mxu0 0.0
    %862 = vmatpush1.msra.mxu0 0.0
    %863 = vmatprep.subr.mxu0 0.0
    %864 = vmatpush1.msra.mxu0 0.0
    %865 = vmatprep.subr.mxu0 0.0
    %866 = vmatpush1.msra.mxu0 0.0
    %867 = vmatprep.subr.mxu0 0.0
    %868 = vmatpush1.msra.mxu0 0.0
    %869 = vmatprep.subr.mxu0 0.0
    %870 = vmatpush1.msra.mxu0 0.0
    %871 = vmatprep.subr.mxu0 0.0
    %872 = vmatpush1.msra.mxu0 0.0
    %873 = vmatprep.subr.mxu0 0.0
    %874 = vmatpush1.msra.mxu0 0.0
    %875 = vmatprep.subr.mxu0 0.0
    %876 = vmatpush1.msra.mxu0 0.0
    %877 = vmatprep.subr.mxu0 0.0
    %878 = vmatpush1.msra.mxu0 0.0
    %879 = vmatprep.subr.mxu0 0.0
    %880 = vmatpush1.msra.mxu0 0.0
    %881 = vmatprep.subr.mxu0 0.0
    %882 = vmatpush1.msra.mxu0 0.0
    %883 = vmatprep.subr.mxu0 0.0
    %884 = vmatpush1.msra.mxu0 %v858
    %885 = vmatprep.subr.mxu0 0.0
    %886 = vmatpush1.msra.mxu0 %v857
    %887 = vmatprep.subr.mxu0 0.0
    %888 = vmatpush1.msra.mxu0 %v856
    %889 = vmatprep.subr.mxu0 0.0
    %890 = vmatpush1.msra.mxu0 %v855
    %891 = vmatprep.subr.mxu0 0.0
    %892 = vmatpush2.msra.mxu0 0.0
    %893 = vmatprep.subr.mxu0 0.0
    %894 = vmatpush2.msra.mxu0 0.0
    %895 = vmatprep.subr.mxu0 0.0
    %896 = vmatpush2.msra.mxu0 0.0
    %897 = vmatprep.subr.mxu0 0.0
    %898 = vmatpush2.msra.mxu0 0.0
    %899 = vmatprep.subr.mxu0 0.0
    %900 = vmatpush2.msra.mxu0 0.0
    %901 = vmatprep.subr.mxu0 0.0
    %902 = vmatpush2.msra.mxu0 0.0
    %903 = vmatprep.subr.mxu0 0.0
    %904 = vmatpush2.msra.mxu0 0.0
    %905 = vmatprep.subr.mxu0 0.0
    %906 = vmatpush2.msra.mxu0 0.0
    %907 = vmatprep.subr.mxu0 0.0
    %908 = vmatpush2.msra.mxu0 0.0
    %909 = vmatprep.subr.mxu0 0.0
    %910 = vmatpush2.msra.mxu0 0.0
    %911 = vmatprep.subr.mxu0 0.0
    %912 = vmatpush2.msra.mxu0 0.0
    %913 = vmatprep.subr.mxu0 0.0
    %914 = vmatpush2.msra.mxu0 0.0
    %915 = vmatprep.subr.mxu0 0.0
    %916 = vmatpush2.msra.mxu0 0.0
    %917 = vmatprep.subr.mxu0 0.0
    %918 = vmatpush2.msra.mxu0 0.0
    %919 = vmatprep.subr.mxu0 0.0
    %920 = vmatpush2.msra.mxu0 0.0
    %921 = vmatprep.subr.mxu0 0.0
    %922 = vmatpush2.msra.mxu0 0.0
    %923 = vmatprep.mubr.f32.mxu0 0.0
    %924 = vmatmul.mubr.f32.gmra.mxu0 %v694
    %v925 = vpop.f32.mrf.mxu0
    %v926 = vadd.f32 0.0, %v925
    %v927 = vpop.f32.mrf.mxu0
    %928 = vmatprep.mubr.f32.mxu0 0.0
    %929 = vmatmul.mubr.f32.gmra.mxu0 %v697
    %v930 = vpop.f32.mrf.mxu0
    %v931 = vadd.f32 0.0, %v930
    %v932 = vpop.f32.mrf.mxu0
    %933 = vdwg.mxu0
    %s934 = scalar_lea.vmem %s3, 352
    %v935 = vld [vmem:[%s934] sm:$0xff]
    %v936 = vld [vmem:[%s934 + $0x8] sm:$0xff]
    %v937 = vld [vmem:[%s934 + $0x10] sm:$0xff]
    %v938 = vld [vmem:[%s934 + $0x18] sm:$0xff]
    %939 = vmatprep.subr.mxu0 0.0
    %940 = vmatpush1.msra.mxu0 0.0
    %941 = vmatprep.subr.mxu0 0.0
    %942 = vmatpush1.msra.mxu0 0.0
    %943 = vmatprep.subr.mxu0 0.0
    %944 = vmatpush1.msra.mxu0 0.0
    %945 = vmatprep.subr.mxu0 0.0
    %946 = vmatpush1.msra.mxu0 0.0
    %947 = vmatprep.subr.mxu0 0.0
    %948 = vmatpush1.msra.mxu0 0.0
    %949 = vmatprep.subr.mxu0 0.0
    %950 = vmatpush1.msra.mxu0 0.0
    %951 = vmatprep.subr.mxu0 0.0
    %952 = vmatpush1.msra.mxu0 0.0
    %953 = vmatprep.subr.mxu0 0.0
    %954 = vmatpush1.msra.mxu0 0.0
    %955 = vmatprep.subr.mxu0 0.0
    %956 = vmatpush1.msra.mxu0 0.0
    %957 = vmatprep.subr.mxu0 0.0
    %958 = vmatpush1.msra.mxu0 0.0
    %959 = vmatprep.subr.mxu0 0.0
    %960 = vmatpush1.msra.mxu0 0.0
    %961 = vmatprep.subr.mxu0 0.0
    %962 = vmatpush1.msra.mxu0 0.0
    %963 = vmatprep.subr.mxu0 0.0
    %964 = vmatpush1.msra.mxu0 %v938
    %965 = vmatprep.subr.mxu0 0.0
    %966 = vmatpush1.msra.mxu0 %v937
    %967 = vmatprep.subr.mxu0 0.0
    %968 = vmatpush1.msra.mxu0 %v936
    %969 = vmatprep.subr.mxu0 0.0
    %970 = vmatpush1.msra.mxu0 %v935
    %971 = vmatprep.subr.mxu0 0.0
    %972 = vmatpush2.msra.mxu0 0.0
    %973 = vmatprep.subr.mxu0 0.0
    %974 = vmatpush2.msra.mxu0 0.0
    %975 = vmatprep.subr.mxu0 0.0
    %976 = vmatpush2.msra.mxu0 0.0
    %977 = vmatprep.subr.mxu0 0.0
    %978 = vmatpush2.msra.mxu0 0.0
    %979 = vmatprep.subr.mxu0 0.0
    %980 = vmatpush2.msra.mxu0 0.0
    %981 = vmatprep.subr.mxu0 0.0
    %982 = vmatpush2.msra.mxu0 0.0
    %983 = vmatprep.subr.mxu0 0.0
    %984 = vmatpush2.msra.mxu0 0.0
    %985 = vmatprep.subr.mxu0 0.0
    %986 = vmatpush2.msra.mxu0 0.0
    %987 = vmatprep.subr.mxu0 0.0
    %988 = vmatpush2.msra.mxu0 0.0
    %989 = vmatprep.subr.mxu0 0.0
    %990 = vmatpush2.msra.mxu0 0.0
    %991 = vmatprep.subr.mxu0 0.0
    %992 = vmatpush2.msra.mxu0 0.0
    %993 = vmatprep.subr.mxu0 0.0
    %994 = vmatpush2.msra.mxu0 0.0
    %995 = vmatprep.subr.mxu0 0.0
    %996 = vmatpush2.msra.mxu0 0.0
    %997 = vmatprep.subr.mxu0 0.0
    %998 = vmatpush2.msra.mxu0 0.0
    %999 = vmatprep.subr.mxu0 0.0
    %1000 = vmatpush2.msra.mxu0 0.0
    %1001 = vmatprep.subr.mxu0 0.0
    %1002 = vmatpush2.msra.mxu0 0.0
    %1003 = vmatprep.mubr.f32.mxu0 0.0
    %1004 = vmatmul.mubr.f32.gmra.mxu0 %v694
    %v1005 = vpop.f32.mrf.mxu0
    %v1006 = vadd.f32 0.0, %v1005
    %v1007 = vpop.f32.mrf.mxu0
    %1008 = vmatprep.mubr.f32.mxu0 0.0
    %1009 = vmatmul.mubr.f32.gmra.mxu0 %v697
    %v1010 = vpop.f32.mrf.mxu0
    %v1011 = vadd.f32 0.0, %v1010
    %v1012 = vpop.f32.mrf.mxu0
    %1013 = vdwg.mxu0
    %vm1014 = vcmask 64512
    %v1016 = vsel %vm1014, %v766, 0
    %v1019 = vsel %vm1014, %v114, 0
    %1021 = vmatprep.subr.mxu0 0.0
    %1022 = vmatpush1.xpose.msra.mxu0 0.0
    %1023 = vmatprep.subr.mxu0 0.0
    %1024 = vmatpush1.xpose.msra.mxu0 0.0
    %1025 = vmatprep.subr.mxu0 0.0
    %1026 = vmatpush1.xpose.msra.mxu0 0.0
    %1027 = vmatprep.subr.mxu0 0.0
    %1028 = vmatpush1.xpose.msra.mxu0 0.0
    %1029 = vmatprep.subr.mxu0 0.0
    %1030 = vmatpush1.xpose.msra.mxu0 0.0
    %1031 = vmatprep.subr.mxu0 0.0
    %1032 = vmatpush1.xpose.msra.mxu0 0.0
    %1033 = vmatprep.subr.mxu0 0.0
    %1034 = vmatpush1.xpose.msra.mxu0 0.0
    %1035 = vmatprep.subr.mxu0 0.0
    %1036 = vmatpush1.xpose.msra.mxu0 0.0
    %1037 = vmatprep.subr.mxu0 0.0
    %1038 = vmatpush1.xpose.msra.mxu0 0.0
    %1039 = vmatprep.subr.mxu0 0.0
    %1040 = vmatpush1.xpose.msra.mxu0 0.0
    %1041 = vmatprep.subr.mxu0 0.0
    %1042 = vmatpush1.xpose.msra.mxu0 0.0
    %1043 = vmatprep.subr.mxu0 0.0
    %1044 = vmatpush1.xpose.msra.mxu0 0.0
    %1045 = vmatprep.subr.mxu0 0.0
    %1046 = vmatpush1.xpose.msra.mxu0 0.0
    %1047 = vmatprep.subr.mxu0 0.0
    %1048 = vmatpush1.xpose.msra.mxu0 0.0
    %1049 = vmatprep.subr.mxu0 0.0
    %1050 = vmatpush1.xpose.msra.mxu0 0.0
    %1051 = vmatprep.subr.mxu0 0.0
    %1052 = vmatpush1.xpose.msra.mxu0 %v1019
    %1053 = vmatprep.subr.mxu0 0.0
    %1054 = vmatpush2.xpose.msra.mxu0 0.0
    %1055 = vmatprep.subr.mxu0 0.0
    %1056 = vmatpush2.xpose.msra.mxu0 0.0
    %1057 = vmatprep.subr.mxu0 0.0
    %1058 = vmatpush2.xpose.msra.mxu0 0.0
    %1059 = vmatprep.subr.mxu0 0.0
    %1060 = vmatpush2.xpose.msra.mxu0 0.0
    %1061 = vmatprep.subr.mxu0 0.0
    %1062 = vmatpush2.xpose.msra.mxu0 0.0
    %1063 = vmatprep.subr.mxu0 0.0
    %1064 = vmatpush2.xpose.msra.mxu0 0.0
    %1065 = vmatprep.subr.mxu0 0.0
    %1066 = vmatpush2.xpose.msra.mxu0 0.0
    %1067 = vmatprep.subr.mxu0 0.0
    %1068 = vmatpush2.xpose.msra.mxu0 0.0
    %1069 = vmatprep.subr.mxu0 0.0
    %1070 = vmatpush2.xpose.msra.mxu0 0.0
    %1071 = vmatprep.subr.mxu0 0.0
    %1072 = vmatpush2.xpose.msra.mxu0 0.0
    %1073 = vmatprep.subr.mxu0 0.0
    %1074 = vmatpush2.xpose.msra.mxu0 0.0
    %1075 = vmatprep.subr.mxu0 0.0
    %1076 = vmatpush2.xpose.msra.mxu0 0.0
    %1077 = vmatprep.subr.mxu0 0.0
    %1078 = vmatpush2.xpose.msra.mxu0 0.0
    %1079 = vmatprep.subr.mxu0 0.0
    %1080 = vmatpush2.xpose.msra.mxu0 0.0
    %1081 = vmatprep.subr.mxu0 0.0
    %1082 = vmatpush2.xpose.msra.mxu0 0.0
    %1083 = vmatprep.subr.mxu0 0.0
    %1084 = vmatpush2.xpose.msra.mxu0 0.0
    %1085 = vmatprep.mubr.f32.mxu0 0.0
    %1086 = vmatmul.mubr.f32.gmra.mxu0 %v1016
    %v1087 = vpop.f32.mrf.mxu0
    %v1088 = vadd.f32 0.0, %v1087
    %v1089 = vpop.f32.mrf.mxu0
    %1090 = vdwg.mxu0
    %v1092 = vsel %vm1014, %v771, 0
    %v1095 = vsel %vm1014, %v119, 0
    %1097 = vmatprep.subr.mxu0 0.0
    %1098 = vmatpush1.xpose.msra.mxu0 0.0
    %1099 = vmatprep.subr.mxu0 0.0
    %1100 = vmatpush1.xpose.msra.mxu0 0.0
    %1101 = vmatprep.subr.mxu0 0.0
    %1102 = vmatpush1.xpose.msra.mxu0 0.0
    %1103 = vmatprep.subr.mxu0 0.0
    %1104 = vmatpush1.xpose.msra.mxu0 0.0
    %1105 = vmatprep.subr.mxu0 0.0
    %1106 = vmatpush1.xpose.msra.mxu0 0.0
    %1107 = vmatprep.subr.mxu0 0.0
    %1108 = vmatpush1.xpose.msra.mxu0 0.0
    %1109 = vmatprep.subr.mxu0 0.0
    %1110 = vmatpush1.xpose.msra.mxu0 0.0
    %1111 = vmatprep.subr.mxu0 0.0
    %1112 = vmatpush1.xpose.msra.mxu0 0.0
    %1113 = vmatprep.subr.mxu0 0.0
    %1114 = vmatpush1.xpose.msra.mxu0 0.0
    %1115 = vmatprep.subr.mxu0 0.0
    %1116 = vmatpush1.xpose.msra.mxu0 0.0
    %1117 = vmatprep.subr.mxu0 0.0
    %1118 = vmatpush1.xpose.msra.mxu0 0.0
    %1119 = vmatprep.subr.mxu0 0.0
    %1120 = vmatpush1.xpose.msra.mxu0 0.0
    %1121 = vmatprep.subr.mxu0 0.0
    %1122 = vmatpush1.xpose.msra.mxu0 0.0
    %1123 = vmatprep.subr.mxu0 0.0
    %1124 = vmatpush1.xpose.msra.mxu0 0.0
    %1125 = vmatprep.subr.mxu0 0.0
    %1126 = vmatpush1.xpose.msra.mxu0 0.0
    %1127 = vmatprep.subr.mxu0 0.0
    %1128 = vmatpush1.xpose.msra.mxu0 %v1095
    %1129 = vmatprep.subr.mxu0 0.0
    %1130 = vmatpush2.xpose.msra.mxu0 0.0
    %1131 = vmatprep.subr.mxu0 0.0
    %1132 = vmatpush2.xpose.msra.mxu0 0.0
    %1133 = vmatprep.subr.mxu0 0.0
    %1134 = vmatpush2.xpose.msra.mxu0 0.0
    %1135 = vmatprep.subr.mxu0 0.0
    %1136 = vmatpush2.xpose.msra.mxu0 0.0
    %1137 = vmatprep.subr.mxu0 0.0
    %1138 = vmatpush2.xpose.msra.mxu0 0.0
    %1139 = vmatprep.subr.mxu0 0.0
    %1140 = vmatpush2.xpose.msra.mxu0 0.0
    %1141 = vmatprep.subr.mxu0 0.0
    %1142 = vmatpush2.xpose.msra.mxu0 0.0
    %1143 = vmatprep.subr.mxu0 0.0
    %1144 = vmatpush2.xpose.msra.mxu0 0.0
    %1145 = vmatprep.subr.mxu0 0.0
    %1146 = vmatpush2.xpose.msra.mxu0 0.0
    %1147 = vmatprep.subr.mxu0 0.0
    %1148 = vmatpush2.xpose.msra.mxu0 0.0
    %1149 = vmatprep.subr.mxu0 0.0
    %1150 = vmatpush2.xpose.msra.mxu0 0.0
    %1151 = vmatprep.subr.mxu0 0.0
    %1152 = vmatpush2.xpose.msra.mxu0 0.0
    %1153 = vmatprep.subr.mxu0 0.0
    %1154 = vmatpush2.xpose.msra.mxu0 0.0
    %1155 = vmatprep.subr.mxu0 0.0
    %1156 = vmatpush2.xpose.msra.mxu0 0.0
    %1157 = vmatprep.subr.mxu0 0.0
    %1158 = vmatpush2.xpose.msra.mxu0 0.0
    %1159 = vmatprep.subr.mxu0 0.0
    %1160 = vmatpush2.xpose.msra.mxu0 0.0
    %1161 = vmatprep.mubr.f32.mxu0 0.0
    %1162 = vmatmul.mubr.f32.gmra.mxu0 %v1092
    %v1163 = vpop.f32.mrf.mxu0
    %v1164 = vadd.f32 0.0, %v1163
    %v1165 = vpop.f32.mrf.mxu0
    %1166 = vdwg.mxu0
    %v1168 = vsel %vm1014, %v846, 0
    %v1171 = vsel %vm1014, %v194, 0
    %1173 = vmatprep.subr.mxu0 0.0
    %1174 = vmatpush1.xpose.msra.mxu0 0.0
    %1175 = vmatprep.subr.mxu0 0.0
    %1176 = vmatpush1.xpose.msra.mxu0 0.0
    %1177 = vmatprep.subr.mxu0 0.0
    %1178 = vmatpush1.xpose.msra.mxu0 0.0
    %1179 = vmatprep.subr.mxu0 0.0
    %1180 = vmatpush1.xpose.msra.mxu0 0.0
    %1181 = vmatprep.subr.mxu0 0.0
    %1182 = vmatpush1.xpose.msra.mxu0 0.0
    %1183 = vmatprep.subr.mxu0 0.0
    %1184 = vmatpush1.xpose.msra.mxu0 0.0
    %1185 = vmatprep.subr.mxu0 0.0
    %1186 = vmatpush1.xpose.msra.mxu0 0.0
    %1187 = vmatprep.subr.mxu0 0.0
    %1188 = vmatpush1.xpose.msra.mxu0 0.0
    %1189 = vmatprep.subr.mxu0 0.0
    %1190 = vmatpush1.xpose.msra.mxu0 0.0
    %1191 = vmatprep.subr.mxu0 0.0
    %1192 = vmatpush1.xpose.msra.mxu0 0.0
    %1193 = vmatprep.subr.mxu0 0.0
    %1194 = vmatpush1.xpose.msra.mxu0 0.0
    %1195 = vmatprep.subr.mxu0 0.0
    %1196 = vmatpush1.xpose.msra.mxu0 0.0
    %1197 = vmatprep.subr.mxu0 0.0
    %1198 = vmatpush1.xpose.msra.mxu0 0.0
    %1199 = vmatprep.subr.mxu0 0.0
    %1200 = vmatpush1.xpose.msra.mxu0 0.0
    %1201 = vmatprep.subr.mxu0 0.0
    %1202 = vmatpush1.xpose.msra.mxu0 0.0
    %1203 = vmatprep.subr.mxu0 0.0
    %1204 = vmatpush1.xpose.msra.mxu0 %v1171
    %1205 = vmatprep.subr.mxu0 0.0
    %1206 = vmatpush2.xpose.msra.mxu0 0.0
    %1207 = vmatprep.subr.mxu0 0.0
    %1208 = vmatpush2.xpose.msra.mxu0 0.0
    %1209 = vmatprep.subr.mxu0 0.0
    %1210 = vmatpush2.xpose.msra.mxu0 0.0
    %1211 = vmatprep.subr.mxu0 0.0
    %1212 = vmatpush2.xpose.msra.mxu0 0.0
    %1213 = vmatprep.subr.mxu0 0.0
    %1214 = vmatpush2.xpose.msra.mxu0 0.0
    %1215 = vmatprep.subr.mxu0 0.0
    %1216 = vmatpush2.xpose.msra.mxu0 0.0
    %1217 = vmatprep.subr.mxu0 0.0
    %1218 = vmatpush2.xpose.msra.mxu0 0.0
    %1219 = vmatprep.subr.mxu0 0.0
    %1220 = vmatpush2.xpose.msra.mxu0 0.0
    %1221 = vmatprep.subr.mxu0 0.0
    %1222 = vmatpush2.xpose.msra.mxu0 0.0
    %1223 = vmatprep.subr.mxu0 0.0
    %1224 = vmatpush2.xpose.msra.mxu0 0.0
    %1225 = vmatprep.subr.mxu0 0.0
    %1226 = vmatpush2.xpose.msra.mxu0 0.0
    %1227 = vmatprep.subr.mxu0 0.0
    %1228 = vmatpush2.xpose.msra.mxu0 0.0
    %1229 = vmatprep.subr.mxu0 0.0
    %1230 = vmatpush2.xpose.msra.mxu0 0.0
    %1231 = vmatprep.subr.mxu0 0.0
    %1232 = vmatpush2.xpose.msra.mxu0 0.0
    %1233 = vmatprep.subr.mxu0 0.0
    %1234 = vmatpush2.xpose.msra.mxu0 0.0
    %1235 = vmatprep.subr.mxu0 0.0
    %1236 = vmatpush2.xpose.msra.mxu0 0.0
    %1237 = vmatprep.mubr.f32.mxu0 0.0
    %1238 = vmatmul.mubr.f32.gmra.mxu0 %v1168
    %v1239 = vpop.f32.mrf.mxu0
    %v1240 = vadd.f32 0.0, %v1239
    %v1241 = vpop.f32.mrf.mxu0
    %1242 = vdwg.mxu0
    %v1244 = vsel %vm1014, %v851, 0
    %v1247 = vsel %vm1014, %v199, 0
    %1249 = vmatprep.subr.mxu0 0.0
    %1250 = vmatpush1.xpose.msra.mxu0 0.0
    %1251 = vmatprep.subr.mxu0 0.0
    %1252 = vmatpush1.xpose.msra.mxu0 0.0
    %1253 = vmatprep.subr.mxu0 0.0
    %1254 = vmatpush1.xpose.msra.mxu0 0.0
    %1255 = vmatprep.subr.mxu0 0.0
    %1256 = vmatpush1.xpose.msra.mxu0 0.0
    %1257 = vmatprep.subr.mxu0 0.0
    %1258 = vmatpush1.xpose.msra.mxu0 0.0
    %1259 = vmatprep.subr.mxu0 0.0
    %1260 = vmatpush1.xpose.msra.mxu0 0.0
    %1261 = vmatprep.subr.mxu0 0.0
    %1262 = vmatpush1.xpose.msra.mxu0 0.0
    %1263 = vmatprep.subr.mxu0 0.0
    %1264 = vmatpush1.xpose.msra.mxu0 0.0
    %1265 = vmatprep.subr.mxu0 0.0
    %1266 = vmatpush1.xpose.msra.mxu0 0.0
    %1267 = vmatprep.subr.mxu0 0.0
    %1268 = vmatpush1.xpose.msra.mxu0 0.0
    %1269 = vmatprep.subr.mxu0 0.0
    %1270 = vmatpush1.xpose.msra.mxu0 0.0
    %1271 = vmatprep.subr.mxu0 0.0
    %1272 = vmatpush1.xpose.msra.mxu0 0.0
    %1273 = vmatprep.subr.mxu0 0.0
    %1274 = vmatpush1.xpose.msra.mxu0 0.0
    %1275 = vmatprep.subr.mxu0 0.0
    %1276 = vmatpush1.xpose.msra.mxu0 0.0
    %1277 = vmatprep.subr.mxu0 0.0
    %1278 = vmatpush1.xpose.msra.mxu0 0.0
    %1279 = vmatprep.subr.mxu0 0.0
    %1280 = vmatpush1.xpose.msra.mxu0 %v1247
    %1281 = vmatprep.subr.mxu0 0.0
    %1282 = vmatpush2.xpose.msra.mxu0 0.0
    %1283 = vmatprep.subr.mxu0 0.0
    %1284 = vmatpush2.xpose.msra.mxu0 0.0
    %1285 = vmatprep.subr.mxu0 0.0
    %1286 = vmatpush2.xpose.msra.mxu0 0.0
    %1287 = vmatprep.subr.mxu0 0.0
    %1288 = vmatpush2.xpose.msra.mxu0 0.0
    %1289 = vmatprep.subr.mxu0 0.0
    %1290 = vmatpush2.xpose.msra.mxu0 0.0
    %1291 = vmatprep.subr.mxu0 0.0
    %1292 = vmatpush2.xpose.msra.mxu0 0.0
    %1293 = vmatprep.subr.mxu0 0.0
    %1294 = vmatpush2.xpose.msra.mxu0 0.0
    %1295 = vmatprep.subr.mxu0 0.0
    %1296 = vmatpush2.xpose.msra.mxu0 0.0
    %1297 = vmatprep.subr.mxu0 0.0
    %1298 = vmatpush2.xpose.msra.mxu0 0.0
    %1299 = vmatprep.subr.mxu0 0.0
    %1300 = vmatpush2.xpose.msra.mxu0 0.0
    %1301 = vmatprep.subr.mxu0 0.0
    %1302 = vmatpush2.xpose.msra.mxu0 0.0
    %1303 = vmatprep.subr.mxu0 0.0
    %1304 = vmatpush2.xpose.msra.mxu0 0.0
    %1305 = vmatprep.subr.mxu0 0.0
    %1306 = vmatpush2.xpose.msra.mxu0 0.0
    %1307 = vmatprep.subr.mxu0 0.0
    %1308 = vmatpush2.xpose.msra.mxu0 0.0
    %1309 = vmatprep.subr.mxu0 0.0
    %1310 = vmatpush2.xpose.msra.mxu0 0.0
    %1311 = vmatprep.subr.mxu0 0.0
    %1312 = vmatpush2.xpose.msra.mxu0 0.0
    %1313 = vmatprep.mubr.f32.mxu0 0.0
    %1314 = vmatmul.mubr.f32.gmra.mxu0 %v1244
    %v1315 = vpop.f32.mrf.mxu0
    %v1316 = vadd.f32 0.0, %v1315
    %v1317 = vpop.f32.mrf.mxu0
    %1318 = vdwg.mxu0
    %v1320 = vsel %vm1014, %v926, 0
    %v1323 = vsel %vm1014, %v274, 0
    %1325 = vmatprep.subr.mxu0 0.0
    %1326 = vmatpush1.xpose.msra.mxu0 0.0
    %1327 = vmatprep.subr.mxu0 0.0
    %1328 = vmatpush1.xpose.msra.mxu0 0.0
    %1329 = vmatprep.subr.mxu0 0.0
    %1330 = vmatpush1.xpose.msra.mxu0 0.0
    %1331 = vmatprep.subr.mxu0 0.0
    %1332 = vmatpush1.xpose.msra.mxu0 0.0
    %1333 = vmatprep.subr.mxu0 0.0
    %1334 = vmatpush1.xpose.msra.mxu0 0.0
    %1335 = vmatprep.subr.mxu0 0.0
    %1336 = vmatpush1.xpose.msra.mxu0 0.0
    %1337 = vmatprep.subr.mxu0 0.0
    %1338 = vmatpush1.xpose.msra.mxu0 0.0
    %1339 = vmatprep.subr.mxu0 0.0
    %1340 = vmatpush1.xpose.msra.mxu0 0.0
    %1341 = vmatprep.subr.mxu0 0.0
    %1342 = vmatpush1.xpose.msra.mxu0 0.0
    %1343 = vmatprep.subr.mxu0 0.0
    %1344 = vmatpush1.xpose.msra.mxu0 0.0
    %1345 = vmatprep.subr.mxu0 0.0
    %1346 = vmatpush1.xpose.msra.mxu0 0.0
    %1347 = vmatprep.subr.mxu0 0.0
    %1348 = vmatpush1.xpose.msra.mxu0 0.0
    %1349 = vmatprep.subr.mxu0 0.0
    %1350 = vmatpush1.xpose.msra.mxu0 0.0
    %1351 = vmatprep.subr.mxu0 0.0
    %1352 = vmatpush1.xpose.msra.mxu0 0.0
    %1353 = vmatprep.subr.mxu0 0.0
    %1354 = vmatpush1.xpose.msra.mxu0 0.0
    %1355 = vmatprep.subr.mxu0 0.0
    %1356 = vmatpush1.xpose.msra.mxu0 %v1323
    %1357 = vmatprep.subr.mxu0 0.0
    %1358 = vmatpush2.xpose.msra.mxu0 0.0
    %1359 = vmatprep.subr.mxu0 0.0
    %1360 = vmatpush2.xpose.msra.mxu0 0.0
    %1361 = vmatprep.subr.mxu0 0.0
    %1362 = vmatpush2.xpose.msra.mxu0 0.0
    %1363 = vmatprep.subr.mxu0 0.0
    %1364 = vmatpush2.xpose.msra.mxu0 0.0
    %1365 = vmatprep.subr.mxu0 0.0
    %1366 = vmatpush2.xpose.msra.mxu0 0.0
    %1367 = vmatprep.subr.mxu0 0.0
    %1368 = vmatpush2.xpose.msra.mxu0 0.0
    %1369 = vmatprep.subr.mxu0 0.0
    %1370 = vmatpush2.xpose.msra.mxu0 0.0
    %1371 = vmatprep.subr.mxu0 0.0
    %1372 = vmatpush2.xpose.msra.mxu0 0.0
    %1373 = vmatprep.subr.mxu0 0.0
    %1374 = vmatpush2.xpose.msra.mxu0 0.0
    %1375 = vmatprep.subr.mxu0 0.0
    %1376 = vmatpush2.xpose.msra.mxu0 0.0
    %1377 = vmatprep.subr.mxu0 0.0
    %1378 = vmatpush2.xpose.msra.mxu0 0.0
    %1379 = vmatprep.subr.mxu0 0.0
    %1380 = vmatpush2.xpose.msra.mxu0 0.0
    %1381 = vmatprep.subr.mxu0 0.0
    %1382 = vmatpush2.xpose.msra.mxu0 0.0
    %1383 = vmatprep.subr.mxu0 0.0
    %1384 = vmatpush2.xpose.msra.mxu0 0.0
    %1385 = vmatprep.subr.mxu0 0.0
    %1386 = vmatpush2.xpose.msra.mxu0 0.0
    %1387 = vmatprep.subr.mxu0 0.0
    %1388 = vmatpush2.xpose.msra.mxu0 0.0
    %1389 = vmatprep.mubr.f32.mxu0 0.0
    %1390 = vmatmul.mubr.f32.gmra.mxu0 %v1320
    %v1391 = vpop.f32.mrf.mxu0
    %v1392 = vadd.f32 0.0, %v1391
    %v1393 = vpop.f32.mrf.mxu0
    %1394 = vdwg.mxu0
    %v1396 = vsel %vm1014, %v931, 0
    %v1399 = vsel %vm1014, %v279, 0
    %1401 = vmatprep.subr.mxu0 0.0
    %1402 = vmatpush1.xpose.msra.mxu0 0.0
    %1403 = vmatprep.subr.mxu0 0.0
    %1404 = vmatpush1.xpose.msra.mxu0 0.0
    %1405 = vmatprep.subr.mxu0 0.0
    %1406 = vmatpush1.xpose.msra.mxu0 0.0
    %1407 = vmatprep.subr.mxu0 0.0
    %1408 = vmatpush1.xpose.msra.mxu0 0.0
    %1409 = vmatprep.subr.mxu0 0.0
    %1410 = vmatpush1.xpose.msra.mxu0 0.0
    %1411 = vmatprep.subr.mxu0 0.0
    %1412 = vmatpush1.xpose.msra.mxu0 0.0
    %1413 = vmatprep.subr.mxu0 0.0
    %1414 = vmatpush1.xpose.msra.mxu0 0.0
    %1415 = vmatprep.subr.mxu0 0.0
    %1416 = vmatpush1.xpose.msra.mxu0 0.0
    %1417 = vmatprep.subr.mxu0 0.0
    %1418 = vmatpush1.xpose.msra.mxu0 0.0
    %1419 = vmatprep.subr.mxu0 0.0
    %1420 = vmatpush1.xpose.msra.mxu0 0.0
    %1421 = vmatprep.subr.mxu0 0.0
    %1422 = vmatpush1.xpose.msra.mxu0 0.0
    %1423 = vmatprep.subr.mxu0 0.0
    %1424 = vmatpush1.xpose.msra.mxu0 0.0
    %1425 = vmatprep.subr.mxu0 0.0
    %1426 = vmatpush1.xpose.msra.mxu0 0.0
    %1427 = vmatprep.subr.mxu0 0.0
    %1428 = vmatpush1.xpose.msra.mxu0 0.0
    %1429 = vmatprep.subr.mxu0 0.0
    %1430 = vmatpush1.xpose.msra.mxu0 0.0
    %1431 = vmatprep.subr.mxu0 0.0
    %1432 = vmatpush1.xpose.msra.mxu0 %v1399
    %1433 = vmatprep.subr.mxu0 0.0
    %1434 = vmatpush2.xpose.msra.mxu0 0.0
    %1435 = vmatprep.subr.mxu0 0.0
    %1436 = vmatpush2.xpose.msra.mxu0 0.0
    %1437 = vmatprep.subr.mxu0 0.0
    %1438 = vmatpush2.xpose.msra.mxu0 0.0
    %1439 = vmatprep.subr.mxu0 0.0
    %1440 = vmatpush2.xpose.msra.mxu0 0.0
    %1441 = vmatprep.subr.mxu0 0.0
    %1442 = vmatpush2.xpose.msra.mxu0 0.0
    %1443 = vmatprep.subr.mxu0 0.0
    %1444 = vmatpush2.xpose.msra.mxu0 0.0
    %1445 = vmatprep.subr.mxu0 0.0
    %1446 = vmatpush2.xpose.msra.mxu0 0.0
    %1447 = vmatprep.subr.mxu0 0.0
    %1448 = vmatpush2.xpose.msra.mxu0 0.0
    %1449 = vmatprep.subr.mxu0 0.0
    %1450 = vmatpush2.xpose.msra.mxu0 0.0
    %1451 = vmatprep.subr.mxu0 0.0
    %1452 = vmatpush2.xpose.msra.mxu0 0.0
    %1453 = vmatprep.subr.mxu0 0.0
    %1454 = vmatpush2.xpose.msra.mxu0 0.0
    %1455 = vmatprep.subr.mxu0 0.0
    %1456 = vmatpush2.xpose.msra.mxu0 0.0
    %1457 = vmatprep.subr.mxu0 0.0
    %1458 = vmatpush2.xpose.msra.mxu0 0.0
    %1459 = vmatprep.subr.mxu0 0.0
    %1460 = vmatpush2.xpose.msra.mxu0 0.0
    %1461 = vmatprep.subr.mxu0 0.0
    %1462 = vmatpush2.xpose.msra.mxu0 0.0
    %1463 = vmatprep.subr.mxu0 0.0
    %1464 = vmatpush2.xpose.msra.mxu0 0.0
    %1465 = vmatprep.mubr.f32.mxu0 0.0
    %1466 = vmatmul.mubr.f32.gmra.mxu0 %v1396
    %v1467 = vpop.f32.mrf.mxu0
    %v1468 = vadd.f32 0.0, %v1467
    %v1469 = vpop.f32.mrf.mxu0
    %1470 = vdwg.mxu0
    %v1472 = vsel %vm1014, %v1006, 0
    %v1475 = vsel %vm1014, %v354, 0
    %1477 = vmatprep.subr.mxu0 0.0
    %1478 = vmatpush1.xpose.msra.mxu0 0.0
    %1479 = vmatprep.subr.mxu0 0.0
    %1480 = vmatpush1.xpose.msra.mxu0 0.0
    %1481 = vmatprep.subr.mxu0 0.0
    %1482 = vmatpush1.xpose.msra.mxu0 0.0
    %1483 = vmatprep.subr.mxu0 0.0
    %1484 = vmatpush1.xpose.msra.mxu0 0.0
    %1485 = vmatprep.subr.mxu0 0.0
    %1486 = vmatpush1.xpose.msra.mxu0 0.0
    %1487 = vmatprep.subr.mxu0 0.0
    %1488 = vmatpush1.xpose.msra.mxu0 0.0
    %1489 = vmatprep.subr.mxu0 0.0
    %1490 = vmatpush1.xpose.msra.mxu0 0.0
    %1491 = vmatprep.subr.mxu0 0.0
    %1492 = vmatpush1.xpose.msra.mxu0 0.0
    %1493 = vmatprep.subr.mxu0 0.0
    %1494 = vmatpush1.xpose.msra.mxu0 0.0
    %1495 = vmatprep.subr.mxu0 0.0
    %1496 = vmatpush1.xpose.msra.mxu0 0.0
    %1497 = vmatprep.subr.mxu0 0.0
    %1498 = vmatpush1.xpose.msra.mxu0 0.0
    %1499 = vmatprep.subr.mxu0 0.0
    %1500 = vmatpush1.xpose.msra.mxu0 0.0
    %1501 = vmatprep.subr.mxu0 0.0
    %1502 = vmatpush1.xpose.msra.mxu0 0.0
    %1503 = vmatprep.subr.mxu0 0.0
    %1504 = vmatpush1.xpose.msra.mxu0 0.0
    %1505 = vmatprep.subr.mxu0 0.0
    %1506 = vmatpush1.xpose.msra.mxu0 0.0
    %1507 = vmatprep.subr.mxu0 0.0
    %1508 = vmatpush1.xpose.msra.mxu0 %v1475
    %1509 = vmatprep.subr.mxu0 0.0
    %1510 = vmatpush2.xpose.msra.mxu0 0.0
    %1511 = vmatprep.subr.mxu0 0.0
    %1512 = vmatpush2.xpose.msra.mxu0 0.0
    %1513 = vmatprep.subr.mxu0 0.0
    %1514 = vmatpush2.xpose.msra.mxu0 0.0
    %1515 = vmatprep.subr.mxu0 0.0
    %1516 = vmatpush2.xpose.msra.mxu0 0.0
    %1517 = vmatprep.subr.mxu0 0.0
    %1518 = vmatpush2.xpose.msra.mxu0 0.0
    %1519 = vmatprep.subr.mxu0 0.0
    %1520 = vmatpush2.xpose.msra.mxu0 0.0
    %1521 = vmatprep.subr.mxu0 0.0
    %1522 = vmatpush2.xpose.msra.mxu0 0.0
    %1523 = vmatprep.subr.mxu0 0.0
    %1524 = vmatpush2.xpose.msra.mxu0 0.0
    %1525 = vmatprep.subr.mxu0 0.0
    %1526 = vmatpush2.xpose.msra.mxu0 0.0
    %1527 = vmatprep.subr.mxu0 0.0
    %1528 = vmatpush2.xpose.msra.mxu0 0.0
    %1529 = vmatprep.subr.mxu0 0.0
    %1530 = vmatpush2.xpose.msra.mxu0 0.0
    %1531 = vmatprep.subr.mxu0 0.0
    %1532 = vmatpush2.xpose.msra.mxu0 0.0
    %1533 = vmatprep.subr.mxu0 0.0
    %1534 = vmatpush2.xpose.msra.mxu0 0.0
    %1535 = vmatprep.subr.mxu0 0.0
    %1536 = vmatpush2.xpose.msra.mxu0 0.0
    %1537 = vmatprep.subr.mxu0 0.0
    %1538 = vmatpush2.xpose.msra.mxu0 0.0
    %1539 = vmatprep.subr.mxu0 0.0
    %1540 = vmatpush2.xpose.msra.mxu0 0.0
    %1541 = vmatprep.mubr.f32.mxu0 0.0
    %1542 = vmatmul.mubr.f32.gmra.mxu0 %v1472
    %v1543 = vpop.f32.mrf.mxu0
    %v1544 = vadd.f32 0.0, %v1543
    %v1545 = vpop.f32.mrf.mxu0
    %1546 = vdwg.mxu0
    %v1548 = vsel %vm1014, %v1011, 0
    %v1551 = vsel %vm1014, %v359, 0
    %1553 = vmatprep.subr.mxu0 0.0
    %1554 = vmatpush1.xpose.msra.mxu0 0.0
    %1555 = vmatprep.subr.mxu0 0.0
    %1556 = vmatpush1.xpose.msra.mxu0 0.0
    %1557 = vmatprep.subr.mxu0 0.0
    %1558 = vmatpush1.xpose.msra.mxu0 0.0
    %1559 = vmatprep.subr.mxu0 0.0
    %1560 = vmatpush1.xpose.msra.mxu0 0.0
    %1561 = vmatprep.subr.mxu0 0.0
    %1562 = vmatpush1.xpose.msra.mxu0 0.0
    %1563 = vmatprep.subr.mxu0 0.0
    %1564 = vmatpush1.xpose.msra.mxu0 0.0
    %1565 = vmatprep.subr.mxu0 0.0
    %1566 = vmatpush1.xpose.msra.mxu0 0.0
    %1567 = vmatprep.subr.mxu0 0.0
    %1568 = vmatpush1.xpose.msra.mxu0 0.0
    %1569 = vmatprep.subr.mxu0 0.0
    %1570 = vmatpush1.xpose.msra.mxu0 0.0
    %1571 = vmatprep.subr.mxu0 0.0
    %1572 = vmatpush1.xpose.msra.mxu0 0.0
    %1573 = vmatprep.subr.mxu0 0.0
    %1574 = vmatpush1.xpose.msra.mxu0 0.0
    %1575 = vmatprep.subr.mxu0 0.0
    %1576 = vmatpush1.xpose.msra.mxu0 0.0
    %1577 = vmatprep.subr.mxu0 0.0
    %1578 = vmatpush1.xpose.msra.mxu0 0.0
    %1579 = vmatprep.subr.mxu0 0.0
    %1580 = vmatpush1.xpose.msra.mxu0 0.0
    %1581 = vmatprep.subr.mxu0 0.0
    %1582 = vmatpush1.xpose.msra.mxu0 0.0
    %1583 = vmatprep.subr.mxu0 0.0
    %1584 = vmatpush1.xpose.msra.mxu0 %v1551
    %1585 = vmatprep.subr.mxu0 0.0
    %1586 = vmatpush2.xpose.msra.mxu0 0.0
    %1587 = vmatprep.subr.mxu0 0.0
    %1588 = vmatpush2.xpose.msra.mxu0 0.0
    %1589 = vmatprep.subr.mxu0 0.0
    %1590 = vmatpush2.xpose.msra.mxu0 0.0
    %1591 = vmatprep.subr.mxu0 0.0
    %1592 = vmatpush2.xpose.msra.mxu0 0.0
    %1593 = vmatprep.subr.mxu0 0.0
    %1594 = vmatpush2.xpose.msra.mxu0 0.0
    %1595 = vmatprep.subr.mxu0 0.0
    %1596 = vmatpush2.xpose.msra.mxu0 0.0
    %1597 = vmatprep.subr.mxu0 0.0
    %1598 = vmatpush2.xpose.msra.mxu0 0.0
    %1599 = vmatprep.subr.mxu0 0.0
    %1600 = vmatpush2.xpose.msra.mxu0 0.0
    %1601 = vmatprep.subr.mxu0 0.0
    %1602 = vmatpush2.xpose.msra.mxu0 0.0
    %1603 = vmatprep.subr.mxu0 0.0
    %1604 = vmatpush2.xpose.msra.mxu0 0.0
    %1605 = vmatprep.subr.mxu0 0.0
    %1606 = vmatpush2.xpose.msra.mxu0 0.0
    %1607 = vmatprep.subr.mxu0 0.0
    %1608 = vmatpush2.xpose.msra.mxu0 0.0
    %1609 = vmatprep.subr.mxu0 0.0
    %1610 = vmatpush2.xpose.msra.mxu0 0.0
    %1611 = vmatprep.subr.mxu0 0.0
    %1612 = vmatpush2.xpose.msra.mxu0 0.0
    %1613 = vmatprep.subr.mxu0 0.0
    %1614 = vmatpush2.xpose.msra.mxu0 0.0
    %1615 = vmatprep.subr.mxu0 0.0
    %1616 = vmatpush2.xpose.msra.mxu0 0.0
    %1617 = vmatprep.mubr.f32.mxu0 0.0
    %1618 = vmatmul.mubr.f32.gmra.mxu0 %v1548
    %v1619 = vpop.f32.mrf.mxu0
    %v1620 = vadd.f32 0.0, %v1619
    %v1621 = vpop.f32.mrf.mxu0
    %1622 = vdwg.mxu0
    %v1623 = vmul.f32 %v1088, 0.35355338
    %v1624 = vmul.f32 %v1164, 0.35355338
    %v1625 = vmul.f32 %v1240, 0.35355338
    %v1626 = vmul.f32 %v1316, 0.35355338
    %v1627 = vmul.f32 %v1392, 0.35355338
    %v1628 = vmul.f32 %v1468, 0.35355338
    %v1629 = vmul.f32 %v1544, 0.35355338
    %v1630 = vmul.f32 %v1620, 0.35355338
    %v1631 = vsel %vm1014, %v1623, -inf
    %1632 = vmax.xlane.f32.xlu0 %v1631
    %v1633 = vpop.xlane.xlu0 %1632
    %v1634 = vsel %vm1014, %v1624, -inf
    %1635 = vmax.xlane.f32.xlu0 %v1634
    %v1636 = vpop.xlane.xlu0 %1635
    %v1637 = vsel %vm1014, %v1625, -inf
    %1638 = vmax.xlane.f32.xlu0 %v1637
    %v1639 = vpop.xlane.xlu0 %1638
    %v1640 = vsel %vm1014, %v1626, -inf
    %1641 = vmax.xlane.f32.xlu0 %v1640
    %v1642 = vpop.xlane.xlu0 %1641
    %v1643 = vsel %vm1014, %v1627, -inf
    %1644 = vmax.xlane.f32.xlu0 %v1643
    %v1645 = vpop.xlane.xlu0 %1644
    %v1646 = vsel %vm1014, %v1628, -inf
    %1647 = vmax.xlane.f32.xlu0 %v1646
    %v1648 = vpop.xlane.xlu0 %1647
    %v1649 = vsel %vm1014, %v1629, -inf
    %1650 = vmax.xlane.f32.xlu0 %v1649
    %v1651 = vpop.xlane.xlu0 %1650
    %v1652 = vsel %vm1014, %v1630, -inf
    %1653 = vmax.xlane.f32.xlu0 %v1652
    %v1654 = vpop.xlane.xlu0 %1653
    %v1655 = vsub.f32 %v1623, %v1633
    %v1656 = vsub.f32 %v1624, %v1636
    %v1657 = vsub.f32 %v1625, %v1639
    %v1658 = vsub.f32 %v1626, %v1642
    %v1659 = vsub.f32 %v1627, %v1645
    %v1660 = vsub.f32 %v1628, %v1648
    %v1661 = vsub.f32 %v1629, %v1651
    %v1662 = vsub.f32 %v1630, %v1654
    %v1663 = vmul.f32 %v1655, 1.442695
    %v1664 = vpow.pop %v1663
    %v1665 = vmul.f32 %v1656, 1.442695
    %v1666 = vpow.pop %v1665
    %v1667 = vmul.f32 %v1657, 1.442695
    %v1668 = vpow.pop %v1667
    %v1669 = vmul.f32 %v1658, 1.442695
    %v1670 = vpow.pop %v1669
    %v1671 = vmul.f32 %v1659, 1.442695
    %v1672 = vpow.pop %v1671
    %v1673 = vmul.f32 %v1660, 1.442695
    %v1674 = vpow.pop %v1673
    %v1675 = vmul.f32 %v1661, 1.442695
    %v1676 = vpow.pop %v1675
    %v1677 = vmul.f32 %v1662, 1.442695
    %v1678 = vpow.pop %v1677
    %v1679 = vsel %vm1014, %v1664, 0.0
    %1680 = vadd.xlane.f32.xlu0 %v1679
    %v1681 = vpop.xlane.xlu0 %1680
    %v1682 = vsel %vm1014, %v1666, 0.0
    %1683 = vadd.xlane.f32.xlu0 %v1682
    %v1684 = vpop.xlane.xlu0 %1683
    %v1685 = vsel %vm1014, %v1668, 0.0
    %1686 = vadd.xlane.f32.xlu0 %v1685
    %v1687 = vpop.xlane.xlu0 %1686
    %v1688 = vsel %vm1014, %v1670, 0.0
    %1689 = vadd.xlane.f32.xlu0 %v1688
    %v1690 = vpop.xlane.xlu0 %1689
    %v1691 = vsel %vm1014, %v1672, 0.0
    %1692 = vadd.xlane.f32.xlu0 %v1691
    %v1693 = vpop.xlane.xlu0 %1692
    %v1694 = vsel %vm1014, %v1674, 0.0
    %1695 = vadd.xlane.f32.xlu0 %v1694
    %v1696 = vpop.xlane.xlu0 %1695
    %v1697 = vsel %vm1014, %v1676, 0.0
    %1698 = vadd.xlane.f32.xlu0 %v1697
    %v1699 = vpop.xlane.xlu0 %1698
    %v1700 = vsel %vm1014, %v1678, 0.0
    %1701 = vadd.xlane.f32.xlu0 %v1700
    %v1702 = vpop.xlane.xlu0 %1701
    %v1703 = vrcp.pop %v1681
    %v1704 = vrcp.pop %v1684
    %v1705 = vrcp.pop %v1687
    %v1706 = vrcp.pop %v1690
    %v1707 = vrcp.pop %v1693
    %v1708 = vrcp.pop %v1696
    %v1709 = vrcp.pop %v1699
    %v1710 = vrcp.pop %v1702
    %v1711 = vmul.f32 %v1664, %v1703
    %v1712 = vmul.f32 %v1666, %v1704
    %v1713 = vmul.f32 %v1668, %v1705
    %v1714 = vmul.f32 %v1670, %v1706
    %v1715 = vmul.f32 %v1672, %v1707
    %v1716 = vmul.f32 %v1674, %v1708
    %v1717 = vmul.f32 %v1676, %v1709
    %v1718 = vmul.f32 %v1678, %v1710
    %1719 = vst.msk [vmem:[#allocation4] sm:$0xff] %vm1014, %v1711
    %1720 = vst.msk [vmem:[#allocation4 + $0x8] sm:$0xff] %vm1014, %v1712
    %1721 = vst.msk [vmem:[#allocation4 + $0x10] sm:$0xff] %vm1014, %v1713
    %1722 = vst.msk [vmem:[#allocation4 + $0x18] sm:$0xff] %vm1014, %v1714
    %1723 = vst.msk [vmem:[#allocation4 + $0x20] sm:$0xff] %vm1014, %v1715
    %1724 = vst.msk [vmem:[#allocation4 + $0x28] sm:$0xff] %vm1014, %v1716
    %1725 = vst.msk [vmem:[#allocation4 + $0x30] sm:$0xff] %vm1014, %v1717
    %1726 = vst.msk [vmem:[#allocation4 + $0x38] sm:$0xff] %vm1014, %v1718
    %v1728 = vsel %vm1014, %v1711, 0
    %1730 = vmatprep.subr.mxu0 0.0
    %1731 = vmatpush1.msra.mxu0 0.0
    %1732 = vmatprep.subr.mxu0 0.0
    %1733 = vmatpush1.msra.mxu0 0.0
    %1734 = vmatprep.subr.mxu0 0.0
    %1735 = vmatpush1.msra.mxu0 0.0
    %1736 = vmatprep.subr.mxu0 0.0
    %1737 = vmatpush1.msra.mxu0 0.0
    %1738 = vmatprep.subr.mxu0 0.0
    %1739 = vmatpush1.msra.mxu0 0.0
    %1740 = vmatprep.subr.mxu0 0.0
    %1741 = vmatpush1.msra.mxu0 0.0
    %1742 = vmatprep.subr.mxu0 0.0
    %1743 = vmatpush1.msra.mxu0 0.0
    %1744 = vmatprep.subr.mxu0 0.0
    %1745 = vmatpush1.msra.mxu0 0.0
    %1746 = vmatprep.subr.mxu0 0.0
    %1747 = vmatpush1.msra.mxu0 0.0
    %1748 = vmatprep.subr.mxu0 0.0
    %1749 = vmatpush1.msra.mxu0 0.0
    %1750 = vmatprep.subr.mxu0 0.0
    %1751 = vmatpush1.msra.mxu0 0.0
    %1752 = vmatprep.subr.mxu0 0.0
    %1753 = vmatpush1.msra.mxu0 0.0
    %1754 = vmatprep.subr.mxu0 0.0
    %1755 = vmatpush1.msra.mxu0 0.0
    %1756 = vmatprep.subr.mxu0 0.0
    %1757 = vmatpush1.msra.mxu0 0.0
    %1758 = vmatprep.subr.mxu0 0.0
    %1759 = vmatpush1.msra.mxu0 0.0
    %1760 = vmatprep.subr.mxu0 0.0
    %1761 = vmatpush1.msra.mxu0 %v440
    %1762 = vmatprep.subr.mxu0 0.0
    %1763 = vmatpush2.msra.mxu0 0.0
    %1764 = vmatprep.subr.mxu0 0.0
    %1765 = vmatpush2.msra.mxu0 0.0
    %1766 = vmatprep.subr.mxu0 0.0
    %1767 = vmatpush2.msra.mxu0 0.0
    %1768 = vmatprep.subr.mxu0 0.0
    %1769 = vmatpush2.msra.mxu0 0.0
    %1770 = vmatprep.subr.mxu0 0.0
    %1771 = vmatpush2.msra.mxu0 0.0
    %1772 = vmatprep.subr.mxu0 0.0
    %1773 = vmatpush2.msra.mxu0 0.0
    %1774 = vmatprep.subr.mxu0 0.0
    %1775 = vmatpush2.msra.mxu0 0.0
    %1776 = vmatprep.subr.mxu0 0.0
    %1777 = vmatpush2.msra.mxu0 0.0
    %1778 = vmatprep.subr.mxu0 0.0
    %1779 = vmatpush2.msra.mxu0 0.0
    %1780 = vmatprep.subr.mxu0 0.0
    %1781 = vmatpush2.msra.mxu0 0.0
    %1782 = vmatprep.subr.mxu0 0.0
    %1783 = vmatpush2.msra.mxu0 0.0
    %1784 = vmatprep.subr.mxu0 0.0
    %1785 = vmatpush2.msra.mxu0 0.0
    %1786 = vmatprep.subr.mxu0 0.0
    %1787 = vmatpush2.msra.mxu0 0.0
    %1788 = vmatprep.subr.mxu0 0.0
    %1789 = vmatpush2.msra.mxu0 0.0
    %1790 = vmatprep.subr.mxu0 0.0
    %1791 = vmatpush2.msra.mxu0 0.0
    %1792 = vmatprep.subr.mxu0 0.0
    %1793 = vmatpush2.msra.mxu0 0.0
    %1794 = vmatprep.mubr.f32.mxu0 0.0
    %1795 = vmatmul.mubr.f32.gmra.mxu0 %v1728
    %v1796 = vpop.f32.mrf.mxu0
    %v1797 = vadd.f32 0.0, %v1796
    %v1798 = vpop.f32.mrf.mxu0
    %1799 = vdwg.mxu0
    %v1801 = vsel %vm1014, %v1712, 0
    %1803 = vmatprep.subr.mxu0 0.0
    %1804 = vmatpush1.msra.mxu0 0.0
    %1805 = vmatprep.subr.mxu0 0.0
    %1806 = vmatpush1.msra.mxu0 0.0
    %1807 = vmatprep.subr.mxu0 0.0
    %1808 = vmatpush1.msra.mxu0 0.0
    %1809 = vmatprep.subr.mxu0 0.0
    %1810 = vmatpush1.msra.mxu0 0.0
    %1811 = vmatprep.subr.mxu0 0.0
    %1812 = vmatpush1.msra.mxu0 0.0
    %1813 = vmatprep.subr.mxu0 0.0
    %1814 = vmatpush1.msra.mxu0 0.0
    %1815 = vmatprep.subr.mxu0 0.0
    %1816 = vmatpush1.msra.mxu0 0.0
    %1817 = vmatprep.subr.mxu0 0.0
    %1818 = vmatpush1.msra.mxu0 0.0
    %1819 = vmatprep.subr.mxu0 0.0
    %1820 = vmatpush1.msra.mxu0 0.0
    %1821 = vmatprep.subr.mxu0 0.0
    %1822 = vmatpush1.msra.mxu0 0.0
    %1823 = vmatprep.subr.mxu0 0.0
    %1824 = vmatpush1.msra.mxu0 0.0
    %1825 = vmatprep.subr.mxu0 0.0
    %1826 = vmatpush1.msra.mxu0 0.0
    %1827 = vmatprep.subr.mxu0 0.0
    %1828 = vmatpush1.msra.mxu0 0.0
    %1829 = vmatprep.subr.mxu0 0.0
    %1830 = vmatpush1.msra.mxu0 0.0
    %1831 = vmatprep.subr.mxu0 0.0
    %1832 = vmatpush1.msra.mxu0 0.0
    %1833 = vmatprep.subr.mxu0 0.0
    %1834 = vmatpush1.msra.mxu0 %v445
    %1835 = vmatprep.subr.mxu0 0.0
    %1836 = vmatpush2.msra.mxu0 0.0
    %1837 = vmatprep.subr.mxu0 0.0
    %1838 = vmatpush2.msra.mxu0 0.0
    %1839 = vmatprep.subr.mxu0 0.0
    %1840 = vmatpush2.msra.mxu0 0.0
    %1841 = vmatprep.subr.mxu0 0.0
    %1842 = vmatpush2.msra.mxu0 0.0
    %1843 = vmatprep.subr.mxu0 0.0
    %1844 = vmatpush2.msra.mxu0 0.0
    %1845 = vmatprep.subr.mxu0 0.0
    %1846 = vmatpush2.msra.mxu0 0.0
    %1847 = vmatprep.subr.mxu0 0.0
    %1848 = vmatpush2.msra.mxu0 0.0
    %1849 = vmatprep.subr.mxu0 0.0
    %1850 = vmatpush2.msra.mxu0 0.0
    %1851 = vmatprep.subr.mxu0 0.0
    %1852 = vmatpush2.msra.mxu0 0.0
    %1853 = vmatprep.subr.mxu0 0.0
    %1854 = vmatpush2.msra.mxu0 0.0
    %1855 = vmatprep.subr.mxu0 0.0
    %1856 = vmatpush2.msra.mxu0 0.0
    %1857 = vmatprep.subr.mxu0 0.0
    %1858 = vmatpush2.msra.mxu0 0.0
    %1859 = vmatprep.subr.mxu0 0.0
    %1860 = vmatpush2.msra.mxu0 0.0
    %1861 = vmatprep.subr.mxu0 0.0
    %1862 = vmatpush2.msra.mxu0 0.0
    %1863 = vmatprep.subr.mxu0 0.0
    %1864 = vmatpush2.msra.mxu0 0.0
    %1865 = vmatprep.subr.mxu0 0.0
    %1866 = vmatpush2.msra.mxu0 0.0
    %1867 = vmatprep.mubr.f32.mxu0 0.0
    %1868 = vmatmul.mubr.f32.gmra.mxu0 %v1801
    %v1869 = vpop.f32.mrf.mxu0
    %v1870 = vadd.f32 0.0, %v1869
    %v1871 = vpop.f32.mrf.mxu0
    %1872 = vdwg.mxu0
    %v1874 = vsel %vm1014, %v1713, 0
    %1876 = vmatprep.subr.mxu0 0.0
    %1877 = vmatpush1.msra.mxu0 0.0
    %1878 = vmatprep.subr.mxu0 0.0
    %1879 = vmatpush1.msra.mxu0 0.0
    %1880 = vmatprep.subr.mxu0 0.0
    %1881 = vmatpush1.msra.mxu0 0.0
    %1882 = vmatprep.subr.mxu0 0.0
    %1883 = vmatpush1.msra.mxu0 0.0
    %1884 = vmatprep.subr.mxu0 0.0
    %1885 = vmatpush1.msra.mxu0 0.0
    %1886 = vmatprep.subr.mxu0 0.0
    %1887 = vmatpush1.msra.mxu0 0.0
    %1888 = vmatprep.subr.mxu0 0.0
    %1889 = vmatpush1.msra.mxu0 0.0
    %1890 = vmatprep.subr.mxu0 0.0
    %1891 = vmatpush1.msra.mxu0 0.0
    %1892 = vmatprep.subr.mxu0 0.0
    %1893 = vmatpush1.msra.mxu0 0.0
    %1894 = vmatprep.subr.mxu0 0.0
    %1895 = vmatpush1.msra.mxu0 0.0
    %1896 = vmatprep.subr.mxu0 0.0
    %1897 = vmatpush1.msra.mxu0 0.0
    %1898 = vmatprep.subr.mxu0 0.0
    %1899 = vmatpush1.msra.mxu0 0.0
    %1900 = vmatprep.subr.mxu0 0.0
    %1901 = vmatpush1.msra.mxu0 0.0
    %1902 = vmatprep.subr.mxu0 0.0
    %1903 = vmatpush1.msra.mxu0 0.0
    %1904 = vmatprep.subr.mxu0 0.0
    %1905 = vmatpush1.msra.mxu0 0.0
    %1906 = vmatprep.subr.mxu0 0.0
    %1907 = vmatpush1.msra.mxu0 %v520
    %1908 = vmatprep.subr.mxu0 0.0
    %1909 = vmatpush2.msra.mxu0 0.0
    %1910 = vmatprep.subr.mxu0 0.0
    %1911 = vmatpush2.msra.mxu0 0.0
    %1912 = vmatprep.subr.mxu0 0.0
    %1913 = vmatpush2.msra.mxu0 0.0
    %1914 = vmatprep.subr.mxu0 0.0
    %1915 = vmatpush2.msra.mxu0 0.0
    %1916 = vmatprep.subr.mxu0 0.0
    %1917 = vmatpush2.msra.mxu0 0.0
    %1918 = vmatprep.subr.mxu0 0.0
    %1919 = vmatpush2.msra.mxu0 0.0
    %1920 = vmatprep.subr.mxu0 0.0
    %1921 = vmatpush2.msra.mxu0 0.0
    %1922 = vmatprep.subr.mxu0 0.0
    %1923 = vmatpush2.msra.mxu0 0.0
    %1924 = vmatprep.subr.mxu0 0.0
    %1925 = vmatpush2.msra.mxu0 0.0
    %1926 = vmatprep.subr.mxu0 0.0
    %1927 = vmatpush2.msra.mxu0 0.0
    %1928 = vmatprep.subr.mxu0 0.0
    %1929 = vmatpush2.msra.mxu0 0.0
    %1930 = vmatprep.subr.mxu0 0.0
    %1931 = vmatpush2.msra.mxu0 0.0
    %1932 = vmatprep.subr.mxu0 0.0
    %1933 = vmatpush2.msra.mxu0 0.0
    %1934 = vmatprep.subr.mxu0 0.0
    %1935 = vmatpush2.msra.mxu0 0.0
    %1936 = vmatprep.subr.mxu0 0.0
    %1937 = vmatpush2.msra.mxu0 0.0
    %1938 = vmatprep.subr.mxu0 0.0
    %1939 = vmatpush2.msra.mxu0 0.0
    %1940 = vmatprep.mubr.f32.mxu0 0.0
    %1941 = vmatmul.mubr.f32.gmra.mxu0 %v1874
    %v1942 = vpop.f32.mrf.mxu0
    %v1943 = vadd.f32 0.0, %v1942
    %v1944 = vpop.f32.mrf.mxu0
    %1945 = vdwg.mxu0
    %v1947 = vsel %vm1014, %v1714, 0
    %1949 = vmatprep.subr.mxu0 0.0
    %1950 = vmatpush1.msra.mxu0 0.0
    %1951 = vmatprep.subr.mxu0 0.0
    %1952 = vmatpush1.msra.mxu0 0.0
    %1953 = vmatprep.subr.mxu0 0.0
    %1954 = vmatpush1.msra.mxu0 0.0
    %1955 = vmatprep.subr.mxu0 0.0
    %1956 = vmatpush1.msra.mxu0 0.0
    %1957 = vmatprep.subr.mxu0 0.0
    %1958 = vmatpush1.msra.mxu0 0.0
    %1959 = vmatprep.subr.mxu0 0.0
    %1960 = vmatpush1.msra.mxu0 0.0
    %1961 = vmatprep.subr.mxu0 0.0
    %1962 = vmatpush1.msra.mxu0 0.0
    %1963 = vmatprep.subr.mxu0 0.0
    %1964 = vmatpush1.msra.mxu0 0.0
    %1965 = vmatprep.subr.mxu0 0.0
    %1966 = vmatpush1.msra.mxu0 0.0
    %1967 = vmatprep.subr.mxu0 0.0
    %1968 = vmatpush1.msra.mxu0 0.0
    %1969 = vmatprep.subr.mxu0 0.0
    %1970 = vmatpush1.msra.mxu0 0.0
    %1971 = vmatprep.subr.mxu0 0.0
    %1972 = vmatpush1.msra.mxu0 0.0
    %1973 = vmatprep.subr.mxu0 0.0
    %1974 = vmatpush1.msra.mxu0 0.0
    %1975 = vmatprep.subr.mxu0 0.0
    %1976 = vmatpush1.msra.mxu0 0.0
    %1977 = vmatprep.subr.mxu0 0.0
    %1978 = vmatpush1.msra.mxu0 0.0
    %1979 = vmatprep.subr.mxu0 0.0
    %1980 = vmatpush1.msra.mxu0 %v525
    %1981 = vmatprep.subr.mxu0 0.0
    %1982 = vmatpush2.msra.mxu0 0.0
    %1983 = vmatprep.subr.mxu0 0.0
    %1984 = vmatpush2.msra.mxu0 0.0
    %1985 = vmatprep.subr.mxu0 0.0
    %1986 = vmatpush2.msra.mxu0 0.0
    %1987 = vmatprep.subr.mxu0 0.0
    %1988 = vmatpush2.msra.mxu0 0.0
    %1989 = vmatprep.subr.mxu0 0.0
    %1990 = vmatpush2.msra.mxu0 0.0
    %1991 = vmatprep.subr.mxu0 0.0
    %1992 = vmatpush2.msra.mxu0 0.0
    %1993 = vmatprep.subr.mxu0 0.0
    %1994 = vmatpush2.msra.mxu0 0.0
    %1995 = vmatprep.subr.mxu0 0.0
    %1996 = vmatpush2.msra.mxu0 0.0
    %1997 = vmatprep.subr.mxu0 0.0
    %1998 = vmatpush2.msra.mxu0 0.0
    %1999 = vmatprep.subr.mxu0 0.0
    %2000 = vmatpush2.msra.mxu0 0.0
    %2001 = vmatprep.subr.mxu0 0.0
    %2002 = vmatpush2.msra.mxu0 0.0
    %2003 = vmatprep.subr.mxu0 0.0
    %2004 = vmatpush2.msra.mxu0 0.0
    %2005 = vmatprep.subr.mxu0 0.0
    %2006 = vmatpush2.msra.mxu0 0.0
    %2007 = vmatprep.subr.mxu0 0.0
    %2008 = vmatpush2.msra.mxu0 0.0
    %2009 = vmatprep.subr.mxu0 0.0
    %2010 = vmatpush2.msra.mxu0 0.0
    %2011 = vmatprep.subr.mxu0 0.0
    %2012 = vmatpush2.msra.mxu0 0.0
    %2013 = vmatprep.mubr.f32.mxu0 0.0
    %2014 = vmatmul.mubr.f32.gmra.mxu0 %v1947
    %v2015 = vpop.f32.mrf.mxu0
    %v2016 = vadd.f32 0.0, %v2015
    %v2017 = vpop.f32.mrf.mxu0
    %2018 = vdwg.mxu0
    %v2020 = vsel %vm1014, %v1715, 0
    %2022 = vmatprep.subr.mxu0 0.0
    %2023 = vmatpush1.msra.mxu0 0.0
    %2024 = vmatprep.subr.mxu0 0.0
    %2025 = vmatpush1.msra.mxu0 0.0
    %2026 = vmatprep.subr.mxu0 0.0
    %2027 = vmatpush1.msra.mxu0 0.0
    %2028 = vmatprep.subr.mxu0 0.0
    %2029 = vmatpush1.msra.mxu0 0.0
    %2030 = vmatprep.subr.mxu0 0.0
    %2031 = vmatpush1.msra.mxu0 0.0
    %2032 = vmatprep.subr.mxu0 0.0
    %2033 = vmatpush1.msra.mxu0 0.0
    %2034 = vmatprep.subr.mxu0 0.0
    %2035 = vmatpush1.msra.mxu0 0.0
    %2036 = vmatprep.subr.mxu0 0.0
    %2037 = vmatpush1.msra.mxu0 0.0
    %2038 = vmatprep.subr.mxu0 0.0
    %2039 = vmatpush1.msra.mxu0 0.0
    %2040 = vmatprep.subr.mxu0 0.0
    %2041 = vmatpush1.msra.mxu0 0.0
    %2042 = vmatprep.subr.mxu0 0.0
    %2043 = vmatpush1.msra.mxu0 0.0
    %2044 = vmatprep.subr.mxu0 0.0
    %2045 = vmatpush1.msra.mxu0 0.0
    %2046 = vmatprep.subr.mxu0 0.0
    %2047 = vmatpush1.msra.mxu0 0.0
    %2048 = vmatprep.subr.mxu0 0.0
    %2049 = vmatpush1.msra.mxu0 0.0
    %2050 = vmatprep.subr.mxu0 0.0
    %2051 = vmatpush1.msra.mxu0 0.0
    %2052 = vmatprep.subr.mxu0 0.0
    %2053 = vmatpush1.msra.mxu0 %v600
    %2054 = vmatprep.subr.mxu0 0.0
    %2055 = vmatpush2.msra.mxu0 0.0
    %2056 = vmatprep.subr.mxu0 0.0
    %2057 = vmatpush2.msra.mxu0 0.0
    %2058 = vmatprep.subr.mxu0 0.0
    %2059 = vmatpush2.msra.mxu0 0.0
    %2060 = vmatprep.subr.mxu0 0.0
    %2061 = vmatpush2.msra.mxu0 0.0
    %2062 = vmatprep.subr.mxu0 0.0
    %2063 = vmatpush2.msra.mxu0 0.0
    %2064 = vmatprep.subr.mxu0 0.0
    %2065 = vmatpush2.msra.mxu0 0.0
    %2066 = vmatprep.subr.mxu0 0.0
    %2067 = vmatpush2.msra.mxu0 0.0
    %2068 = vmatprep.subr.mxu0 0.0
    %2069 = vmatpush2.msra.mxu0 0.0
    %2070 = vmatprep.subr.mxu0 0.0
    %2071 = vmatpush2.msra.mxu0 0.0
    %2072 = vmatprep.subr.mxu0 0.0
    %2073 = vmatpush2.msra.mxu0 0.0
    %2074 = vmatprep.subr.mxu0 0.0
    %2075 = vmatpush2.msra.mxu0 0.0
    %2076 = vmatprep.subr.mxu0 0.0
    %2077 = vmatpush2.msra.mxu0 0.0
    %2078 = vmatprep.subr.mxu0 0.0
    %2079 = vmatpush2.msra.mxu0 0.0
    %2080 = vmatprep.subr.mxu0 0.0
    %2081 = vmatpush2.msra.mxu0 0.0
    %2082 = vmatprep.subr.mxu0 0.0
    %2083 = vmatpush2.msra.mxu0 0.0
    %2084 = vmatprep.subr.mxu0 0.0
    %2085 = vmatpush2.msra.mxu0 0.0
    %2086 = vmatprep.mubr.f32.mxu0 0.0
    %2087 = vmatmul.mubr.f32.gmra.mxu0 %v2020
    %v2088 = vpop.f32.mrf.mxu0
    %v2089 = vadd.f32 0.0, %v2088
    %v2090 = vpop.f32.mrf.mxu0
    %2091 = vdwg.mxu0
    %v2093 = vsel %vm1014, %v1716, 0
    %2095 = vmatprep.subr.mxu0 0.0
    %2096 = vmatpush1.msra.mxu0 0.0
    %2097 = vmatprep.subr.mxu0 0.0
    %2098 = vmatpush1.msra.mxu0 0.0
    %2099 = vmatprep.subr.mxu0 0.0
    %2100 = vmatpush1.msra.mxu0 0.0
    %2101 = vmatprep.subr.mxu0 0.0
    %2102 = vmatpush1.msra.mxu0 0.0
    %2103 = vmatprep.subr.mxu0 0.0
    %2104 = vmatpush1.msra.mxu0 0.0
    %2105 = vmatprep.subr.mxu0 0.0
    %2106 = vmatpush1.msra.mxu0 0.0
    %2107 = vmatprep.subr.mxu0 0.0
    %2108 = vmatpush1.msra.mxu0 0.0
    %2109 = vmatprep.subr.mxu0 0.0
    %2110 = vmatpush1.msra.mxu0 0.0
    %2111 = vmatprep.subr.mxu0 0.0
    %2112 = vmatpush1.msra.mxu0 0.0
    %2113 = vmatprep.subr.mxu0 0.0
    %2114 = vmatpush1.msra.mxu0 0.0
    %2115 = vmatprep.subr.mxu0 0.0
    %2116 = vmatpush1.msra.mxu0 0.0
    %2117 = vmatprep.subr.mxu0 0.0
    %2118 = vmatpush1.msra.mxu0 0.0
    %2119 = vmatprep.subr.mxu0 0.0
    %2120 = vmatpush1.msra.mxu0 0.0
    %2121 = vmatprep.subr.mxu0 0.0
    %2122 = vmatpush1.msra.mxu0 0.0
    %2123 = vmatprep.subr.mxu0 0.0
    %2124 = vmatpush1.msra.mxu0 0.0
    %2125 = vmatprep.subr.mxu0 0.0
    %2126 = vmatpush1.msra.mxu0 %v605
    %2127 = vmatprep.subr.mxu0 0.0
    %2128 = vmatpush2.msra.mxu0 0.0
    %2129 = vmatprep.subr.mxu0 0.0
    %2130 = vmatpush2.msra.mxu0 0.0
    %2131 = vmatprep.subr.mxu0 0.0
    %2132 = vmatpush2.msra.mxu0 0.0
    %2133 = vmatprep.subr.mxu0 0.0
    %2134 = vmatpush2.msra.mxu0 0.0
    %2135 = vmatprep.subr.mxu0 0.0
    %2136 = vmatpush2.msra.mxu0 0.0
    %2137 = vmatprep.subr.mxu0 0.0
    %2138 = vmatpush2.msra.mxu0 0.0
    %2139 = vmatprep.subr.mxu0 0.0
    %2140 = vmatpush2.msra.mxu0 0.0
    %2141 = vmatprep.subr.mxu0 0.0
    %2142 = vmatpush2.msra.mxu0 0.0
    %2143 = vmatprep.subr.mxu0 0.0
    %2144 = vmatpush2.msra.mxu0 0.0
    %2145 = vmatprep.subr.mxu0 0.0
    %2146 = vmatpush2.msra.mxu0 0.0
    %2147 = vmatprep.subr.mxu0 0.0
    %2148 = vmatpush2.msra.mxu0 0.0
    %2149 = vmatprep.subr.mxu0 0.0
    %2150 = vmatpush2.msra.mxu0 0.0
    %2151 = vmatprep.subr.mxu0 0.0
    %2152 = vmatpush2.msra.mxu0 0.0
    %2153 = vmatprep.subr.mxu0 0.0
    %2154 = vmatpush2.msra.mxu0 0.0
    %2155 = vmatprep.subr.mxu0 0.0
    %2156 = vmatpush2.msra.mxu0 0.0
    %2157 = vmatprep.subr.mxu0 0.0
    %2158 = vmatpush2.msra.mxu0 0.0
    %2159 = vmatprep.mubr.f32.mxu0 0.0
    %2160 = vmatmul.mubr.f32.gmra.mxu0 %v2093
    %v2161 = vpop.f32.mrf.mxu0
    %v2162 = vadd.f32 0.0, %v2161
    %v2163 = vpop.f32.mrf.mxu0
    %2164 = vdwg.mxu0
    %v2166 = vsel %vm1014, %v1717, 0
    %2168 = vmatprep.subr.mxu0 0.0
    %2169 = vmatpush1.msra.mxu0 0.0
    %2170 = vmatprep.subr.mxu0 0.0
    %2171 = vmatpush1.msra.mxu0 0.0
    %2172 = vmatprep.subr.mxu0 0.0
    %2173 = vmatpush1.msra.mxu0 0.0
    %2174 = vmatprep.subr.mxu0 0.0
    %2175 = vmatpush1.msra.mxu0 0.0
    %2176 = vmatprep.subr.mxu0 0.0
    %2177 = vmatpush1.msra.mxu0 0.0
    %2178 = vmatprep.subr.mxu0 0.0
    %2179 = vmatpush1.msra.mxu0 0.0
    %2180 = vmatprep.subr.mxu0 0.0
    %2181 = vmatpush1.msra.mxu0 0.0
    %2182 = vmatprep.subr.mxu0 0.0
    %2183 = vmatpush1.msra.mxu0 0.0
    %2184 = vmatprep.subr.mxu0 0.0
    %2185 = vmatpush1.msra.mxu0 0.0
    %2186 = vmatprep.subr.mxu0 0.0
    %2187 = vmatpush1.msra.mxu0 0.0
    %2188 = vmatprep.subr.mxu0 0.0
    %2189 = vmatpush1.msra.mxu0 0.0
    %2190 = vmatprep.subr.mxu0 0.0
    %2191 = vmatpush1.msra.mxu0 0.0
    %2192 = vmatprep.subr.mxu0 0.0
    %2193 = vmatpush1.msra.mxu0 0.0
    %2194 = vmatprep.subr.mxu0 0.0
    %2195 = vmatpush1.msra.mxu0 0.0
    %2196 = vmatprep.subr.mxu0 0.0
    %2197 = vmatpush1.msra.mxu0 0.0
    %2198 = vmatprep.subr.mxu0 0.0
    %2199 = vmatpush1.msra.mxu0 %v680
    %2200 = vmatprep.subr.mxu0 0.0
    %2201 = vmatpush2.msra.mxu0 0.0
    %2202 = vmatprep.subr.mxu0 0.0
    %2203 = vmatpush2.msra.mxu0 0.0
    %2204 = vmatprep.subr.mxu0 0.0
    %2205 = vmatpush2.msra.mxu0 0.0
    %2206 = vmatprep.subr.mxu0 0.0
    %2207 = vmatpush2.msra.mxu0 0.0
    %2208 = vmatprep.subr.mxu0 0.0
    %2209 = vmatpush2.msra.mxu0 0.0
    %2210 = vmatprep.subr.mxu0 0.0
    %2211 = vmatpush2.msra.mxu0 0.0
    %2212 = vmatprep.subr.mxu0 0.0
    %2213 = vmatpush2.msra.mxu0 0.0
    %2214 = vmatprep.subr.mxu0 0.0
    %2215 = vmatpush2.msra.mxu0 0.0
    %2216 = vmatprep.subr.mxu0 0.0
    %2217 = vmatpush2.msra.mxu0 0.0
    %2218 = vmatprep.subr.mxu0 0.0
    %2219 = vmatpush2.msra.mxu0 0.0
    %2220 = vmatprep.subr.mxu0 0.0
    %2221 = vmatpush2.msra.mxu0 0.0
    %2222 = vmatprep.subr.mxu0 0.0
    %2223 = vmatpush2.msra.mxu0 0.0
    %2224 = vmatprep.subr.mxu0 0.0
    %2225 = vmatpush2.msra.mxu0 0.0
    %2226 = vmatprep.subr.mxu0 0.0
    %2227 = vmatpush2.msra.mxu0 0.0
    %2228 = vmatprep.subr.mxu0 0.0
    %2229 = vmatpush2.msra.mxu0 0.0
    %2230 = vmatprep.subr.mxu0 0.0
    %2231 = vmatpush2.msra.mxu0 0.0
    %2232 = vmatprep.mubr.f32.mxu0 0.0
    %2233 = vmatmul.mubr.f32.gmra.mxu0 %v2166
    %v2234 = vpop.f32.mrf.mxu0
    %v2235 = vadd.f32 0.0, %v2234
    %v2236 = vpop.f32.mrf.mxu0
    %2237 = vdwg.mxu0
    %v2239 = vsel %vm1014, %v1718, 0
    %2241 = vmatprep.subr.mxu0 0.0
    %2242 = vmatpush1.msra.mxu0 0.0
    %2243 = vmatprep.subr.mxu0 0.0
    %2244 = vmatpush1.msra.mxu0 0.0
    %2245 = vmatprep.subr.mxu0 0.0
    %2246 = vmatpush1.msra.mxu0 0.0
    %2247 = vmatprep.subr.mxu0 0.0
    %2248 = vmatpush1.msra.mxu0 0.0
    %2249 = vmatprep.subr.mxu0 0.0
    %2250 = vmatpush1.msra.mxu0 0.0
    %2251 = vmatprep.subr.mxu0 0.0
    %2252 = vmatpush1.msra.mxu0 0.0
    %2253 = vmatprep.subr.mxu0 0.0
    %2254 = vmatpush1.msra.mxu0 0.0
    %2255 = vmatprep.subr.mxu0 0.0
    %2256 = vmatpush1.msra.mxu0 0.0
    %2257 = vmatprep.subr.mxu0 0.0
    %2258 = vmatpush1.msra.mxu0 0.0
    %2259 = vmatprep.subr.mxu0 0.0
    %2260 = vmatpush1.msra.mxu0 0.0
    %2261 = vmatprep.subr.mxu0 0.0
    %2262 = vmatpush1.msra.mxu0 0.0
    %2263 = vmatprep.subr.mxu0 0.0
    %2264 = vmatpush1.msra.mxu0 0.0
    %2265 = vmatprep.subr.mxu0 0.0
    %2266 = vmatpush1.msra.mxu0 0.0
    %2267 = vmatprep.subr.mxu0 0.0
    %2268 = vmatpush1.msra.mxu0 0.0
    %2269 = vmatprep.subr.mxu0 0.0
    %2270 = vmatpush1.msra.mxu0 0.0
    %2271 = vmatprep.subr.mxu0 0.0
    %2272 = vmatpush1.msra.mxu0 %v685
    %2273 = vmatprep.subr.mxu0 0.0
    %2274 = vmatpush2.msra.mxu0 0.0
    %2275 = vmatprep.subr.mxu0 0.0
    %2276 = vmatpush2.msra.mxu0 0.0
    %2277 = vmatprep.subr.mxu0 0.0
    %2278 = vmatpush2.msra.mxu0 0.0
    %2279 = vmatprep.subr.mxu0 0.0
    %2280 = vmatpush2.msra.mxu0 0.0
    %2281 = vmatprep.subr.mxu0 0.0
    %2282 = vmatpush2.msra.mxu0 0.0
    %2283 = vmatprep.subr.mxu0 0.0
    %2284 = vmatpush2.msra.mxu0 0.0
    %2285 = vmatprep.subr.mxu0 0.0
    %2286 = vmatpush2.msra.mxu0 0.0
    %2287 = vmatprep.subr.mxu0 0.0
    %2288 = vmatpush2.msra.mxu0 0.0
    %2289 = vmatprep.subr.mxu0 0.0
    %2290 = vmatpush2.msra.mxu0 0.0
    %2291 = vmatprep.subr.mxu0 0.0
    %2292 = vmatpush2.msra.mxu0 0.0
    %2293 = vmatprep.subr.mxu0 0.0
    %2294 = vmatpush2.msra.mxu0 0.0
    %2295 = vmatprep.subr.mxu0 0.0
    %2296 = vmatpush2.msra.mxu0 0.0
    %2297 = vmatprep.subr.mxu0 0.0
    %2298 = vmatpush2.msra.mxu0 0.0
    %2299 = vmatprep.subr.mxu0 0.0
    %2300 = vmatpush2.msra.mxu0 0.0
    %2301 = vmatprep.subr.mxu0 0.0
    %2302 = vmatpush2.msra.mxu0 0.0
    %2303 = vmatprep.subr.mxu0 0.0
    %2304 = vmatpush2.msra.mxu0 0.0
    %2305 = vmatprep.mubr.f32.mxu0 0.0
    %2306 = vmatmul.mubr.f32.gmra.mxu0 %v2239
    %v2307 = vpop.f32.mrf.mxu0
    %v2308 = vadd.f32 0.0, %v2307
    %v2309 = vpop.f32.mrf.mxu0
    %2310 = vdwg.mxu0
    %v2311 = vld [vmem:[%s5] sm:$0xff]
    %v2312 = vld [vmem:[%s5 + $0x8] sm:$0xff]
    %v2313 = vld [vmem:[%s5 + $0x10] sm:$0xff]
    %v2314 = vld [vmem:[%s5 + $0x18] sm:$0xff]
    %v2315 = vld [vmem:[%s5 + $0x20] sm:$0xff]
    %v2316 = vld [vmem:[%s5 + $0x28] sm:$0xff]
    %v2317 = vld [vmem:[%s5 + $0x30] sm:$0xff]
    %v2318 = vld [vmem:[%s5 + $0x38] sm:$0xff]
    %v2320 = vsel %vm1014, %v1797, 0
    %2322 = vmatprep.subr.mxu0 0.0
    %2323 = vmatpush1.msra.mxu0 0.0
    %2324 = vmatprep.subr.mxu0 0.0
    %2325 = vmatpush1.msra.mxu0 0.0
    %2326 = vmatprep.subr.mxu0 0.0
    %2327 = vmatpush1.msra.mxu0 0.0
    %2328 = vmatprep.subr.mxu0 0.0
    %2329 = vmatpush1.msra.mxu0 0.0
    %2330 = vmatprep.subr.mxu0 0.0
    %2331 = vmatpush1.msra.mxu0 0.0
    %2332 = vmatprep.subr.mxu0 0.0
    %2333 = vmatpush1.msra.mxu0 0.0
    %2334 = vmatprep.subr.mxu0 0.0
    %2335 = vmatpush1.msra.mxu0 0.0
    %2336 = vmatprep.subr.mxu0 0.0
    %2337 = vmatpush1.msra.mxu0 0.0
    %2338 = vmatprep.subr.mxu0 0.0
    %2339 = vmatpush1.msra.mxu0 0.0
    %2340 = vmatprep.subr.mxu0 0.0
    %2341 = vmatpush1.msra.mxu0 0.0
    %2342 = vmatprep.subr.mxu0 0.0
    %2343 = vmatpush1.msra.mxu0 0.0
    %2344 = vmatprep.subr.mxu0 0.0
    %2345 = vmatpush1.msra.mxu0 0.0
    %2346 = vmatprep.subr.mxu0 0.0
    %2347 = vmatpush1.msra.mxu0 0.0
    %2348 = vmatprep.subr.mxu0 0.0
    %2349 = vmatpush1.msra.mxu0 0.0
    %2350 = vmatprep.subr.mxu0 0.0
    %2351 = vmatpush1.msra.mxu0 0.0
    %2352 = vmatprep.subr.mxu0 0.0
    %2353 = vmatpush1.msra.mxu0 %v2311
    %2354 = vmatprep.subr.mxu0 0.0
    %2355 = vmatpush2.msra.mxu0 0.0
    %2356 = vmatprep.subr.mxu0 0.0
    %2357 = vmatpush2.msra.mxu0 0.0
    %2358 = vmatprep.subr.mxu0 0.0
    %2359 = vmatpush2.msra.mxu0 0.0
    %2360 = vmatprep.subr.mxu0 0.0
    %2361 = vmatpush2.msra.mxu0 0.0
    %2362 = vmatprep.subr.mxu0 0.0
    %2363 = vmatpush2.msra.mxu0 0.0
    %2364 = vmatprep.subr.mxu0 0.0
    %2365 = vmatpush2.msra.mxu0 0.0
    %2366 = vmatprep.subr.mxu0 0.0
    %2367 = vmatpush2.msra.mxu0 0.0
    %2368 = vmatprep.subr.mxu0 0.0
    %2369 = vmatpush2.msra.mxu0 0.0
    %2370 = vmatprep.subr.mxu0 0.0
    %2371 = vmatpush2.msra.mxu0 0.0
    %2372 = vmatprep.subr.mxu0 0.0
    %2373 = vmatpush2.msra.mxu0 0.0
    %2374 = vmatprep.subr.mxu0 0.0
    %2375 = vmatpush2.msra.mxu0 0.0
    %2376 = vmatprep.subr.mxu0 0.0
    %2377 = vmatpush2.msra.mxu0 0.0
    %2378 = vmatprep.subr.mxu0 0.0
    %2379 = vmatpush2.msra.mxu0 0.0
    %2380 = vmatprep.subr.mxu0 0.0
    %2381 = vmatpush2.msra.mxu0 0.0
    %2382 = vmatprep.subr.mxu0 0.0
    %2383 = vmatpush2.msra.mxu0 0.0
    %2384 = vmatprep.subr.mxu0 0.0
    %2385 = vmatpush2.msra.mxu0 0.0
    %2386 = vmatprep.mubr.f32.mxu0 0.0
    %2387 = vmatmul.mubr.f32.gmra.mxu0 %v2320
    %v2388 = vpop.f32.mrf.mxu0
    %v2389 = vadd.f32 0.0, %v2388
    %v2390 = vpop.f32.mrf.mxu0
    %2391 = vdwg.mxu0
    %v2393 = vsel %vm1014, %v1870, 0
    %2395 = vmatprep.subr.mxu0 0.0
    %2396 = vmatpush1.msra.mxu0 0.0
    %2397 = vmatprep.subr.mxu0 0.0
    %2398 = vmatpush1.msra.mxu0 0.0
    %2399 = vmatprep.subr.mxu0 0.0
    %2400 = vmatpush1.msra.mxu0 0.0
    %2401 = vmatprep.subr.mxu0 0.0
    %2402 = vmatpush1.msra.mxu0 0.0
    %2403 = vmatprep.subr.mxu0 0.0
    %2404 = vmatpush1.msra.mxu0 0.0
    %2405 = vmatprep.subr.mxu0 0.0
    %2406 = vmatpush1.msra.mxu0 0.0
    %2407 = vmatprep.subr.mxu0 0.0
    %2408 = vmatpush1.msra.mxu0 0.0
    %2409 = vmatprep.subr.mxu0 0.0
    %2410 = vmatpush1.msra.mxu0 0.0
    %2411 = vmatprep.subr.mxu0 0.0
    %2412 = vmatpush1.msra.mxu0 0.0
    %2413 = vmatprep.subr.mxu0 0.0
    %2414 = vmatpush1.msra.mxu0 0.0
    %2415 = vmatprep.subr.mxu0 0.0
    %2416 = vmatpush1.msra.mxu0 0.0
    %2417 = vmatprep.subr.mxu0 0.0
    %2418 = vmatpush1.msra.mxu0 0.0
    %2419 = vmatprep.subr.mxu0 0.0
    %2420 = vmatpush1.msra.mxu0 0.0
    %2421 = vmatprep.subr.mxu0 0.0
    %2422 = vmatpush1.msra.mxu0 0.0
    %2423 = vmatprep.subr.mxu0 0.0
    %2424 = vmatpush1.msra.mxu0 0.0
    %2425 = vmatprep.subr.mxu0 0.0
    %2426 = vmatpush1.msra.mxu0 %v2312
    %2427 = vmatprep.subr.mxu0 0.0
    %2428 = vmatpush2.msra.mxu0 0.0
    %2429 = vmatprep.subr.mxu0 0.0
    %2430 = vmatpush2.msra.mxu0 0.0
    %2431 = vmatprep.subr.mxu0 0.0
    %2432 = vmatpush2.msra.mxu0 0.0
    %2433 = vmatprep.subr.mxu0 0.0
    %2434 = vmatpush2.msra.mxu0 0.0
    %2435 = vmatprep.subr.mxu0 0.0
    %2436 = vmatpush2.msra.mxu0 0.0
    %2437 = vmatprep.subr.mxu0 0.0
    %2438 = vmatpush2.msra.mxu0 0.0
    %2439 = vmatprep.subr.mxu0 0.0
    %2440 = vmatpush2.msra.mxu0 0.0
    %2441 = vmatprep.subr.mxu0 0.0
    %2442 = vmatpush2.msra.mxu0 0.0
    %2443 = vmatprep.subr.mxu0 0.0
    %2444 = vmatpush2.msra.mxu0 0.0
    %2445 = vmatprep.subr.mxu0 0.0
    %2446 = vmatpush2.msra.mxu0 0.0
    %2447 = vmatprep.subr.mxu0 0.0
    %2448 = vmatpush2.msra.mxu0 0.0
    %2449 = vmatprep.subr.mxu0 0.0
    %2450 = vmatpush2.msra.mxu0 0.0
    %2451 = vmatprep.subr.mxu0 0.0
    %2452 = vmatpush2.msra.mxu0 0.0
    %2453 = vmatprep.subr.mxu0 0.0
    %2454 = vmatpush2.msra.mxu0 0.0
    %2455 = vmatprep.subr.mxu0 0.0
    %2456 = vmatpush2.msra.mxu0 0.0
    %2457 = vmatprep.subr.mxu0 0.0
    %2458 = vmatpush2.msra.mxu0 0.0
    %2459 = vmatprep.mubr.f32.mxu0 0.0
    %2460 = vmatmul.mubr.f32.gmra.mxu0 %v2393
    %v2461 = vpop.f32.mrf.mxu0
    %v2462 = vadd.f32 0.0, %v2461
    %v2463 = vpop.f32.mrf.mxu0
    %2464 = vdwg.mxu0
    %v2466 = vsel %vm1014, %v1943, 0
    %2468 = vmatprep.subr.mxu0 0.0
    %2469 = vmatpush1.msra.mxu0 0.0
    %2470 = vmatprep.subr.mxu0 0.0
    %2471 = vmatpush1.msra.mxu0 0.0
    %2472 = vmatprep.subr.mxu0 0.0
    %2473 = vmatpush1.msra.mxu0 0.0
    %2474 = vmatprep.subr.mxu0 0.0
    %2475 = vmatpush1.msra.mxu0 0.0
    %2476 = vmatprep.subr.mxu0 0.0
    %2477 = vmatpush1.msra.mxu0 0.0
    %2478 = vmatprep.subr.mxu0 0.0
    %2479 = vmatpush1.msra.mxu0 0.0
    %2480 = vmatprep.subr.mxu0 0.0
    %2481 = vmatpush1.msra.mxu0 0.0
    %2482 = vmatprep.subr.mxu0 0.0
    %2483 = vmatpush1.msra.mxu0 0.0
    %2484 = vmatprep.subr.mxu0 0.0
    %2485 = vmatpush1.msra.mxu0 0.0
    %2486 = vmatprep.subr.mxu0 0.0
    %2487 = vmatpush1.msra.mxu0 0.0
    %2488 = vmatprep.subr.mxu0 0.0
    %2489 = vmatpush1.msra.mxu0 0.0
    %2490 = vmatprep.subr.mxu0 0.0
    %2491 = vmatpush1.msra.mxu0 0.0
    %2492 = vmatprep.subr.mxu0 0.0
    %2493 = vmatpush1.msra.mxu0 0.0
    %2494 = vmatprep.subr.mxu0 0.0
    %2495 = vmatpush1.msra.mxu0 0.0
    %2496 = vmatprep.subr.mxu0 0.0
    %2497 = vmatpush1.msra.mxu0 0.0
    %2498 = vmatprep.subr.mxu0 0.0
    %2499 = vmatpush1.msra.mxu0 %v2313
    %2500 = vmatprep.subr.mxu0 0.0
    %2501 = vmatpush2.msra.mxu0 0.0
    %2502 = vmatprep.subr.mxu0 0.0
    %2503 = vmatpush2.msra.mxu0 0.0
    %2504 = vmatprep.subr.mxu0 0.0
    %2505 = vmatpush2.msra.mxu0 0.0
    %2506 = vmatprep.subr.mxu0 0.0
    %2507 = vmatpush2.msra.mxu0 0.0
    %2508 = vmatprep.subr.mxu0 0.0
    %2509 = vmatpush2.msra.mxu0 0.0
    %2510 = vmatprep.subr.mxu0 0.0
    %2511 = vmatpush2.msra.mxu0 0.0
    %2512 = vmatprep.subr.mxu0 0.0
    %2513 = vmatpush2.msra.mxu0 0.0
    %2514 = vmatprep.subr.mxu0 0.0
    %2515 = vmatpush2.msra.mxu0 0.0
    %2516 = vmatprep.subr.mxu0 0.0
    %2517 = vmatpush2.msra.mxu0 0.0
    %2518 = vmatprep.subr.mxu0 0.0
    %2519 = vmatpush2.msra.mxu0 0.0
    %2520 = vmatprep.subr.mxu0 0.0
    %2521 = vmatpush2.msra.mxu0 0.0
    %2522 = vmatprep.subr.mxu0 0.0
    %2523 = vmatpush2.msra.mxu0 0.0
    %2524 = vmatprep.subr.mxu0 0.0
    %2525 = vmatpush2.msra.mxu0 0.0
    %2526 = vmatprep.subr.mxu0 0.0
    %2527 = vmatpush2.msra.mxu0 0.0
    %2528 = vmatprep.subr.mxu0 0.0
    %2529 = vmatpush2.msra.mxu0 0.0
    %2530 = vmatprep.subr.mxu0 0.0
    %2531 = vmatpush2.msra.mxu0 0.0
    %2532 = vmatprep.mubr.f32.mxu0 0.0
    %2533 = vmatmul.mubr.f32.gmra.mxu0 %v2466
    %v2534 = vpop.f32.mrf.mxu0
    %v2535 = vadd.f32 0.0, %v2534
    %v2536 = vpop.f32.mrf.mxu0
    %2537 = vdwg.mxu0
    %v2539 = vsel %vm1014, %v2016, 0
    %2541 = vmatprep.subr.mxu0 0.0
    %2542 = vmatpush1.msra.mxu0 0.0
    %2543 = vmatprep.subr.mxu0 0.0
    %2544 = vmatpush1.msra.mxu0 0.0
    %2545 = vmatprep.subr.mxu0 0.0
    %2546 = vmatpush1.msra.mxu0 0.0
    %2547 = vmatprep.subr.mxu0 0.0
    %2548 = vmatpush1.msra.mxu0 0.0
    %2549 = vmatprep.subr.mxu0 0.0
    %2550 = vmatpush1.msra.mxu0 0.0
    %2551 = vmatprep.subr.mxu0 0.0
    %2552 = vmatpush1.msra.mxu0 0.0
    %2553 = vmatprep.subr.mxu0 0.0
    %2554 = vmatpush1.msra.mxu0 0.0
    %2555 = vmatprep.subr.mxu0 0.0
    %2556 = vmatpush1.msra.mxu0 0.0
    %2557 = vmatprep.subr.mxu0 0.0
    %2558 = vmatpush1.msra.mxu0 0.0
    %2559 = vmatprep.subr.mxu0 0.0
    %2560 = vmatpush1.msra.mxu0 0.0
    %2561 = vmatprep.subr.mxu0 0.0
    %2562 = vmatpush1.msra.mxu0 0.0
    %2563 = vmatprep.subr.mxu0 0.0
    %2564 = vmatpush1.msra.mxu0 0.0
    %2565 = vmatprep.subr.mxu0 0.0
    %2566 = vmatpush1.msra.mxu0 0.0
    %2567 = vmatprep.subr.mxu0 0.0
    %2568 = vmatpush1.msra.mxu0 0.0
    %2569 = vmatprep.subr.mxu0 0.0
    %2570 = vmatpush1.msra.mxu0 0.0
    %2571 = vmatprep.subr.mxu0 0.0
    %2572 = vmatpush1.msra.mxu0 %v2314
    %2573 = vmatprep.subr.mxu0 0.0
    %2574 = vmatpush2.msra.mxu0 0.0
    %2575 = vmatprep.subr.mxu0 0.0
    %2576 = vmatpush2.msra.mxu0 0.0
    %2577 = vmatprep.subr.mxu0 0.0
    %2578 = vmatpush2.msra.mxu0 0.0
    %2579 = vmatprep.subr.mxu0 0.0
    %2580 = vmatpush2.msra.mxu0 0.0
    %2581 = vmatprep.subr.mxu0 0.0
    %2582 = vmatpush2.msra.mxu0 0.0
    %2583 = vmatprep.subr.mxu0 0.0
    %2584 = vmatpush2.msra.mxu0 0.0
    %2585 = vmatprep.subr.mxu0 0.0
    %2586 = vmatpush2.msra.mxu0 0.0
    %2587 = vmatprep.subr.mxu0 0.0
    %2588 = vmatpush2.msra.mxu0 0.0
    %2589 = vmatprep.subr.mxu0 0.0
    %2590 = vmatpush2.msra.mxu0 0.0
    %2591 = vmatprep.subr.mxu0 0.0
    %2592 = vmatpush2.msra.mxu0 0.0
    %2593 = vmatprep.subr.mxu0 0.0
    %2594 = vmatpush2.msra.mxu0 0.0
    %2595 = vmatprep.subr.mxu0 0.0
    %2596 = vmatpush2.msra.mxu0 0.0
    %2597 = vmatprep.subr.mxu0 0.0
    %2598 = vmatpush2.msra.mxu0 0.0
    %2599 = vmatprep.subr.mxu0 0.0
    %2600 = vmatpush2.msra.mxu0 0.0
    %2601 = vmatprep.subr.mxu0 0.0
    %2602 = vmatpush2.msra.mxu0 0.0
    %2603 = vmatprep.subr.mxu0 0.0
    %2604 = vmatpush2.msra.mxu0 0.0
    %2605 = vmatprep.mubr.f32.mxu0 0.0
    %2606 = vmatmul.mubr.f32.gmra.mxu0 %v2539
    %v2607 = vpop.f32.mrf.mxu0
    %v2608 = vadd.f32 0.0, %v2607
    %v2609 = vpop.f32.mrf.mxu0
    %2610 = vdwg.mxu0
    %v2612 = vsel %vm1014, %v2089, 0
    %2614 = vmatprep.subr.mxu0 0.0
    %2615 = vmatpush1.msra.mxu0 0.0
    %2616 = vmatprep.subr.mxu0 0.0
    %2617 = vmatpush1.msra.mxu0 0.0
    %2618 = vmatprep.subr.mxu0 0.0
    %2619 = vmatpush1.msra.mxu0 0.0
    %2620 = vmatprep.subr.mxu0 0.0
    %2621 = vmatpush1.msra.mxu0 0.0
    %2622 = vmatprep.subr.mxu0 0.0
    %2623 = vmatpush1.msra.mxu0 0.0
    %2624 = vmatprep.subr.mxu0 0.0
    %2625 = vmatpush1.msra.mxu0 0.0
    %2626 = vmatprep.subr.mxu0 0.0
    %2627 = vmatpush1.msra.mxu0 0.0
    %2628 = vmatprep.subr.mxu0 0.0
    %2629 = vmatpush1.msra.mxu0 0.0
    %2630 = vmatprep.subr.mxu0 0.0
    %2631 = vmatpush1.msra.mxu0 0.0
    %2632 = vmatprep.subr.mxu0 0.0
    %2633 = vmatpush1.msra.mxu0 0.0
    %2634 = vmatprep.subr.mxu0 0.0
    %2635 = vmatpush1.msra.mxu0 0.0
    %2636 = vmatprep.subr.mxu0 0.0
    %2637 = vmatpush1.msra.mxu0 0.0
    %2638 = vmatprep.subr.mxu0 0.0
    %2639 = vmatpush1.msra.mxu0 0.0
    %2640 = vmatprep.subr.mxu0 0.0
    %2641 = vmatpush1.msra.mxu0 0.0
    %2642 = vmatprep.subr.mxu0 0.0
    %2643 = vmatpush1.msra.mxu0 0.0
    %2644 = vmatprep.subr.mxu0 0.0
    %2645 = vmatpush1.msra.mxu0 %v2315
    %2646 = vmatprep.subr.mxu0 0.0
    %2647 = vmatpush2.msra.mxu0 0.0
    %2648 = vmatprep.subr.mxu0 0.0
    %2649 = vmatpush2.msra.mxu0 0.0
    %2650 = vmatprep.subr.mxu0 0.0
    %2651 = vmatpush2.msra.mxu0 0.0
    %2652 = vmatprep.subr.mxu0 0.0
    %2653 = vmatpush2.msra.mxu0 0.0
    %2654 = vmatprep.subr.mxu0 0.0
    %2655 = vmatpush2.msra.mxu0 0.0
    %2656 = vmatprep.subr.mxu0 0.0
    %2657 = vmatpush2.msra.mxu0 0.0
    %2658 = vmatprep.subr.mxu0 0.0
    %2659 = vmatpush2.msra.mxu0 0.0
    %2660 = vmatprep.subr.mxu0 0.0
    %2661 = vmatpush2.msra.mxu0 0.0
    %2662 = vmatprep.subr.mxu0 0.0
    %2663 = vmatpush2.msra.mxu0 0.0
    %2664 = vmatprep.subr.mxu0 0.0
    %2665 = vmatpush2.msra.mxu0 0.0
    %2666 = vmatprep.subr.mxu0 0.0
    %2667 = vmatpush2.msra.mxu0 0.0
    %2668 = vmatprep.subr.mxu0 0.0
    %2669 = vmatpush2.msra.mxu0 0.0
    %2670 = vmatprep.subr.mxu0 0.0
    %2671 = vmatpush2.msra.mxu0 0.0
    %2672 = vmatprep.subr.mxu0 0.0
    %2673 = vmatpush2.msra.mxu0 0.0
    %2674 = vmatprep.subr.mxu0 0.0
    %2675 = vmatpush2.msra.mxu0 0.0
    %2676 = vmatprep.subr.mxu0 0.0
    %2677 = vmatpush2.msra.mxu0 0.0
    %2678 = vmatprep.mubr.f32.mxu0 0.0
    %2679 = vmatmul.mubr.f32.gmra.mxu0 %v2612
    %v2680 = vpop.f32.mrf.mxu0
    %v2681 = vadd.f32 0.0, %v2680
    %v2682 = vpop.f32.mrf.mxu0
    %2683 = vdwg.mxu0
    %v2685 = vsel %vm1014, %v2162, 0
    %2687 = vmatprep.subr.mxu0 0.0
    %2688 = vmatpush1.msra.mxu0 0.0
    %2689 = vmatprep.subr.mxu0 0.0
    %2690 = vmatpush1.msra.mxu0 0.0
    %2691 = vmatprep.subr.mxu0 0.0
    %2692 = vmatpush1.msra.mxu0 0.0
    %2693 = vmatprep.subr.mxu0 0.0
    %2694 = vmatpush1.msra.mxu0 0.0
    %2695 = vmatprep.subr.mxu0 0.0
    %2696 = vmatpush1.msra.mxu0 0.0
    %2697 = vmatprep.subr.mxu0 0.0
    %2698 = vmatpush1.msra.mxu0 0.0
    %2699 = vmatprep.subr.mxu0 0.0
    %2700 = vmatpush1.msra.mxu0 0.0
    %2701 = vmatprep.subr.mxu0 0.0
    %2702 = vmatpush1.msra.mxu0 0.0
    %2703 = vmatprep.subr.mxu0 0.0
    %2704 = vmatpush1.msra.mxu0 0.0
    %2705 = vmatprep.subr.mxu0 0.0
    %2706 = vmatpush1.msra.mxu0 0.0
    %2707 = vmatprep.subr.mxu0 0.0
    %2708 = vmatpush1.msra.mxu0 0.0
    %2709 = vmatprep.subr.mxu0 0.0
    %2710 = vmatpush1.msra.mxu0 0.0
    %2711 = vmatprep.subr.mxu0 0.0
    %2712 = vmatpush1.msra.mxu0 0.0
    %2713 = vmatprep.subr.mxu0 0.0
    %2714 = vmatpush1.msra.mxu0 0.0
    %2715 = vmatprep.subr.mxu0 0.0
    %2716 = vmatpush1.msra.mxu0 0.0
    %2717 = vmatprep.subr.mxu0 0.0
    %2718 = vmatpush1.msra.mxu0 %v2316
    %2719 = vmatprep.subr.mxu0 0.0
    %2720 = vmatpush2.msra.mxu0 0.0
    %2721 = vmatprep.subr.mxu0 0.0
    %2722 = vmatpush2.msra.mxu0 0.0
    %2723 = vmatprep.subr.mxu0 0.0
    %2724 = vmatpush2.msra.mxu0 0.0
    %2725 = vmatprep.subr.mxu0 0.0
    %2726 = vmatpush2.msra.mxu0 0.0
    %2727 = vmatprep.subr.mxu0 0.0
    %2728 = vmatpush2.msra.mxu0 0.0
    %2729 = vmatprep.subr.mxu0 0.0
    %2730 = vmatpush2.msra.mxu0 0.0
    %2731 = vmatprep.subr.mxu0 0.0
    %2732 = vmatpush2.msra.mxu0 0.0
    %2733 = vmatprep.subr.mxu0 0.0
    %2734 = vmatpush2.msra.mxu0 0.0
    %2735 = vmatprep.subr.mxu0 0.0
    %2736 = vmatpush2.msra.mxu0 0.0
    %2737 = vmatprep.subr.mxu0 0.0
    %2738 = vmatpush2.msra.mxu0 0.0
    %2739 = vmatprep.subr.mxu0 0.0
    %2740 = vmatpush2.msra.mxu0 0.0
    %2741 = vmatprep.subr.mxu0 0.0
    %2742 = vmatpush2.msra.mxu0 0.0
    %2743 = vmatprep.subr.mxu0 0.0
    %2744 = vmatpush2.msra.mxu0 0.0
    %2745 = vmatprep.subr.mxu0 0.0
    %2746 = vmatpush2.msra.mxu0 0.0
    %2747 = vmatprep.subr.mxu0 0.0
    %2748 = vmatpush2.msra.mxu0 0.0
    %2749 = vmatprep.subr.mxu0 0.0
    %2750 = vmatpush2.msra.mxu0 0.0
    %2751 = vmatprep.mubr.f32.mxu0 0.0
    %2752 = vmatmul.mubr.f32.gmra.mxu0 %v2685
    %v2753 = vpop.f32.mrf.mxu0
    %v2754 = vadd.f32 0.0, %v2753
    %v2755 = vpop.f32.mrf.mxu0
    %2756 = vdwg.mxu0
    %v2758 = vsel %vm1014, %v2235, 0
    %2760 = vmatprep.subr.mxu0 0.0
    %2761 = vmatpush1.msra.mxu0 0.0
    %2762 = vmatprep.subr.mxu0 0.0
    %2763 = vmatpush1.msra.mxu0 0.0
    %2764 = vmatprep.subr.mxu0 0.0
    %2765 = vmatpush1.msra.mxu0 0.0
    %2766 = vmatprep.subr.mxu0 0.0
    %2767 = vmatpush1.msra.mxu0 0.0
    %2768 = vmatprep.subr.mxu0 0.0
    %2769 = vmatpush1.msra.mxu0 0.0
    %2770 = vmatprep.subr.mxu0 0.0
    %2771 = vmatpush1.msra.mxu0 0.0
    %2772 = vmatprep.subr.mxu0 0.0
    %2773 = vmatpush1.msra.mxu0 0.0
    %2774 = vmatprep.subr.mxu0 0.0
    %2775 = vmatpush1.msra.mxu0 0.0
    %2776 = vmatprep.subr.mxu0 0.0
    %2777 = vmatpush1.msra.mxu0 0.0
    %2778 = vmatprep.subr.mxu0 0.0
    %2779 = vmatpush1.msra.mxu0 0.0
    %2780 = vmatprep.subr.mxu0 0.0
    %2781 = vmatpush1.msra.mxu0 0.0
    %2782 = vmatprep.subr.mxu0 0.0
    %2783 = vmatpush1.msra.mxu0 0.0
    %2784 = vmatprep.subr.mxu0 0.0
    %2785 = vmatpush1.msra.mxu0 0.0
    %2786 = vmatprep.subr.mxu0 0.0
    %2787 = vmatpush1.msra.mxu0 0.0
    %2788 = vmatprep.subr.mxu0 0.0
    %2789 = vmatpush1.msra.mxu0 0.0
    %2790 = vmatprep.subr.mxu0 0.0
    %2791 = vmatpush1.msra.mxu0 %v2317
    %2792 = vmatprep.subr.mxu0 0.0
    %2793 = vmatpush2.msra.mxu0 0.0
    %2794 = vmatprep.subr.mxu0 0.0
    %2795 = vmatpush2.msra.mxu0 0.0
    %2796 = vmatprep.subr.mxu0 0.0
    %2797 = vmatpush2.msra.mxu0 0.0
    %2798 = vmatprep.subr.mxu0 0.0
    %2799 = vmatpush2.msra.mxu0 0.0
    %2800 = vmatprep.subr.mxu0 0.0
    %2801 = vmatpush2.msra.mxu0 0.0
    %2802 = vmatprep.subr.mxu0 0.0
    %2803 = vmatpush2.msra.mxu0 0.0
    %2804 = vmatprep.subr.mxu0 0.0
    %2805 = vmatpush2.msra.mxu0 0.0
    %2806 = vmatprep.subr.mxu0 0.0
    %2807 = vmatpush2.msra.mxu0 0.0
    %2808 = vmatprep.subr.mxu0 0.0
    %2809 = vmatpush2.msra.mxu0 0.0
    %2810 = vmatprep.subr.mxu0 0.0
    %2811 = vmatpush2.msra.mxu0 0.0
    %2812 = vmatprep.subr.mxu0 0.0
    %2813 = vmatpush2.msra.mxu0 0.0
    %2814 = vmatprep.subr.mxu0 0.0
    %2815 = vmatpush2.msra.mxu0 0.0
    %2816 = vmatprep.subr.mxu0 0.0
    %2817 = vmatpush2.msra.mxu0 0.0
    %2818 = vmatprep.subr.mxu0 0.0
    %2819 = vmatpush2.msra.mxu0 0.0
    %2820 = vmatprep.subr.mxu0 0.0
    %2821 = vmatpush2.msra.mxu0 0.0
    %2822 = vmatprep.subr.mxu0 0.0
    %2823 = vmatpush2.msra.mxu0 0.0
    %2824 = vmatprep.mubr.f32.mxu0 0.0
    %2825 = vmatmul.mubr.f32.gmra.mxu0 %v2758
    %v2826 = vpop.f32.mrf.mxu0
    %v2827 = vadd.f32 0.0, %v2826
    %v2828 = vpop.f32.mrf.mxu0
    %2829 = vdwg.mxu0
    %v2831 = vsel %vm1014, %v2308, 0
    %2833 = vmatprep.subr.mxu0 0.0
    %2834 = vmatpush1.msra.mxu0 0.0
    %2835 = vmatprep.subr.mxu0 0.0
    %2836 = vmatpush1.msra.mxu0 0.0
    %2837 = vmatprep.subr.mxu0 0.0
    %2838 = vmatpush1.msra.mxu0 0.0
    %2839 = vmatprep.subr.mxu0 0.0
    %2840 = vmatpush1.msra.mxu0 0.0
    %2841 = vmatprep.subr.mxu0 0.0
    %2842 = vmatpush1.msra.mxu0 0.0
    %2843 = vmatprep.subr.mxu0 0.0
    %2844 = vmatpush1.msra.mxu0 0.0
    %2845 = vmatprep.subr.mxu0 0.0
    %2846 = vmatpush1.msra.mxu0 0.0
    %2847 = vmatprep.subr.mxu0 0.0
    %2848 = vmatpush1.msra.mxu0 0.0
    %2849 = vmatprep.subr.mxu0 0.0
    %2850 = vmatpush1.msra.mxu0 0.0
    %2851 = vmatprep.subr.mxu0 0.0
    %2852 = vmatpush1.msra.mxu0 0.0
    %2853 = vmatprep.subr.mxu0 0.0
    %2854 = vmatpush1.msra.mxu0 0.0
    %2855 = vmatprep.subr.mxu0 0.0
    %2856 = vmatpush1.msra.mxu0 0.0
    %2857 = vmatprep.subr.mxu0 0.0
    %2858 = vmatpush1.msra.mxu0 0.0
    %2859 = vmatprep.subr.mxu0 0.0
    %2860 = vmatpush1.msra.mxu0 0.0
    %2861 = vmatprep.subr.mxu0 0.0
    %2862 = vmatpush1.msra.mxu0 0.0
    %2863 = vmatprep.subr.mxu0 0.0
    %2864 = vmatpush1.msra.mxu0 %v2318
    %2865 = vmatprep.subr.mxu0 0.0
    %2866 = vmatpush2.msra.mxu0 0.0
    %2867 = vmatprep.subr.mxu0 0.0
    %2868 = vmatpush2.msra.mxu0 0.0
    %2869 = vmatprep.subr.mxu0 0.0
    %2870 = vmatpush2.msra.mxu0 0.0
    %2871 = vmatprep.subr.mxu0 0.0
    %2872 = vmatpush2.msra.mxu0 0.0
    %2873 = vmatprep.subr.mxu0 0.0
    %2874 = vmatpush2.msra.mxu0 0.0
    %2875 = vmatprep.subr.mxu0 0.0
    %2876 = vmatpush2.msra.mxu0 0.0
    %2877 = vmatprep.subr.mxu0 0.0
    %2878 = vmatpush2.msra.mxu0 0.0
    %2879 = vmatprep.subr.mxu0 0.0
    %2880 = vmatpush2.msra.mxu0 0.0
    %2881 = vmatprep.subr.mxu0 0.0
    %2882 = vmatpush2.msra.mxu0 0.0
    %2883 = vmatprep.subr.mxu0 0.0
    %2884 = vmatpush2.msra.mxu0 0.0
    %2885 = vmatprep.subr.mxu0 0.0
    %2886 = vmatpush2.msra.mxu0 0.0
    %2887 = vmatprep.subr.mxu0 0.0
    %2888 = vmatpush2.msra.mxu0 0.0
    %2889 = vmatprep.subr.mxu0 0.0
    %2890 = vmatpush2.msra.mxu0 0.0
    %2891 = vmatprep.subr.mxu0 0.0
    %2892 = vmatpush2.msra.mxu0 0.0
    %2893 = vmatprep.subr.mxu0 0.0
    %2894 = vmatpush2.msra.mxu0 0.0
    %2895 = vmatprep.subr.mxu0 0.0
    %2896 = vmatpush2.msra.mxu0 0.0
    %2897 = vmatprep.mubr.f32.mxu0 0.0
    %2898 = vmatmul.mubr.f32.gmra.mxu0 %v2831
    %v2899 = vpop.f32.mrf.mxu0
    %v2900 = vadd.f32 0.0, %v2899
    %v2901 = vpop.f32.mrf.mxu0
    %2902 = vdwg.mxu0
    %v2903 = vsel %vm40, %v2389, 0.0
    %v2904 = vsel %vm40, %v2535, 0.0
    %v2905 = vadd.f32 %v2903, %v2904
    %v2906 = vsel %vm40, %v2681, 0.0
    %v2907 = vadd.f32 %v2905, %v2906
    %v2908 = vsel %vm40, %v2827, 0.0
    %v2909 = vadd.f32 %v2907, %v2908
    %v2910 = vsel %vm40, %v2462, 0.0
    %v2911 = vsel %vm40, %v2608, 0.0
    %v2912 = vadd.f32 %v2910, %v2911
    %v2913 = vsel %vm40, %v2754, 0.0
    %v2914 = vadd.f32 %v2912, %v2913
    %v2915 = vsel %vm40, %v2900, 0.0
    %v2916 = vadd.f32 %v2914, %v2915
    %v2917 = vld [vmem:[%s4] sm:$0xff]
    %v2918 = vld [vmem:[%s4 + $0x8] sm:$0xff]
    %v2919 = vld [vmem:[%s4 + $0x10] sm:$0xff]
    %v2920 = vld [vmem:[%s4 + $0x18] sm:$0xff]
    %2921 = vmatprep.subr.mxu0 0.0
    %2922 = vmatpush1.msra.mxu0 0.0
    %2923 = vmatprep.subr.mxu0 0.0
    %2924 = vmatpush1.msra.mxu0 0.0
    %2925 = vmatprep.subr.mxu0 0.0
    %2926 = vmatpush1.msra.mxu0 0.0
    %2927 = vmatprep.subr.mxu0 0.0
    %2928 = vmatpush1.msra.mxu0 0.0
    %2929 = vmatprep.subr.mxu0 0.0
    %2930 = vmatpush1.msra.mxu0 0.0
    %2931 = vmatprep.subr.mxu0 0.0
    %2932 = vmatpush1.msra.mxu0 0.0
    %2933 = vmatprep.subr.mxu0 0.0
    %2934 = vmatpush1.msra.mxu0 0.0
    %2935 = vmatprep.subr.mxu0 0.0
    %2936 = vmatpush1.msra.mxu0 0.0
    %2937 = vmatprep.subr.mxu0 0.0
    %2938 = vmatpush1.msra.mxu0 0.0
    %2939 = vmatprep.subr.mxu0 0.0
    %2940 = vmatpush1.msra.mxu0 0.0
    %2941 = vmatprep.subr.mxu0 0.0
    %2942 = vmatpush1.msra.mxu0 0.0
    %2943 = vmatprep.subr.mxu0 0.0
    %2944 = vmatpush1.msra.mxu0 0.0
    %2945 = vmatprep.subr.mxu0 0.0
    %2946 = vmatpush1.msra.mxu0 %v2920
    %2947 = vmatprep.subr.mxu0 0.0
    %2948 = vmatpush1.msra.mxu0 %v2919
    %2949 = vmatprep.subr.mxu0 0.0
    %2950 = vmatpush1.msra.mxu0 %v2918
    %2951 = vmatprep.subr.mxu0 0.0
    %2952 = vmatpush1.msra.mxu0 %v2917
    %2953 = vmatprep.subr.mxu0 0.0
    %2954 = vmatpush2.msra.mxu0 0.0
    %2955 = vmatprep.subr.mxu0 0.0
    %2956 = vmatpush2.msra.mxu0 0.0
    %2957 = vmatprep.subr.mxu0 0.0
    %2958 = vmatpush2.msra.mxu0 0.0
    %2959 = vmatprep.subr.mxu0 0.0
    %2960 = vmatpush2.msra.mxu0 0.0
    %2961 = vmatprep.subr.mxu0 0.0
    %2962 = vmatpush2.msra.mxu0 0.0
    %2963 = vmatprep.subr.mxu0 0.0
    %2964 = vmatpush2.msra.mxu0 0.0
    %2965 = vmatprep.subr.mxu0 0.0
    %2966 = vmatpush2.msra.mxu0 0.0
    %2967 = vmatprep.subr.mxu0 0.0
    %2968 = vmatpush2.msra.mxu0 0.0
    %2969 = vmatprep.subr.mxu0 0.0
    %2970 = vmatpush2.msra.mxu0 0.0
    %2971 = vmatprep.subr.mxu0 0.0
    %2972 = vmatpush2.msra.mxu0 0.0
    %2973 = vmatprep.subr.mxu0 0.0
    %2974 = vmatpush2.msra.mxu0 0.0
    %2975 = vmatprep.subr.mxu0 0.0
    %2976 = vmatpush2.msra.mxu0 0.0
    %2977 = vmatprep.subr.mxu0 0.0
    %2978 = vmatpush2.msra.mxu0 0.0
    %2979 = vmatprep.subr.mxu0 0.0
    %2980 = vmatpush2.msra.mxu0 0.0
    %2981 = vmatprep.subr.mxu0 0.0
    %2982 = vmatpush2.msra.mxu0 0.0
    %2983 = vmatprep.subr.mxu0 0.0
    %2984 = vmatpush2.msra.mxu0 0.0
    %2985 = vmatprep.mubr.f32.mxu0 0.0
    %2986 = vmatmul.mubr.f32.gmra.mxu0 %v694
    %v2987 = vpop.f32.mrf.mxu0
    %v2988 = vadd.f32 0.0, %v2987
    %v2989 = vpop.f32.mrf.mxu0
    %2990 = vmatprep.mubr.f32.mxu0 0.0
    %2991 = vmatmul.mubr.f32.gmra.mxu0 %v697
    %v2992 = vpop.f32.mrf.mxu0
    %v2993 = vadd.f32 0.0, %v2992
    %v2994 = vpop.f32.mrf.mxu0
    %2995 = vdwg.mxu0
    %v2996 = vadd.f32 %v2988, %v2909
    %v2997 = vadd.f32 %v2993, %v2916
    %v2998 = vld [vmem:[%s6] sm:$0x1]
    %v2999 = vlaneseq
    %v3000 = vshrl.u32 %v2999, 7
    %v3001 = vsub.s32 0, %v3000
    %v3002 = vrot.slane %v2998, %v3001
    %v3003 = vadd.f32 %v2996, %v3002
    %v3004 = vadd.f32 %v2997, %v3002
    %v3005 = vadd.f32 %v3003, %v34
    %v3006 = vadd.f32 %v3004, %v35
    %v3007 = vsel %vm40, %v3005, 0.0
    %3008 = vadd.xlane.f32.xlu0 %v3007
    %v3009 = vpop.xlane.xlu0 %3008
    %v3010 = vsel %vm40, %v3006, 0.0
    %3011 = vadd.xlane.f32.xlu0 %v3010
    %v3012 = vpop.xlane.xlu0 %3011
    %v3013 = vrcp.pop 32.0
    %v3014 = vmul.f32 %v3009, %v3013
    %v3015 = vmul.f32 %v3012, %v3013
    %v3016 = vsub.f32 %v3005, %v3014
    %v3017 = vsub.f32 %v3006, %v3015
    %v3018 = vmul.f32 %v3016, %v3016
    %v3019 = vmul.f32 %v3017, %v3017
    %v3020 = vsel %vm40, %v3018, 0.0
    %3021 = vadd.xlane.f32.xlu0 %v3020
    %v3022 = vpop.xlane.xlu0 %3021
    %v3023 = vsel %vm40, %v3019, 0.0
    %3024 = vadd.xlane.f32.xlu0 %v3023
    %v3025 = vpop.xlane.xlu0 %3024
    %v3026 = vmul.f32 %v3022, %v3013
    %v3027 = vmul.f32 %v3025, %v3013
    %v3028 = vadd.f32 %v3026, 1e-05
    %v3029 = vadd.f32 %v3027, 1e-05
    %v3030 = vrsqrt.pop %v3028
    %v3031 = vrsqrt.pop %v3029
    %v3032 = vmul.f32 %v3016, %v3030
    %v3033 = vmul.f32 %v3017, %v3031
    %v3034 = vld [vmem:[%s6 + $0x1] sm:$0x1]
    %v3035 = vlaneseq
    %v3036 = vshrl.u32 %v3035, 7
    %v3037 = vsub.s32 0, %v3036
    %v3038 = vrot.slane %v3034, %v3037
    %v3039 = vmul.f32 %v3032, %v3038
    %v3040 = vmul.f32 %v3033, %v3038
    %v3041 = vld [vmem:[%s6 + $0x2] sm:$0x1]
    %v3042 = vlaneseq
    %v3043 = vshrl.u32 %v3042, 7
    %v3044 = vsub.s32 0, %v3043
    %v3045 = vrot.slane %v3041, %v3044
    %v3046 = vadd.f32 %v3039, %v3045
    %v3047 = vadd.f32 %v3040, %v3045
    %3048 = vst.msk [vmem:[#allocation2] sm:$0xff] %vm40, %v3046
    %3049 = vst.msk [vmem:[#allocation2 + $0x8] sm:$0xff] %vm40, %v3047
    // Predicated region
    $region30: #{tpu_custom_call.1} parent=1 // pred_check
      _
    $region31: #{tpu_custom_call.1} parent=1 // pred_check_branch
      %3051 = sbr.rel (0) target = $region33
    $region32: #{tpu_custom_call.1} parent=1 // pred_region
      %s3053 = ssub.s32 256, 256
      %3054 = vsyncadd [#allocation3], %s3053
      %s3055 = sshll.u32 [#allocation2], 4
      %s3056 = int_to_ptr.vmem [resolvable:$true] %s3055
      %3061 = dma.vmem_to_hbm [thread:$0]  %s3056, 256, %s7, [#allocation3], 128, 128, 8
    $region33: #{tpu_custom_call.1} parent=1 // pred_fallthru
      _
    // Predicated region
    $region34: #{tpu_custom_call.1} parent=1 // pred_check
      _
    $region35: #{tpu_custom_call.1} parent=1 // pred_check_branch
      %3063 = sbr.rel (0) target = $region37
    $region36: #{tpu_custom_call.1} parent=1 // pred_region
      %s3065 = ssub.s32 1024, 1024
      %3066 = vsyncadd [#allocation5], %s3065
      %s3067 = sshll.u32 [#allocation4], 4
      %s3068 = int_to_ptr.vmem [resolvable:$true] %s3067
      %3073 = dma.vmem_to_hbm [thread:$0]  %s3068, 1024, %s8, [#allocation5], 128, 128, 8
    $region37: #{tpu_custom_call.1} parent=1 // pred_fallthru
      _
    // Predicated region
    $region38: #{tpu_custom_call.1} parent=1 // pred_check
      _
    $region39: #{tpu_custom_call.1} parent=1 // pred_check_branch
      %3075 = sbr.rel (0) target = $region41
    $region40: #{tpu_custom_call.1} parent=1 // pred_region
      %3076 = dma.done [#allocation3], 256
    $region41: #{tpu_custom_call.1} parent=1 // pred_fallthru
      _
    // Predicated region
    $region42: #{tpu_custom_call.1} parent=1 // pred_check
      _
    $region43: #{tpu_custom_call.1} parent=1 // pred_check_branch
      %3078 = sbr.rel (0) target = $region45
    $region44: #{tpu_custom_call.1} parent=1 // pred_region
      %3079 = dma.done [#allocation5], 1024
    $region45: #{tpu_custom_call.1} parent=1 // pred_fallthru
      _
    %3080 = vsyncpa [#allocation3], 1
    %3081 = vsyncpa [#allocation5], 1

</llo_original>
